<compile_context>
chip_gen: v5e
topology: v5e:2x2
jax: 0.10.0
libtpu: 0.0.40
codegen_flags: <defaults>
</compile_context>

<pallas_src>
import functools

import jax
import jax.numpy as jnp
from jax import lax
from jax.experimental import pallas as pl
from jax.experimental.pallas import tpu as pltpu

HIDDEN_SIZE = 128
INPUT_SIZE = 28
NUM_CLASSES = 10
NUM_LAYERS = 2  # two layers hard-coded in the kernel body

_UNROLL = 2  # steps per scf.for iteration in the recurrence


def _lstm_fc_kernel(
    x_ref,        # (seq*B, I)   f32, row t*B+b = x[b, t, :]
    w_in_ref,     # (I, 8H)      f32, layer-0 input proj in fused column order
    b_aug_ref,    # (1, 8H)      f32, [b1_sig | b0_sig | b1_g | b0_g]
    wbig_hbm_ref, # (2H, 8H)     f32, fused recurrent weight (pl.ANY space)
    wfc_ref,      # (H, C)       f32 (transposed fc.weight)
    bfc_ref,      # (1, C)       f32
    out_ref,      # (B, C)       f32
    pre_ref,      # (seq*B, 8H)  f32 VMEM scratch: hoisted projection + biases
    wbig_ref,     # (2H, 8H)     f32 VMEM scratch: DMA target for W_big
    dma_sem,      # DMA semaphore
    *,
    hidden_size,
    seq_len,
    batch,
):
  H = hidden_size
  B = batch

  # Kick off the recurrent-weight DMA; it is not needed until the timestep
  # loop, so it overlaps with the hoisted input projection below.
  wbig_copy = pltpu.make_async_copy(wbig_hbm_ref, wbig_ref, dma_sem)
  wbig_copy.start()

  # Hoisted layer-0 input projection with BOTH layers' biases baked into the
  # fused 8H column layout: cols [0,6H) are sigmoid pre-activations
  # [i1 f1 o1 | i0 f0 o0], cols [6H,8H) are tanh pre-activations [g1 | g0].
  # (The layer-1 columns of pre_ref carry only the constant bias b1.)
  pre_ref[...] = (
      jnp.dot(x_ref[...], w_in_ref[...], preferred_element_type=jnp.float32)
      + b_aug_ref[...]
  )

  wbig_copy.wait()

  def sig(v):
    # sigmoid(x) == 0.5*tanh(0.5*x) + 0.5 : single EUP tanh, no divide.
    return 0.5 * jnp.tanh(0.5 * v) + 0.5

  # ---- Prologue: layer-0 cell at t=0 (h0(-1) = c0(-1) = 0). Only the
  # layer-0 columns of pre_ref block 0 are meaningful here.
  p0 = pre_ref[0:B, :]
  s0 = sig(p0[:, 3 * H:6 * H])          # [i0, f0, o0]
  g0g = jnp.tanh(p0[:, 7 * H:8 * H])    # g0
  c0 = s0[:, 0:H] * g0g                 # f0 * 0 + i0 * g0
  h0 = s0[:, 2 * H:3 * H] * jnp.tanh(c0)
  h1 = jnp.zeros((B, H), jnp.float32)
  c1 = jnp.zeros((B, H), jnp.float32)

  def step(k, carry):
    # carry: h0/c0 at time k, h1/c1 at time k-1.
    h0, c0, h1, c1 = carry
    x1 = jnp.concatenate([h0, h1], axis=-1)                      # (B, 2H)
    # Single fused matmul: [g1(k) | g0_rec(k+1)] in fused column order.
    # Weight ref read inside the loop (no giant hoisted live range).
    big = jnp.dot(x1, wbig_ref[...], preferred_element_type=jnp.float32)
    row = pl.multiple_of((k + 1) * B, B)
    g = big + pre_ref[pl.ds(row, B), :]                          # (B, 8H)
    s = sig(g[:, 0:6 * H])            # ONE sigmoid: i/f/o of BOTH layers
    gt = jnp.tanh(g[:, 6 * H:8 * H])  # ONE tanh: g of both layers
    c1n = s[:, 1 * H:2 * H] * c1 + s[:, 0:H] * gt[:, 0:H]        # layer 1, t=k
    c0n = s[:, 4 * H:5 * H] * c0 + s[:, 3 * H:4 * H] * gt[:, H:2 * H]  # t=k+1
    tc = jnp.tanh(jnp.concatenate([c1n, c0n], axis=-1))          # ONE tanh
    h1n = s[:, 2 * H:3 * H] * tc[:, 0:H]
    h0n = s[:, 5 * H:6 * H] * tc[:, H:2 * H]
    return (h0n, c0n, h1n, c1n)

  # Main recurrence: iteration k consumes pre block k+1 and yields
  # (h0(k+1), c0(k+1), h1(k), c1(k)). Partial unroll (_UNROLL steps per
  # scf.for iteration) keeps adjacent-step scheduling visibility without the
  # vreg-pressure of a full unroll; remainder steps are peeled statically.
  steps = seq_len - 1
  n_blocks = steps // _UNROLL

  def block(j, carry):
    c = carry
    base = j * _UNROLL
    for u in range(_UNROLL):
      c = step(base + u, c)
    return c

  carry = (h0, c0, h1, c1)
  carry = lax.fori_loop(0, n_blocks, block, carry)
  for k in range(n_blocks * _UNROLL, steps):   # static remainder (< _UNROLL)
    carry = step(k, carry)
  h0, c0, h1, c1 = carry

  # ---- Epilogue: layer-1 cell at t = T-1, then the fc head.
  x1 = jnp.concatenate([h0, h1], axis=-1)
  big = (jnp.dot(x1, wbig_ref[...], preferred_element_type=jnp.float32)
         + b_aug_ref[...])
  s = sig(big[:, 0:3 * H])                  # [i1, f1, o1]
  g1g = jnp.tanh(big[:, 6 * H:7 * H])       # g1
  c1 = s[:, 1 * H:2 * H] * c1 + s[:, 0:H] * g1g
  h1 = s[:, 2 * H:3 * H] * jnp.tanh(c1)
  out_ref[...] = (
      jnp.dot(h1, wfc_ref[...], preferred_element_type=jnp.float32)
      + bfc_ref[...]
  )


def rnn_forward(x, packed):
  """x: (batch, seq, input) f32. Returns (batch, num_classes) f32."""
  batch, seq_len, input_size = x.shape
  H = HIDDEN_SIZE
  # (B, T, I) -> (T, B, I) -> (T*B, I); row t*B+b holds x[b, t, :].
  x_flat = jnp.transpose(x, (1, 0, 2)).reshape(seq_len * batch, input_size)

  operands = (
      x_flat,
      packed["w_in_aug"], packed["b_aug"], packed["w_big"],
      packed["wfc"], packed["bfc"],
  )

  vmem = pl.BlockSpec(memory_space=pltpu.MemorySpace.VMEM)
  any_spec = pl.BlockSpec(memory_space=pl.ANY)   # W_big: manual async DMA
  kernel = functools.partial(
      _lstm_fc_kernel, hidden_size=H, seq_len=seq_len, batch=batch)
  return pl.pallas_call(
      kernel,
      out_shape=jax.ShapeDtypeStruct((batch, NUM_CLASSES), jnp.float32),
      in_specs=[vmem, vmem, vmem, any_spec, vmem, vmem],
      out_specs=vmem,
      scratch_shapes=[
          pltpu.VMEM((seq_len * batch, 8 * H), jnp.float32),
          pltpu.VMEM((2 * H, 8 * H), jnp.float32),
          pltpu.SemaphoreType.DMA(()),
      ],
      compiler_params=pltpu.CompilerParams(
          vmem_limit_bytes=32 * 1024 * 1024),  # footprint ~2 MiB; harmless cap
  )(*operands)


def init_params(key, input_size, hidden_size, num_classes):
  """Raw PyTorch-style params, U(-1/sqrt(H), 1/sqrt(H))."""
  k = 1.0 / jnp.sqrt(jnp.float32(hidden_size))
  keys = jax.random.split(key, 10)

  def u(kk, shape):
    return jax.random.uniform(kk, shape, jnp.float32, -k, k)

  return {
      "wih0": u(keys[0], (4 * hidden_size, input_size)),
      "whh0": u(keys[1], (4 * hidden_size, hidden_size)),
      "bih0": u(keys[2], (4 * hidden_size,)),
      "bhh0": u(keys[3], (4 * hidden_size,)),
      "wih1": u(keys[4], (4 * hidden_size, hidden_size)),
      "whh1": u(keys[5], (4 * hidden_size, hidden_size)),
      "bih1": u(keys[6], (4 * hidden_size,)),
      "bhh1": u(keys[7], (4 * hidden_size,)),
      "wfc": u(keys[8], (num_classes, hidden_size)),
      "bfc": u(keys[9], (num_classes,)),
  }


def _split_sig_tanh(w_t, H):
  """(K, 4H) in torch column order [i, f, g, o] -> ((K,3H) [i,f,o], (K,H) [g])."""
  sig = jnp.concatenate([w_t[:, 0:2 * H], w_t[:, 3 * H:4 * H]], axis=1)
  tnh = w_t[:, 2 * H:3 * H]
  return sig, tnh


def pack_params(raw, hidden_size):
  """Build the fused-layout operands consumed by the kernel.

  Fused 8H column order: [i1 f1 o1 | i0 f0 o0 | g1 | g0].
    w_in_aug : (I, 8H)   x(t) projection lands in the layer-0 columns only.
    b_aug    : (1, 8H)   b1 in layer-1 columns, b0 in layer-0 columns.
    w_big    : (2H, 8H)  rows [0:H) multiply h0(t), rows [H:2H) multiply h1(t-1);
               layer-1 columns hold W_ih1^T / W_hh1^T, layer-0 columns hold
               W_hh0^T / 0 (the recurrent part of layer 0 at t+1).
  """
  H = hidden_size
  I = raw["wih0"].shape[1]

  sig_in0, g_in0 = _split_sig_tanh(raw["wih0"].T, H)   # (I, 3H), (I, H)
  sig_hh0, g_hh0 = _split_sig_tanh(raw["whh0"].T, H)   # (H, 3H), (H, H)
  sig_ih1, g_ih1 = _split_sig_tanh(raw["wih1"].T, H)
  sig_hh1, g_hh1 = _split_sig_tanh(raw["whh1"].T, H)

  w_in_aug = jnp.concatenate(
      [jnp.zeros((I, 3 * H), jnp.float32), sig_in0,
       jnp.zeros((I, H), jnp.float32), g_in0], axis=1)            # (I, 8H)

  b0 = (raw["bih0"] + raw["bhh0"]).reshape(1, 4 * H)
  b1 = (raw["bih1"] + raw["bhh1"]).reshape(1, 4 * H)
  b0_sig, b0_g = _split_sig_tanh(b0, H)
  b1_sig, b1_g = _split_sig_tanh(b1, H)
  b_aug = jnp.concatenate([b1_sig, b0_sig, b1_g, b0_g], axis=1)   # (1, 8H)

  z3 = jnp.zeros((H, 3 * H), jnp.float32)
  z1 = jnp.zeros((H, H), jnp.float32)
  w_big = jnp.concatenate([
      jnp.concatenate([sig_ih1, sig_hh0, g_ih1, g_hh0], axis=1),  # from h0(t)
      jnp.concatenate([sig_hh1, z3, g_hh1, z1], axis=1),          # from h1(t-1)
  ], axis=0)                                                      # (2H, 8H)

  return {
      "w_in_aug": w_in_aug,
      "b_aug": b_aug,
      "w_big": w_big,
      "wfc": raw["wfc"].T,                 # (H, C)
      "bfc": raw["bfc"].reshape(1, -1),    # (1, C)
  }


def rnn_forward_ref(x, raw):
  """Pure-JAX reference with torch semantics (gate order [i,f,g,o])."""
  H = HIDDEN_SIZE
  batch = x.shape[0]

  def cell(x_in, h, c, wih, whh, bih, bhh):
    g = x_in @ wih.T + h @ whh.T + bih + bhh
    i_g = jax.nn.sigmoid(g[:, 0 * H:1 * H])
    f_g = jax.nn.sigmoid(g[:, 1 * H:2 * H])
    g_g = jnp.tanh(g[:, 2 * H:3 * H])
    o_g = jax.nn.sigmoid(g[:, 3 * H:4 * H])
    c = f_g * c + i_g * g_g
    h = o_g * jnp.tanh(c)
    return h, c

  h0 = c0 = h1 = c1 = jnp.zeros((batch, H), jnp.float32)
  for t in range(x.shape[1]):
    x_t = x[:, t, :]
    h0, c0 = cell(x_t, h0, c0, raw["wih0"], raw["whh0"],
                  raw["bih0"], raw["bhh0"])
    h1, c1 = cell(h0, h1, c1, raw["wih1"], raw["whh1"],
                  raw["bih1"], raw["bhh1"])
  return h1 @ raw["wfc"].T + raw["bfc"]


if __name__ == "__main__":
  key = jax.random.PRNGKey(0)
  k_param, k_x = jax.random.split(key)

  batch, seq_len = 8, 28  # MNIST-row style input: (B, 28, 28)
  x = jax.random.normal(k_x, (batch, seq_len, INPUT_SIZE), jnp.float32)
  raw = init_params(k_param, INPUT_SIZE, HIDDEN_SIZE, NUM_CLASSES)
  packed = pack_params(raw, HIDDEN_SIZE)

  out = jax.block_until_ready(rnn_forward(x, packed))
  ref = jax.block_until_ready(rnn_forward_ref(x, raw))

  assert out.shape == (batch, NUM_CLASSES), out.shape
  assert jnp.allclose(out, ref, atol=1e-4, rtol=1e-4), "mismatch vs reference"
  print("KERNEL_OK")
</pallas_src>

<mosaic_0001>
module attributes {stable_mosaic.version = 11 : i64} {
  func.func @_lstm_fc_kernel(%arg0: memref<224x28xf32, #tpu.memory_space<vmem>>, %arg1: memref<28x1024xf32, #tpu.memory_space<vmem>>, %arg2: memref<1x1024xf32, #tpu.memory_space<vmem>>, %arg3: memref<256x1024xf32, #tpu.memory_space<any>>, %arg4: memref<128x10xf32, #tpu.memory_space<vmem>>, %arg5: memref<1x10xf32, #tpu.memory_space<vmem>>, %arg6: memref<8x10xf32, #tpu.memory_space<vmem>>, %arg7: memref<224x1024xf32, #tpu.memory_space<vmem>>, %arg8: memref<256x1024xf32, #tpu.memory_space<vmem>>, %arg9: memref<!tpu.dma_semaphore, #tpu.memory_space<semaphore_mem>>) attributes {dimension_semantics = [], scalar_prefetch = 0 : i64, scratch_operands = 3 : i64, tpu.core_type = #tpu.core_type<tc>} {
    tpu.enqueue_dma source(%arg3 : memref<256x1024xf32, #tpu.memory_space<any>>) target(%arg8 : memref<256x1024xf32, #tpu.memory_space<vmem>>) target_semaphore(%arg9 : memref<!tpu.dma_semaphore, #tpu.memory_space<semaphore_mem>>)
    %c0 = arith.constant 0 : index
    %c0_0 = arith.constant 0 : index
    %0 = vector.load %arg0[%c0, %c0_0] : memref<224x28xf32, #tpu.memory_space<vmem>>, vector<224x28xf32>
    %c0_1 = arith.constant 0 : index
    %c0_2 = arith.constant 0 : index
    %1 = vector.load %arg1[%c0_1, %c0_2] : memref<28x1024xf32, #tpu.memory_space<vmem>>, vector<28x1024xf32>
    %cst = arith.constant dense<0.000000e+00> : vector<224x1024xf32>
    %2 = tpu.matmul %0, %1, %cst {dimension_numbers = #tpu.dot_dimension_numbers<[1], [0], [0], [1], [0, 0, 1, 1], [], []>} : vector<224x28xf32>, vector<28x1024xf32>, vector<224x1024xf32> -> vector<224x1024xf32>
    %c0_3 = arith.constant 0 : index
    %c0_4 = arith.constant 0 : index
    %3 = vector.load %arg2[%c0_3, %c0_4] : memref<1x1024xf32, #tpu.memory_space<vmem>>, vector<1x1024xf32>
    %4 = vector.broadcast %3 : vector<1x1024xf32> to vector<224x1024xf32>
    %5 = arith.addf %2, %4 : vector<224x1024xf32>
    %c0_5 = arith.constant 0 : index
    %c0_6 = arith.constant 0 : index
    %6 = vector.load %arg7[%c0_5, %c0_6] : memref<224x1024xf32, #tpu.memory_space<vmem>>, vector<224x1024xf32>
    tpu.vector_store %arg7[%c0_5, %c0_6], %5 {strides = array<i32>} : memref<224x1024xf32, #tpu.memory_space<vmem>>, vector<224x1024xf32>,
    tpu.wait_dma2 semaphore(%arg9 : memref<!tpu.dma_semaphore, #tpu.memory_space<semaphore_mem>>) src(%arg3 : memref<256x1024xf32, #tpu.memory_space<any>>) dst(%arg8 : memref<256x1024xf32, #tpu.memory_space<vmem>>)
    %c0_7 = arith.constant 0 : index
    %c0_8 = arith.constant 0 : index
    %7 = vector.load %arg7[%c0_7, %c0_8] : memref<224x1024xf32, #tpu.memory_space<vmem>>, vector<8x1024xf32>
    %8 = vector.extract_strided_slice %7 {offsets = [0, 384], sizes = [8, 384], strides = [1, 1]} : vector<8x1024xf32> to vector<8x384xf32>
    %cst_9 = arith.constant 5.000000e-01 : f32
    %9 = vector.broadcast %cst_9 : f32 to vector<8x384xf32>
    %10 = arith.mulf %9, %8 : vector<8x384xf32>
    %11 = math.tanh %10 : vector<8x384xf32>
    %cst_10 = arith.constant 5.000000e-01 : f32
    %12 = vector.broadcast %cst_10 : f32 to vector<8x384xf32>
    %13 = arith.mulf %12, %11 : vector<8x384xf32>
    %cst_11 = arith.constant 5.000000e-01 : f32
    %14 = vector.broadcast %cst_11 : f32 to vector<8x384xf32>
    %15 = arith.addf %13, %14 : vector<8x384xf32>
    %16 = vector.extract_strided_slice %7 {offsets = [0, 896], sizes = [8, 128], strides = [1, 1]} : vector<8x1024xf32> to vector<8x128xf32>
    %17 = math.tanh %16 : vector<8x128xf32>
    %18 = vector.extract_strided_slice %15 {offsets = [0, 0], sizes = [8, 128], strides = [1, 1]} : vector<8x384xf32> to vector<8x128xf32>
    %19 = arith.mulf %18, %17 : vector<8x128xf32>
    %20 = vector.extract_strided_slice %15 {offsets = [0, 256], sizes = [8, 128], strides = [1, 1]} : vector<8x384xf32> to vector<8x128xf32>
    %21 = math.tanh %19 : vector<8x128xf32>
    %22 = arith.mulf %20, %21 : vector<8x128xf32>
    %cst_12 = arith.constant 0.000000e+00 : f32
    %23 = vector.broadcast %cst_12 : f32 to vector<8x128xf32>
    %cst_13 = arith.constant 0.000000e+00 : f32
    %24 = vector.broadcast %cst_13 : f32 to vector<8x128xf32>
    %c0_i32 = arith.constant 0 : i32
    %c13_i32 = arith.constant 13 : i32
    %25 = arith.addi %c0_i32, %c13_i32 : i32
    %c1_i32 = arith.constant 1 : i32
    %26:4 = scf.for %arg10 = %c0_i32 to %25 step %c1_i32 iter_args(%arg11 = %22, %arg12 = %19, %arg13 = %23, %arg14 = %24) -> (vector<8x128xf32>, vector<8x128xf32>, vector<8x128xf32>, vector<8x128xf32>)  : i32 {
      %c2_i32 = arith.constant 2 : i32
      %94 = arith.muli %arg10, %c2_i32 : i32
      %c0_i32_37 = arith.constant 0 : i32
      %95 = arith.addi %94, %c0_i32_37 : i32
      %96 = tpu.concatenate %arg11, %arg13 in 1 : vector<8x128xf32>, vector<8x128xf32> -> vector<8x256xf32>
      %c0_38 = arith.constant 0 : index
      %c0_39 = arith.constant 0 : index
      %97 = vector.load %arg8[%c0_38, %c0_39] : memref<256x1024xf32, #tpu.memory_space<vmem>>, vector<256x1024xf32>
      %cst_40 = arith.constant dense<0.000000e+00> : vector<8x1024xf32>
      %98 = tpu.matmul %96, %97, %cst_40 {dimension_numbers = #tpu.dot_dimension_numbers<[1], [0], [0], [1], [0, 0, 1, 1], [], []>} : vector<8x256xf32>, vector<256x1024xf32>, vector<8x1024xf32> -> vector<8x1024xf32>
      %c1_i32_41 = arith.constant 1 : i32
      %99 = arith.addi %95, %c1_i32_41 : i32
      %c8_i32 = arith.constant 8 : i32
      %100 = arith.muli %99, %c8_i32 : i32
      %101 = tpu.assume_multiple %100, 8 : i32
      %102 = arith.index_cast %101 : i32 to index
      %c0_42 = arith.constant 0 : index
      %103 = vector.load %arg7[%102, %c0_42] : memref<224x1024xf32, #tpu.memory_space<vmem>>, vector<8x1024xf32>
      %104 = arith.addf %98, %103 : vector<8x1024xf32>
      %105 = vector.extract_strided_slice %104 {offsets = [0, 0], sizes = [8, 768], strides = [1, 1]} : vector<8x1024xf32> to vector<8x768xf32>
      %cst_43 = arith.constant 5.000000e-01 : f32
      %106 = vector.broadcast %cst_43 : f32 to vector<8x768xf32>
      %107 = arith.mulf %106, %105 : vector<8x768xf32>
      %108 = math.tanh %107 : vector<8x768xf32>
      %cst_44 = arith.constant 5.000000e-01 : f32
      %109 = vector.broadcast %cst_44 : f32 to vector<8x768xf32>
      %110 = arith.mulf %109, %108 : vector<8x768xf32>
      %cst_45 = arith.constant 5.000000e-01 : f32
      %111 = vector.broadcast %cst_45 : f32 to vector<8x768xf32>
      %112 = arith.addf %110, %111 : vector<8x768xf32>
      %113 = vector.extract_strided_slice %104 {offsets = [0, 768], sizes = [8, 256], strides = [1, 1]} : vector<8x1024xf32> to vector<8x256xf32>
      %114 = math.tanh %113 : vector<8x256xf32>
      %115 = vector.extract_strided_slice %112 {offsets = [0, 128], sizes = [8, 128], strides = [1, 1]} : vector<8x768xf32> to vector<8x128xf32>
      %116 = arith.mulf %115, %arg14 : vector<8x128xf32>
      %117 = vector.extract_strided_slice %112 {offsets = [0, 0], sizes = [8, 128], strides = [1, 1]} : vector<8x768xf32> to vector<8x128xf32>
      %118 = vector.extract_strided_slice %114 {offsets = [0, 0], sizes = [8, 128], strides = [1, 1]} : vector<8x256xf32> to vector<8x128xf32>
      %119 = arith.mulf %117, %118 : vector<8x128xf32>
      %120 = arith.addf %116, %119 : vector<8x128xf32>
      %121 = vector.extract_strided_slice %112 {offsets = [0, 512], sizes = [8, 128], strides = [1, 1]} : vector<8x768xf32> to vector<8x128xf32>
      %122 = arith.mulf %121, %arg12 : vector<8x128xf32>
      %123 = vector.extract_strided_slice %112 {offsets = [0, 384], sizes = [8, 128], strides = [1, 1]} : vector<8x768xf32> to vector<8x128xf32>
      %124 = vector.extract_strided_slice %114 {offsets = [0, 128], sizes = [8, 128], strides = [1, 1]} : vector<8x256xf32> to vector<8x128xf32>
      %125 = arith.mulf %123, %124 : vector<8x128xf32>
      %126 = arith.addf %122, %125 : vector<8x128xf32>
      %127 = tpu.concatenate %120, %126 in 1 : vector<8x128xf32>, vector<8x128xf32> -> vector<8x256xf32>
      %128 = math.tanh %127 : vector<8x256xf32>
      %129 = vector.extract_strided_slice %112 {offsets = [0, 256], sizes = [8, 128], strides = [1, 1]} : vector<8x768xf32> to vector<8x128xf32>
      %130 = vector.extract_strided_slice %128 {offsets = [0, 0], sizes = [8, 128], strides = [1, 1]} : vector<8x256xf32> to vector<8x128xf32>
      %131 = arith.mulf %129, %130 : vector<8x128xf32>
      %132 = vector.extract_strided_slice %112 {offsets = [0, 640], sizes = [8, 128], strides = [1, 1]} : vector<8x768xf32> to vector<8x128xf32>
      %133 = vector.extract_strided_slice %128 {offsets = [0, 128], sizes = [8, 128], strides = [1, 1]} : vector<8x256xf32> to vector<8x128xf32>
      %134 = arith.mulf %132, %133 : vector<8x128xf32>
      %c1_i32_46 = arith.constant 1 : i32
      %135 = arith.addi %94, %c1_i32_46 : i32
      %136 = tpu.concatenate %134, %131 in 1 : vector<8x128xf32>, vector<8x128xf32> -> vector<8x256xf32>
      %c0_47 = arith.constant 0 : index
      %c0_48 = arith.constant 0 : index
      %137 = vector.load %arg8[%c0_47, %c0_48] : memref<256x1024xf32, #tpu.memory_space<vmem>>, vector<256x1024xf32>
      %cst_49 = arith.constant dense<0.000000e+00> : vector<8x1024xf32>
      %138 = tpu.matmul %136, %137, %cst_49 {dimension_numbers = #tpu.dot_dimension_numbers<[1], [0], [0], [1], [0, 0, 1, 1], [], []>} : vector<8x256xf32>, vector<256x1024xf32>, vector<8x1024xf32> -> vector<8x1024xf32>
      %c1_i32_50 = arith.constant 1 : i32
      %139 = arith.addi %135, %c1_i32_50 : i32
      %c8_i32_51 = arith.constant 8 : i32
      %140 = arith.muli %139, %c8_i32_51 : i32
      %141 = tpu.assume_multiple %140, 8 : i32
      %142 = arith.index_cast %141 : i32 to index
      %c0_52 = arith.constant 0 : index
      %143 = vector.load %arg7[%142, %c0_52] : memref<224x1024xf32, #tpu.memory_space<vmem>>, vector<8x1024xf32>
      %144 = arith.addf %138, %143 : vector<8x1024xf32>
      %145 = vector.extract_strided_slice %144 {offsets = [0, 0], sizes = [8, 768], strides = [1, 1]} : vector<8x1024xf32> to vector<8x768xf32>
      %cst_53 = arith.constant 5.000000e-01 : f32
      %146 = vector.broadcast %cst_53 : f32 to vector<8x768xf32>
      %147 = arith.mulf %146, %145 : vector<8x768xf32>
      %148 = math.tanh %147 : vector<8x768xf32>
      %cst_54 = arith.constant 5.000000e-01 : f32
      %149 = vector.broadcast %cst_54 : f32 to vector<8x768xf32>
      %150 = arith.mulf %149, %148 : vector<8x768xf32>
      %cst_55 = arith.constant 5.000000e-01 : f32
      %151 = vector.broadcast %cst_55 : f32 to vector<8x768xf32>
      %152 = arith.addf %150, %151 : vector<8x768xf32>
      %153 = vector.extract_strided_slice %144 {offsets = [0, 768], sizes = [8, 256], strides = [1, 1]} : vector<8x1024xf32> to vector<8x256xf32>
      %154 = math.tanh %153 : vector<8x256xf32>
      %155 = vector.extract_strided_slice %152 {offsets = [0, 128], sizes = [8, 128], strides = [1, 1]} : vector<8x768xf32> to vector<8x128xf32>
      %156 = arith.mulf %155, %120 : vector<8x128xf32>
      %157 = vector.extract_strided_slice %152 {offsets = [0, 0], sizes = [8, 128], strides = [1, 1]} : vector<8x768xf32> to vector<8x128xf32>
      %158 = vector.extract_strided_slice %154 {offsets = [0, 0], sizes = [8, 128], strides = [1, 1]} : vector<8x256xf32> to vector<8x128xf32>
      %159 = arith.mulf %157, %158 : vector<8x128xf32>
      %160 = arith.addf %156, %159 : vector<8x128xf32>
      %161 = vector.extract_strided_slice %152 {offsets = [0, 512], sizes = [8, 128], strides = [1, 1]} : vector<8x768xf32> to vector<8x128xf32>
      %162 = arith.mulf %161, %126 : vector<8x128xf32>
      %163 = vector.extract_strided_slice %152 {offsets = [0, 384], sizes = [8, 128], strides = [1, 1]} : vector<8x768xf32> to vector<8x128xf32>
      %164 = vector.extract_strided_slice %154 {offsets = [0, 128], sizes = [8, 128], strides = [1, 1]} : vector<8x256xf32> to vector<8x128xf32>
      %165 = arith.mulf %163, %164 : vector<8x128xf32>
      %166 = arith.addf %162, %165 : vector<8x128xf32>
      %167 = tpu.concatenate %160, %166 in 1 : vector<8x128xf32>, vector<8x128xf32> -> vector<8x256xf32>
      %168 = math.tanh %167 : vector<8x256xf32>
      %169 = vector.extract_strided_slice %152 {offsets = [0, 256], sizes = [8, 128], strides = [1, 1]} : vector<8x768xf32> to vector<8x128xf32>
      %170 = vector.extract_strided_slice %168 {offsets = [0, 0], sizes = [8, 128], strides = [1, 1]} : vector<8x256xf32> to vector<8x128xf32>
      %171 = arith.mulf %169, %170 : vector<8x128xf32>
      %172 = vector.extract_strided_slice %152 {offsets = [0, 640], sizes = [8, 128], strides = [1, 1]} : vector<8x768xf32> to vector<8x128xf32>
      %173 = vector.extract_strided_slice %168 {offsets = [0, 128], sizes = [8, 128], strides = [1, 1]} : vector<8x256xf32> to vector<8x128xf32>
      %174 = arith.mulf %172, %173 : vector<8x128xf32>
      scf.yield %174, %166, %171, %160 : vector<8x128xf32>, vector<8x128xf32>, vector<8x128xf32>, vector<8x128xf32>
    }
    %c13_i32_14 = arith.constant 13 : i32
    %27 = tpu.concatenate %26#0, %26#2 in 1 : vector<8x128xf32>, vector<8x128xf32> -> vector<8x256xf32>
    %c0_15 = arith.constant 0 : index
    %c0_16 = arith.constant 0 : index
    %28 = vector.load %arg8[%c0_15, %c0_16] : memref<256x1024xf32, #tpu.memory_space<vmem>>, vector<256x1024xf32>
    %cst_17 = arith.constant dense<0.000000e+00> : vector<8x1024xf32>
    %29 = tpu.matmul %27, %28, %cst_17 {dimension_numbers = #tpu.dot_dimension_numbers<[1], [0], [0], [1], [0, 0, 1, 1], [], []>} : vector<8x256xf32>, vector<256x1024xf32>, vector<8x1024xf32> -> vector<8x1024xf32>
    %c216_i32 = arith.constant 216 : i32
    %30 = tpu.assume_multiple %c216_i32, 8 : i32
    %31 = arith.index_cast %30 : i32 to index
    %c0_18 = arith.constant 0 : index
    %32 = vector.load %arg7[%31, %c0_18] : memref<224x1024xf32, #tpu.memory_space<vmem>>, vector<8x1024xf32>
    %33 = arith.addf %29, %32 : vector<8x1024xf32>
    %34 = vector.extract_strided_slice %33 {offsets = [0, 0], sizes = [8, 768], strides = [1, 1]} : vector<8x1024xf32> to vector<8x768xf32>
    %cst_19 = arith.constant 5.000000e-01 : f32
    %35 = vector.broadcast %cst_19 : f32 to vector<8x768xf32>
    %36 = arith.mulf %35, %34 : vector<8x768xf32>
    %37 = math.tanh %36 : vector<8x768xf32>
    %cst_20 = arith.constant 5.000000e-01 : f32
    %38 = vector.broadcast %cst_20 : f32 to vector<8x768xf32>
    %39 = arith.mulf %38, %37 : vector<8x768xf32>
    %cst_21 = arith.constant 5.000000e-01 : f32
    %40 = vector.broadcast %cst_21 : f32 to vector<8x768xf32>
    %41 = arith.addf %39, %40 : vector<8x768xf32>
    %42 = vector.extract_strided_slice %33 {offsets = [0, 768], sizes = [8, 256], strides = [1, 1]} : vector<8x1024xf32> to vector<8x256xf32>
    %43 = math.tanh %42 : vector<8x256xf32>
    %44 = vector.extract_strided_slice %41 {offsets = [0, 128], sizes = [8, 128], strides = [1, 1]} : vector<8x768xf32> to vector<8x128xf32>
    %45 = arith.mulf %44, %26#3 : vector<8x128xf32>
    %46 = vector.extract_strided_slice %41 {offsets = [0, 0], sizes = [8, 128], strides = [1, 1]} : vector<8x768xf32> to vector<8x128xf32>
    %47 = vector.extract_strided_slice %43 {offsets = [0, 0], sizes = [8, 128], strides = [1, 1]} : vector<8x256xf32> to vector<8x128xf32>
    %48 = arith.mulf %46, %47 : vector<8x128xf32>
    %49 = arith.addf %45, %48 : vector<8x128xf32>
    %50 = vector.extract_strided_slice %41 {offsets = [0, 512], sizes = [8, 128], strides = [1, 1]} : vector<8x768xf32> to vector<8x128xf32>
    %51 = arith.mulf %50, %26#1 : vector<8x128xf32>
    %52 = vector.extract_strided_slice %41 {offsets = [0, 384], sizes = [8, 128], strides = [1, 1]} : vector<8x768xf32> to vector<8x128xf32>
    %53 = vector.extract_strided_slice %43 {offsets = [0, 128], sizes = [8, 128], strides = [1, 1]} : vector<8x256xf32> to vector<8x128xf32>
    %54 = arith.mulf %52, %53 : vector<8x128xf32>
    %55 = arith.addf %51, %54 : vector<8x128xf32>
    %56 = tpu.concatenate %49, %55 in 1 : vector<8x128xf32>, vector<8x128xf32> -> vector<8x256xf32>
    %57 = math.tanh %56 : vector<8x256xf32>
    %58 = vector.extract_strided_slice %41 {offsets = [0, 256], sizes = [8, 128], strides = [1, 1]} : vector<8x768xf32> to vector<8x128xf32>
    %59 = vector.extract_strided_slice %57 {offsets = [0, 0], sizes = [8, 128], strides = [1, 1]} : vector<8x256xf32> to vector<8x128xf32>
    %60 = arith.mulf %58, %59 : vector<8x128xf32>
    %61 = vector.extract_strided_slice %41 {offsets = [0, 640], sizes = [8, 128], strides = [1, 1]} : vector<8x768xf32> to vector<8x128xf32>
    %62 = vector.extract_strided_slice %57 {offsets = [0, 128], sizes = [8, 128], strides = [1, 1]} : vector<8x256xf32> to vector<8x128xf32>
    %63 = arith.mulf %61, %62 : vector<8x128xf32>
    %64 = tpu.concatenate %63, %60 in 1 : vector<8x128xf32>, vector<8x128xf32> -> vector<8x256xf32>
    %c0_22 = arith.constant 0 : index
    %c0_23 = arith.constant 0 : index
    %65 = vector.load %arg8[%c0_22, %c0_23] : memref<256x1024xf32, #tpu.memory_space<vmem>>, vector<256x1024xf32>
    %cst_24 = arith.constant dense<0.000000e+00> : vector<8x1024xf32>
    %66 = tpu.matmul %64, %65, %cst_24 {dimension_numbers = #tpu.dot_dimension_numbers<[1], [0], [0], [1], [0, 0, 1, 1], [], []>} : vector<8x256xf32>, vector<256x1024xf32>, vector<8x1024xf32> -> vector<8x1024xf32>
    %c0_25 = arith.constant 0 : index
    %c0_26 = arith.constant 0 : index
    %67 = vector.load %arg2[%c0_25, %c0_26] : memref<1x1024xf32, #tpu.memory_space<vmem>>, vector<1x1024xf32>
    %68 = vector.broadcast %67 : vector<1x1024xf32> to vector<8x1024xf32>
    %69 = arith.addf %66, %68 : vector<8x1024xf32>
    %70 = vector.extract_strided_slice %69 {offsets = [0, 0], sizes = [8, 384], strides = [1, 1]} : vector<8x1024xf32> to vector<8x384xf32>
    %cst_27 = arith.constant 5.000000e-01 : f32
    %71 = vector.broadcast %cst_27 : f32 to vector<8x384xf32>
    %72 = arith.mulf %71, %70 : vector<8x384xf32>
    %73 = math.tanh %72 : vector<8x384xf32>
    %cst_28 = arith.constant 5.000000e-01 : f32
    %74 = vector.broadcast %cst_28 : f32 to vector<8x384xf32>
    %75 = arith.mulf %74, %73 : vector<8x384xf32>
    %cst_29 = arith.constant 5.000000e-01 : f32
    %76 = vector.broadcast %cst_29 : f32 to vector<8x384xf32>
    %77 = arith.addf %75, %76 : vector<8x384xf32>
    %78 = vector.extract_strided_slice %69 {offsets = [0, 768], sizes = [8, 128], strides = [1, 1]} : vector<8x1024xf32> to vector<8x128xf32>
    %79 = math.tanh %78 : vector<8x128xf32>
    %80 = vector.extract_strided_slice %77 {offsets = [0, 128], sizes = [8, 128], strides = [1, 1]} : vector<8x384xf32> to vector<8x128xf32>
    %81 = arith.mulf %80, %49 : vector<8x128xf32>
    %82 = vector.extract_strided_slice %77 {offsets = [0, 0], sizes = [8, 128], strides = [1, 1]} : vector<8x384xf32> to vector<8x128xf32>
    %83 = arith.mulf %82, %79 : vector<8x128xf32>
    %84 = arith.addf %81, %83 : vector<8x128xf32>
    %85 = vector.extract_strided_slice %77 {offsets = [0, 256], sizes = [8, 128], strides = [1, 1]} : vector<8x384xf32> to vector<8x128xf32>
    %86 = math.tanh %84 : vector<8x128xf32>
    %87 = arith.mulf %85, %86 : vector<8x128xf32>
    %c0_30 = arith.constant 0 : index
    %c0_31 = arith.constant 0 : index
    %88 = vector.load %arg4[%c0_30, %c0_31] : memref<128x10xf32, #tpu.memory_space<vmem>>, vector<128x10xf32>
    %cst_32 = arith.constant dense<0.000000e+00> : vector<8x10xf32>
    %89 = tpu.matmul %87, %88, %cst_32 {dimension_numbers = #tpu.dot_dimension_numbers<[1], [0], [0], [1], [0, 0, 1, 1], [], []>} : vector<8x128xf32>, vector<128x10xf32>, vector<8x10xf32> -> vector<8x10xf32>
    %c0_33 = arith.constant 0 : index
    %c0_34 = arith.constant 0 : index
    %90 = vector.load %arg5[%c0_33, %c0_34] : memref<1x10xf32, #tpu.memory_space<vmem>>, vector<1x10xf32>
    %91 = vector.broadcast %90 : vector<1x10xf32> to vector<8x10xf32>
    %92 = arith.addf %89, %91 : vector<8x10xf32>
    %c0_35 = arith.constant 0 : index
    %c0_36 = arith.constant 0 : index
    %93 = vector.load %arg6[%c0_35, %c0_36] : memref<8x10xf32, #tpu.memory_space<vmem>>, vector<8x10xf32>
    tpu.vector_store %arg6[%c0_35, %c0_36], %92 {strides = array<i32>} : memref<8x10xf32, #tpu.memory_space<vmem>>, vector<8x10xf32>,
    return
  }
}

</mosaic_0001>

<llo_original>
// kernel: tpu_custom_call.1
$region0: #{tpu_custom_call.1}
  #allocation0 [shape = 'u32[]', space=smem, size = 0x4, offset = 0x4, fixed_abs, tag = 'smem constant byte address 0x4 - core index']
  #allocation1 [shape = 'u32[72,128]{1,0:T(1,128)}', space=vmem, size = 0x9000, scoped, tag = 'internal scratch']
  #allocation2 [shape = 'f32[224,1024]{1,0:T(8,128)}', space=vmem, size = 0xe0000, scoped, tag = 'scratch operand']
  #allocation3 [shape = 'f32[256,1024]{1,0:T(8,128)}', space=vmem, size = 0x100000, scoped, tag = 'scratch operand']
  #allocation4 [shape = 's32[1]{0}', space=sflag, size = 0x4, scoped, tag = 'scratch operand']
  #allocation7 [shape = 's32[]', space=sflag, size = 0x4, offset = 0, fixed_abs, tag = 'sflag constant byte address 0x0 - dummy sync flag']
  #allocation8 [shape = 's32[]', space=sflag, size = 0x4, offset = 0, fixed_abs, tag = 'sflag constant byte address 0x0 - dummy sync flag']
  #allocation9 [shape = 'u32[]', space=smem, size = 0x4, offset = 0x44, fixed_abs, tag = 'smem constant byte address 0x44 - assertion arg 0']
  #allocation10 [shape = 'u32[]', space=smem, size = 0x4, offset = 0x48, fixed_abs, tag = 'smem constant byte address 0x48 - assertion arg 1']
  %s0 = inlined_call_operand.vmem [shape: f32[224,28], index: 0, kind: input, shape index: {}]
  %s1 = inlined_call_operand.vmem [shape: f32[28,1024], index: 1, kind: input, shape index: {}]
  %s2 = inlined_call_operand.vmem [shape: f32[1,1024], index: 2, kind: input, shape index: {}]
  %s3 = inlined_call_operand.hbm [shape: f32[256,1024], index: 3, kind: input, shape index: {}]
  %s4 = inlined_call_operand.vmem [shape: f32[128,10], index: 4, kind: input, shape index: {}]
  %s5 = inlined_call_operand.vmem [shape: f32[1,10], index: 5, kind: input, shape index: {}]
  %s6 = inlined_call_operand.hbm [shape: f32[8,10], index: 6, kind: output, shape index: {}]
  %s7 = sld [smem:[#allocation0]]
  $region41: #{tpu_custom_call.1} parent=0
    _
  %s9 = ssub.s32 1, %s7
  %s10 = scalar_select 0, %s9, %s7
  $region1: #{tpu_custom_call.1} parent=0
    #allocation5 [shape = 'u8[4096]{0}', space=vmem, size = 0x1000, scoped, tag = 'output window, operand 0, single buffered']
    #allocation6 [shape = 's32[1]{0}', space=sflag, size = 0x4, scoped, tag = 'scoped memory for tpu_custom_call.1']
    %11 = vsyncpa [#allocation6], 0
    // Predicated region
    $region2: #{tpu_custom_call.1} parent=1 // pred_check
      _
    $region3: #{tpu_custom_call.1} parent=1 // pred_check_branch
      %13 = sbr.rel (0) target = $region5
    $region4: #{tpu_custom_call.1} parent=1 // pred_region
      _
    $region5: #{tpu_custom_call.1} parent=1 // pred_fallthru
      _
    // Predicated region
    $region6: #{tpu_custom_call.1} parent=1 // pred_check
      _
    $region7: #{tpu_custom_call.1} parent=1 // pred_check_branch
      %15 = sbr.rel (0) target = $region9
    $region8: #{tpu_custom_call.1} parent=1 // pred_region
      _
    $region9: #{tpu_custom_call.1} parent=1 // pred_fallthru
      _
    // Predicated region
    $region10: #{tpu_custom_call.1} parent=1 // pred_check
      _
    $region11: #{tpu_custom_call.1} parent=1 // pred_check_branch
      %17 = sbr.rel (0) target = $region13
    $region12: #{tpu_custom_call.1} parent=1 // pred_region
      _
    $region13: #{tpu_custom_call.1} parent=1 // pred_fallthru
      _
    // Predicated region
    $region14: #{tpu_custom_call.1} parent=1 // pred_check
      _
    $region15: #{tpu_custom_call.1} parent=1 // pred_check_branch
      %19 = sbr.rel (0) target = $region17
    $region16: #{tpu_custom_call.1} parent=1 // pred_region
      _
    $region17: #{tpu_custom_call.1} parent=1 // pred_fallthru
      _
    // Predicated region
    $region18: #{tpu_custom_call.1} parent=1 // pred_check
      _
    $region19: #{tpu_custom_call.1} parent=1 // pred_check_branch
      %21 = sbr.rel (0) target = $region21
    $region20: #{tpu_custom_call.1} parent=1 // pred_region
      _
    $region21: #{tpu_custom_call.1} parent=1 // pred_fallthru
      _
    // Predicated region
    $region22: #{tpu_custom_call.1} parent=1 // pred_check
      _
    $region23: #{tpu_custom_call.1} parent=1 // pred_check_branch
      %23 = sbr.rel target = $region25
    $region24: #{tpu_custom_call.1} parent=1 // pred_region
      %24 = sst [smem:[#allocation9]] [#allocation8]
      %25 = sst [smem:[#allocation10]] [#allocation7]
    $region25: #{tpu_custom_call.1} parent=1 // pred_fallthru
      _
    %27 = shalt.err (0)
    %s29 = sshll.u32 %s3, 4
    %s30 = int_to_ptr.hbm [resolvable:$true] %s29
    %s31 = sshll.u32 [#allocation3], 4
    %s32 = int_to_ptr.vmem [resolvable:$true] %s31
    %34 = dma.hbm_to_vmem [thread:$0]  %s30, 32768, %s32, [#allocation4]
    %v35 = vld [vmem:[%s0] sm:$0xff]
    %v36 = vld [vmem:[%s0 + $0x8] sm:$0xff]
    %v37 = vld [vmem:[%s0 + $0x10] sm:$0xff]
    %v38 = vld [vmem:[%s0 + $0x18] sm:$0xff]
    %v39 = vld [vmem:[%s0 + $0x20] sm:$0xff]
    %v40 = vld [vmem:[%s0 + $0x28] sm:$0xff]
    %v41 = vld [vmem:[%s0 + $0x30] sm:$0xff]
    %v42 = vld [vmem:[%s0 + $0x38] sm:$0xff]
    %v43 = vld [vmem:[%s0 + $0x40] sm:$0xff]
    %v44 = vld [vmem:[%s0 + $0x48] sm:$0xff]
    %v45 = vld [vmem:[%s0 + $0x50] sm:$0xff]
    %v46 = vld [vmem:[%s0 + $0x58] sm:$0xff]
    %v47 = vld [vmem:[%s0 + $0x60] sm:$0xff]
    %v48 = vld [vmem:[%s0 + $0x68] sm:$0xff]
    %v49 = vld [vmem:[%s0 + $0x70] sm:$0xff]
    %v50 = vld [vmem:[%s0 + $0x78] sm:$0xff]
    %v51 = vld [vmem:[%s0 + $0x80] sm:$0xff]
    %v52 = vld [vmem:[%s0 + $0x88] sm:$0xff]
    %v53 = vld [vmem:[%s0 + $0x90] sm:$0xff]
    %v54 = vld [vmem:[%s0 + $0x98] sm:$0xff]
    %v55 = vld [vmem:[%s0 + $0xa0] sm:$0xff]
    %v56 = vld [vmem:[%s0 + $0xa8] sm:$0xff]
    %v57 = vld [vmem:[%s0 + $0xb0] sm:$0xff]
    %v58 = vld [vmem:[%s0 + $0xb8] sm:$0xff]
    %v59 = vld [vmem:[%s0 + $0xc0] sm:$0xff]
    %v60 = vld [vmem:[%s0 + $0xc8] sm:$0xff]
    %v61 = vld [vmem:[%s0 + $0xd0] sm:$0xff]
    %v62 = vld [vmem:[%s0 + $0xd8] sm:$0xff]
    %v63 = vld [vmem:[%s1] sm:$0xff]
    %v64 = vld [vmem:[%s1 + $0x8] sm:$0xff]
    %v65 = vld [vmem:[%s1 + $0x10] sm:$0xff]
    %v66 = vld [vmem:[%s1 + $0x18] sm:$0xff]
    %v67 = vld [vmem:[%s1 + $0x20] sm:$0xff]
    %v68 = vld [vmem:[%s1 + $0x28] sm:$0xff]
    %v69 = vld [vmem:[%s1 + $0x30] sm:$0xff]
    %v70 = vld [vmem:[%s1 + $0x38] sm:$0xff]
    %v71 = vld [vmem:[%s1 + $0x40] sm:$0xff]
    %v72 = vld [vmem:[%s1 + $0x48] sm:$0xff]
    %v73 = vld [vmem:[%s1 + $0x50] sm:$0xff]
    %v74 = vld [vmem:[%s1 + $0x58] sm:$0xff]
    %v75 = vld [vmem:[%s1 + $0x60] sm:$0xff]
    %v76 = vld [vmem:[%s1 + $0x68] sm:$0xff]
    %v77 = vld [vmem:[%s1 + $0x70] sm:$0xff]
    %v78 = vld [vmem:[%s1 + $0x78] sm:$0xff]
    %v79 = vld [vmem:[%s1 + $0x80] sm:$0xff]
    %v80 = vld [vmem:[%s1 + $0x88] sm:$0xff]
    %v81 = vld [vmem:[%s1 + $0x90] sm:$0xff]
    %v82 = vld [vmem:[%s1 + $0x98] sm:$0xff]
    %v83 = vld [vmem:[%s1 + $0xa0] sm:$0xff]
    %v84 = vld [vmem:[%s1 + $0xa8] sm:$0xff]
    %v85 = vld [vmem:[%s1 + $0xb0] sm:$0xff]
    %v86 = vld [vmem:[%s1 + $0xb8] sm:$0xff]
    %v87 = vld [vmem:[%s1 + $0xc0] sm:$0xf]
    %v88 = vld [vmem:[%s1 + $0xc8] sm:$0xf]
    %v89 = vld [vmem:[%s1 + $0xd0] sm:$0xf]
    %v90 = vld [vmem:[%s1 + $0xd8] sm:$0xf]
    %v91 = vld [vmem:[%s1 + $0xe0] sm:$0xf]
    %v92 = vld [vmem:[%s1 + $0xe8] sm:$0xf]
    %v93 = vld [vmem:[%s1 + $0xf0] sm:$0xf]
    %v94 = vld [vmem:[%s1 + $0xf8] sm:$0xf]
    %v95 = vld [vmem:[%s2] sm:$0xff]
    %v97 = vperm.slane %v95, 0
    %v98 = vperm.slane %v95, 1
    %v99 = vperm.slane %v95, 2
    %v100 = vperm.slane %v95, 3
    %v101 = vperm.slane %v95, 4
    %v102 = vperm.slane %v95, 5
    %v103 = vperm.slane %v95, 6
    %v104 = vperm.slane %v95, 7
    %vm113 = vcmask 228352
    %v115 = vsel %vm113, %v35, 0
    %v118 = vsel %vm113, %v36, 0
    %v121 = vsel %vm113, %v37, 0
    %v124 = vsel %vm113, %v38, 0
    %v127 = vsel %vm113, %v39, 0
    %v130 = vsel %vm113, %v40, 0
    %v133 = vsel %vm113, %v41, 0
    %v136 = vsel %vm113, %v42, 0
    %v139 = vsel %vm113, %v43, 0
    %v142 = vsel %vm113, %v44, 0
    %v145 = vsel %vm113, %v45, 0
    %v148 = vsel %vm113, %v46, 0
    %v151 = vsel %vm113, %v47, 0
    %v154 = vsel %vm113, %v48, 0
    %v157 = vsel %vm113, %v49, 0
    %v160 = vsel %vm113, %v50, 0
    %v163 = vsel %vm113, %v51, 0
    %v166 = vsel %vm113, %v52, 0
    %v169 = vsel %vm113, %v53, 0
    %v172 = vsel %vm113, %v54, 0
    %v175 = vsel %vm113, %v55, 0
    %v178 = vsel %vm113, %v56, 0
    %v181 = vsel %vm113, %v57, 0
    %v184 = vsel %vm113, %v58, 0
    %v187 = vsel %vm113, %v59, 0
    %v190 = vsel %vm113, %v60, 0
    %v193 = vsel %vm113, %v61, 0
    %v196 = vsel %vm113, %v62, 0
    %vm198 = vcmask 1043456
    %v200 = vsel %vm198, %v87, 0
    %v203 = vsel %vm198, %v88, 0
    %v206 = vsel %vm198, %v89, 0
    %v209 = vsel %vm198, %v90, 0
    %v212 = vsel %vm198, %v91, 0
    %v215 = vsel %vm198, %v92, 0
    %v218 = vsel %vm198, %v93, 0
    %v221 = vsel %vm198, %v94, 0
    %223 = vmatpush.msra.mxu0 0.0
    %224 = vmatpush.msra.mxu0 0.0
    %225 = vmatpush.msra.mxu0 0.0
    %226 = vmatpush.msra.mxu0 0.0
    %227 = vmatpush.msra.mxu0 0.0
    %228 = vmatpush.msra.mxu0 0.0
    %229 = vmatpush.msra.mxu0 0.0
    %230 = vmatpush.msra.mxu0 0.0
    %231 = vmatpush.msra.mxu0 0.0
    %232 = vmatpush.msra.mxu0 0.0
    %233 = vmatpush.msra.mxu0 0.0
    %234 = vmatpush.msra.mxu0 0.0
    %235 = vmatpush.msra.mxu0 %v200
    %236 = vmatpush.msra.mxu0 %v79
    %237 = vmatpush.msra.mxu0 %v71
    %238 = vmatpush.msra.mxu0 %v63
    %239 = vmatmul.f32.gmra.mxu0 %v115
    %v240 = vpop.f32.mrf.mxu0
    %v241 = vadd.f32 %v97, %v240
    %242 = vmatmul.f32.gmra.mxu0 %v118
    %v243 = vpop.f32.mrf.mxu0
    %v244 = vadd.f32 %v97, %v243
    %245 = vmatmul.f32.gmra.mxu0 %v121
    %v246 = vpop.f32.mrf.mxu0
    %v247 = vadd.f32 %v97, %v246
    %248 = vmatmul.f32.gmra.mxu0 %v124
    %v249 = vpop.f32.mrf.mxu0
    %v250 = vadd.f32 %v97, %v249
    %251 = vmatmul.f32.gmra.mxu0 %v127
    %v252 = vpop.f32.mrf.mxu0
    %v253 = vadd.f32 %v97, %v252
    %254 = vmatmul.f32.gmra.mxu0 %v130
    %v255 = vpop.f32.mrf.mxu0
    %v256 = vadd.f32 %v97, %v255
    %257 = vmatmul.f32.gmra.mxu0 %v133
    %v258 = vpop.f32.mrf.mxu0
    %v259 = vadd.f32 %v97, %v258
    %260 = vmatmul.f32.gmra.mxu0 %v136
    %v261 = vpop.f32.mrf.mxu0
    %v262 = vadd.f32 %v97, %v261
    %263 = vmatmul.f32.gmra.mxu0 %v139
    %v264 = vpop.f32.mrf.mxu0
    %v265 = vadd.f32 %v97, %v264
    %266 = vmatmul.f32.gmra.mxu0 %v142
    %v267 = vpop.f32.mrf.mxu0
    %v268 = vadd.f32 %v97, %v267
    %269 = vmatmul.f32.gmra.mxu0 %v145
    %v270 = vpop.f32.mrf.mxu0
    %v271 = vadd.f32 %v97, %v270
    %272 = vmatmul.f32.gmra.mxu0 %v148
    %v273 = vpop.f32.mrf.mxu0
    %v274 = vadd.f32 %v97, %v273
    %275 = vmatmul.f32.gmra.mxu0 %v151
    %v276 = vpop.f32.mrf.mxu0
    %v277 = vadd.f32 %v97, %v276
    %278 = vmatmul.f32.gmra.mxu0 %v154
    %v279 = vpop.f32.mrf.mxu0
    %v280 = vadd.f32 %v97, %v279
    %281 = vmatmul.f32.gmra.mxu0 %v157
    %v282 = vpop.f32.mrf.mxu0
    %v283 = vadd.f32 %v97, %v282
    %284 = vmatmul.f32.gmra.mxu0 %v160
    %v285 = vpop.f32.mrf.mxu0
    %v286 = vadd.f32 %v97, %v285
    %287 = vmatmul.f32.gmra.mxu0 %v163
    %v288 = vpop.f32.mrf.mxu0
    %v289 = vadd.f32 %v97, %v288
    %290 = vmatmul.f32.gmra.mxu0 %v166
    %v291 = vpop.f32.mrf.mxu0
    %v292 = vadd.f32 %v97, %v291
    %293 = vmatmul.f32.gmra.mxu0 %v169
    %v294 = vpop.f32.mrf.mxu0
    %v295 = vadd.f32 %v97, %v294
    %296 = vmatmul.f32.gmra.mxu0 %v172
    %v297 = vpop.f32.mrf.mxu0
    %v298 = vadd.f32 %v97, %v297
    %299 = vmatmul.f32.gmra.mxu0 %v175
    %v300 = vpop.f32.mrf.mxu0
    %v301 = vadd.f32 %v97, %v300
    %302 = vmatmul.f32.gmra.mxu0 %v178
    %v303 = vpop.f32.mrf.mxu0
    %v304 = vadd.f32 %v97, %v303
    %305 = vmatmul.f32.gmra.mxu0 %v181
    %v306 = vpop.f32.mrf.mxu0
    %v307 = vadd.f32 %v97, %v306
    %308 = vmatmul.f32.gmra.mxu0 %v184
    %v309 = vpop.f32.mrf.mxu0
    %v310 = vadd.f32 %v97, %v309
    %311 = vmatmul.f32.gmra.mxu0 %v187
    %v312 = vpop.f32.mrf.mxu0
    %v313 = vadd.f32 %v97, %v312
    %314 = vmatmul.f32.gmra.mxu0 %v190
    %v315 = vpop.f32.mrf.mxu0
    %v316 = vadd.f32 %v97, %v315
    %317 = vmatmul.f32.gmra.mxu0 %v193
    %v318 = vpop.f32.mrf.mxu0
    %v319 = vadd.f32 %v97, %v318
    %320 = vmatmul.f32.gmra.mxu0 %v196
    %v321 = vpop.f32.mrf.mxu0
    %v322 = vadd.f32 %v97, %v321
    %323 = vdwg.mxu0
    %324 = vmatpush.msra.mxu0 0.0
    %325 = vmatpush.msra.mxu0 0.0
    %326 = vmatpush.msra.mxu0 0.0
    %327 = vmatpush.msra.mxu0 0.0
    %328 = vmatpush.msra.mxu0 0.0
    %329 = vmatpush.msra.mxu0 0.0
    %330 = vmatpush.msra.mxu0 0.0
    %331 = vmatpush.msra.mxu0 0.0
    %332 = vmatpush.msra.mxu0 0.0
    %333 = vmatpush.msra.mxu0 0.0
    %334 = vmatpush.msra.mxu0 0.0
    %335 = vmatpush.msra.mxu0 0.0
    %336 = vmatpush.msra.mxu0 %v203
    %337 = vmatpush.msra.mxu0 %v80
    %338 = vmatpush.msra.mxu0 %v72
    %339 = vmatpush.msra.mxu0 %v64
    %340 = vmatmul.f32.gmra.mxu0 %v115
    %v341 = vpop.f32.mrf.mxu0
    %v342 = vadd.f32 %v98, %v341
    %343 = vmatmul.f32.gmra.mxu0 %v118
    %v344 = vpop.f32.mrf.mxu0
    %v345 = vadd.f32 %v98, %v344
    %346 = vmatmul.f32.gmra.mxu0 %v121
    %v347 = vpop.f32.mrf.mxu0
    %v348 = vadd.f32 %v98, %v347
    %349 = vmatmul.f32.gmra.mxu0 %v124
    %v350 = vpop.f32.mrf.mxu0
    %v351 = vadd.f32 %v98, %v350
    %352 = vmatmul.f32.gmra.mxu0 %v127
    %v353 = vpop.f32.mrf.mxu0
    %v354 = vadd.f32 %v98, %v353
    %355 = vmatmul.f32.gmra.mxu0 %v130
    %v356 = vpop.f32.mrf.mxu0
    %v357 = vadd.f32 %v98, %v356
    %358 = vmatmul.f32.gmra.mxu0 %v133
    %v359 = vpop.f32.mrf.mxu0
    %v360 = vadd.f32 %v98, %v359
    %361 = vmatmul.f32.gmra.mxu0 %v136
    %v362 = vpop.f32.mrf.mxu0
    %v363 = vadd.f32 %v98, %v362
    %364 = vmatmul.f32.gmra.mxu0 %v139
    %v365 = vpop.f32.mrf.mxu0
    %v366 = vadd.f32 %v98, %v365
    %367 = vmatmul.f32.gmra.mxu0 %v142
    %v368 = vpop.f32.mrf.mxu0
    %v369 = vadd.f32 %v98, %v368
    %370 = vmatmul.f32.gmra.mxu0 %v145
    %v371 = vpop.f32.mrf.mxu0
    %v372 = vadd.f32 %v98, %v371
    %373 = vmatmul.f32.gmra.mxu0 %v148
    %v374 = vpop.f32.mrf.mxu0
    %v375 = vadd.f32 %v98, %v374
    %376 = vmatmul.f32.gmra.mxu0 %v151
    %v377 = vpop.f32.mrf.mxu0
    %v378 = vadd.f32 %v98, %v377
    %379 = vmatmul.f32.gmra.mxu0 %v154
    %v380 = vpop.f32.mrf.mxu0
    %v381 = vadd.f32 %v98, %v380
    %382 = vmatmul.f32.gmra.mxu0 %v157
    %v383 = vpop.f32.mrf.mxu0
    %v384 = vadd.f32 %v98, %v383
    %385 = vmatmul.f32.gmra.mxu0 %v160
    %v386 = vpop.f32.mrf.mxu0
    %v387 = vadd.f32 %v98, %v386
    %388 = vmatmul.f32.gmra.mxu0 %v163
    %v389 = vpop.f32.mrf.mxu0
    %v390 = vadd.f32 %v98, %v389
    %391 = vmatmul.f32.gmra.mxu0 %v166
    %v392 = vpop.f32.mrf.mxu0
    %v393 = vadd.f32 %v98, %v392
    %394 = vmatmul.f32.gmra.mxu0 %v169
    %v395 = vpop.f32.mrf.mxu0
    %v396 = vadd.f32 %v98, %v395
    %397 = vmatmul.f32.gmra.mxu0 %v172
    %v398 = vpop.f32.mrf.mxu0
    %v399 = vadd.f32 %v98, %v398
    %400 = vmatmul.f32.gmra.mxu0 %v175
    %v401 = vpop.f32.mrf.mxu0
    %v402 = vadd.f32 %v98, %v401
    %403 = vmatmul.f32.gmra.mxu0 %v178
    %v404 = vpop.f32.mrf.mxu0
    %v405 = vadd.f32 %v98, %v404
    %406 = vmatmul.f32.gmra.mxu0 %v181
    %v407 = vpop.f32.mrf.mxu0
    %v408 = vadd.f32 %v98, %v407
    %409 = vmatmul.f32.gmra.mxu0 %v184
    %v410 = vpop.f32.mrf.mxu0
    %v411 = vadd.f32 %v98, %v410
    %412 = vmatmul.f32.gmra.mxu0 %v187
    %v413 = vpop.f32.mrf.mxu0
    %v414 = vadd.f32 %v98, %v413
    %415 = vmatmul.f32.gmra.mxu0 %v190
    %v416 = vpop.f32.mrf.mxu0
    %v417 = vadd.f32 %v98, %v416
    %418 = vmatmul.f32.gmra.mxu0 %v193
    %v419 = vpop.f32.mrf.mxu0
    %v420 = vadd.f32 %v98, %v419
    %421 = vmatmul.f32.gmra.mxu0 %v196
    %v422 = vpop.f32.mrf.mxu0
    %v423 = vadd.f32 %v98, %v422
    %424 = vdwg.mxu0
    %425 = vmatpush.msra.mxu0 0.0
    %426 = vmatpush.msra.mxu0 0.0
    %427 = vmatpush.msra.mxu0 0.0
    %428 = vmatpush.msra.mxu0 0.0
    %429 = vmatpush.msra.mxu0 0.0
    %430 = vmatpush.msra.mxu0 0.0
    %431 = vmatpush.msra.mxu0 0.0
    %432 = vmatpush.msra.mxu0 0.0
    %433 = vmatpush.msra.mxu0 0.0
    %434 = vmatpush.msra.mxu0 0.0
    %435 = vmatpush.msra.mxu0 0.0
    %436 = vmatpush.msra.mxu0 0.0
    %437 = vmatpush.msra.mxu0 %v206
    %438 = vmatpush.msra.mxu0 %v81
    %439 = vmatpush.msra.mxu0 %v73
    %440 = vmatpush.msra.mxu0 %v65
    %441 = vmatmul.f32.gmra.mxu0 %v115
    %v442 = vpop.f32.mrf.mxu0
    %v443 = vadd.f32 %v99, %v442
    %444 = vmatmul.f32.gmra.mxu0 %v118
    %v445 = vpop.f32.mrf.mxu0
    %v446 = vadd.f32 %v99, %v445
    %447 = vmatmul.f32.gmra.mxu0 %v121
    %v448 = vpop.f32.mrf.mxu0
    %v449 = vadd.f32 %v99, %v448
    %450 = vmatmul.f32.gmra.mxu0 %v124
    %v451 = vpop.f32.mrf.mxu0
    %v452 = vadd.f32 %v99, %v451
    %453 = vmatmul.f32.gmra.mxu0 %v127
    %v454 = vpop.f32.mrf.mxu0
    %v455 = vadd.f32 %v99, %v454
    %456 = vmatmul.f32.gmra.mxu0 %v130
    %v457 = vpop.f32.mrf.mxu0
    %v458 = vadd.f32 %v99, %v457
    %459 = vmatmul.f32.gmra.mxu0 %v133
    %v460 = vpop.f32.mrf.mxu0
    %v461 = vadd.f32 %v99, %v460
    %462 = vmatmul.f32.gmra.mxu0 %v136
    %v463 = vpop.f32.mrf.mxu0
    %v464 = vadd.f32 %v99, %v463
    %465 = vmatmul.f32.gmra.mxu0 %v139
    %v466 = vpop.f32.mrf.mxu0
    %v467 = vadd.f32 %v99, %v466
    %468 = vmatmul.f32.gmra.mxu0 %v142
    %v469 = vpop.f32.mrf.mxu0
    %v470 = vadd.f32 %v99, %v469
    %471 = vmatmul.f32.gmra.mxu0 %v145
    %v472 = vpop.f32.mrf.mxu0
    %v473 = vadd.f32 %v99, %v472
    %474 = vmatmul.f32.gmra.mxu0 %v148
    %v475 = vpop.f32.mrf.mxu0
    %v476 = vadd.f32 %v99, %v475
    %477 = vmatmul.f32.gmra.mxu0 %v151
    %v478 = vpop.f32.mrf.mxu0
    %v479 = vadd.f32 %v99, %v478
    %480 = vmatmul.f32.gmra.mxu0 %v154
    %v481 = vpop.f32.mrf.mxu0
    %v482 = vadd.f32 %v99, %v481
    %483 = vmatmul.f32.gmra.mxu0 %v157
    %v484 = vpop.f32.mrf.mxu0
    %v485 = vadd.f32 %v99, %v484
    %486 = vmatmul.f32.gmra.mxu0 %v160
    %v487 = vpop.f32.mrf.mxu0
    %v488 = vadd.f32 %v99, %v487
    %489 = vmatmul.f32.gmra.mxu0 %v163
    %v490 = vpop.f32.mrf.mxu0
    %v491 = vadd.f32 %v99, %v490
    %492 = vmatmul.f32.gmra.mxu0 %v166
    %v493 = vpop.f32.mrf.mxu0
    %v494 = vadd.f32 %v99, %v493
    %495 = vmatmul.f32.gmra.mxu0 %v169
    %v496 = vpop.f32.mrf.mxu0
    %v497 = vadd.f32 %v99, %v496
    %498 = vmatmul.f32.gmra.mxu0 %v172
    %v499 = vpop.f32.mrf.mxu0
    %v500 = vadd.f32 %v99, %v499
    %501 = vmatmul.f32.gmra.mxu0 %v175
    %v502 = vpop.f32.mrf.mxu0
    %v503 = vadd.f32 %v99, %v502
    %504 = vmatmul.f32.gmra.mxu0 %v178
    %v505 = vpop.f32.mrf.mxu0
    %v506 = vadd.f32 %v99, %v505
    %507 = vmatmul.f32.gmra.mxu0 %v181
    %v508 = vpop.f32.mrf.mxu0
    %v509 = vadd.f32 %v99, %v508
    %510 = vmatmul.f32.gmra.mxu0 %v184
    %v511 = vpop.f32.mrf.mxu0
    %v512 = vadd.f32 %v99, %v511
    %513 = vmatmul.f32.gmra.mxu0 %v187
    %v514 = vpop.f32.mrf.mxu0
    %v515 = vadd.f32 %v99, %v514
    %516 = vmatmul.f32.gmra.mxu0 %v190
    %v517 = vpop.f32.mrf.mxu0
    %v518 = vadd.f32 %v99, %v517
    %519 = vmatmul.f32.gmra.mxu0 %v193
    %v520 = vpop.f32.mrf.mxu0
    %v521 = vadd.f32 %v99, %v520
    %522 = vmatmul.f32.gmra.mxu0 %v196
    %v523 = vpop.f32.mrf.mxu0
    %v524 = vadd.f32 %v99, %v523
    %525 = vdwg.mxu0
    %526 = vmatpush.msra.mxu0 0.0
    %527 = vmatpush.msra.mxu0 0.0
    %528 = vmatpush.msra.mxu0 0.0
    %529 = vmatpush.msra.mxu0 0.0
    %530 = vmatpush.msra.mxu0 0.0
    %531 = vmatpush.msra.mxu0 0.0
    %532 = vmatpush.msra.mxu0 0.0
    %533 = vmatpush.msra.mxu0 0.0
    %534 = vmatpush.msra.mxu0 0.0
    %535 = vmatpush.msra.mxu0 0.0
    %536 = vmatpush.msra.mxu0 0.0
    %537 = vmatpush.msra.mxu0 0.0
    %538 = vmatpush.msra.mxu0 %v209
    %539 = vmatpush.msra.mxu0 %v82
    %540 = vmatpush.msra.mxu0 %v74
    %541 = vmatpush.msra.mxu0 %v66
    %542 = vmatmul.f32.gmra.mxu0 %v115
    %v543 = vpop.f32.mrf.mxu0
    %v544 = vadd.f32 %v100, %v543
    %545 = vmatmul.f32.gmra.mxu0 %v118
    %v546 = vpop.f32.mrf.mxu0
    %v547 = vadd.f32 %v100, %v546
    %548 = vmatmul.f32.gmra.mxu0 %v121
    %v549 = vpop.f32.mrf.mxu0
    %v550 = vadd.f32 %v100, %v549
    %551 = vmatmul.f32.gmra.mxu0 %v124
    %v552 = vpop.f32.mrf.mxu0
    %v553 = vadd.f32 %v100, %v552
    %554 = vmatmul.f32.gmra.mxu0 %v127
    %v555 = vpop.f32.mrf.mxu0
    %v556 = vadd.f32 %v100, %v555
    %557 = vmatmul.f32.gmra.mxu0 %v130
    %v558 = vpop.f32.mrf.mxu0
    %v559 = vadd.f32 %v100, %v558
    %560 = vmatmul.f32.gmra.mxu0 %v133
    %v561 = vpop.f32.mrf.mxu0
    %v562 = vadd.f32 %v100, %v561
    %563 = vmatmul.f32.gmra.mxu0 %v136
    %v564 = vpop.f32.mrf.mxu0
    %v565 = vadd.f32 %v100, %v564
    %566 = vmatmul.f32.gmra.mxu0 %v139
    %v567 = vpop.f32.mrf.mxu0
    %v568 = vadd.f32 %v100, %v567
    %569 = vmatmul.f32.gmra.mxu0 %v142
    %v570 = vpop.f32.mrf.mxu0
    %v571 = vadd.f32 %v100, %v570
    %572 = vmatmul.f32.gmra.mxu0 %v145
    %v573 = vpop.f32.mrf.mxu0
    %v574 = vadd.f32 %v100, %v573
    %575 = vmatmul.f32.gmra.mxu0 %v148
    %v576 = vpop.f32.mrf.mxu0
    %v577 = vadd.f32 %v100, %v576
    %578 = vmatmul.f32.gmra.mxu0 %v151
    %v579 = vpop.f32.mrf.mxu0
    %v580 = vadd.f32 %v100, %v579
    %581 = vmatmul.f32.gmra.mxu0 %v154
    %v582 = vpop.f32.mrf.mxu0
    %v583 = vadd.f32 %v100, %v582
    %584 = vmatmul.f32.gmra.mxu0 %v157
    %v585 = vpop.f32.mrf.mxu0
    %v586 = vadd.f32 %v100, %v585
    %587 = vmatmul.f32.gmra.mxu0 %v160
    %v588 = vpop.f32.mrf.mxu0
    %v589 = vadd.f32 %v100, %v588
    %590 = vmatmul.f32.gmra.mxu0 %v163
    %v591 = vpop.f32.mrf.mxu0
    %v592 = vadd.f32 %v100, %v591
    %593 = vmatmul.f32.gmra.mxu0 %v166
    %v594 = vpop.f32.mrf.mxu0
    %v595 = vadd.f32 %v100, %v594
    %596 = vmatmul.f32.gmra.mxu0 %v169
    %v597 = vpop.f32.mrf.mxu0
    %v598 = vadd.f32 %v100, %v597
    %599 = vmatmul.f32.gmra.mxu0 %v172
    %v600 = vpop.f32.mrf.mxu0
    %v601 = vadd.f32 %v100, %v600
    %602 = vmatmul.f32.gmra.mxu0 %v175
    %v603 = vpop.f32.mrf.mxu0
    %v604 = vadd.f32 %v100, %v603
    %605 = vmatmul.f32.gmra.mxu0 %v178
    %v606 = vpop.f32.mrf.mxu0
    %v607 = vadd.f32 %v100, %v606
    %608 = vmatmul.f32.gmra.mxu0 %v181
    %v609 = vpop.f32.mrf.mxu0
    %v610 = vadd.f32 %v100, %v609
    %611 = vmatmul.f32.gmra.mxu0 %v184
    %v612 = vpop.f32.mrf.mxu0
    %v613 = vadd.f32 %v100, %v612
    %614 = vmatmul.f32.gmra.mxu0 %v187
    %v615 = vpop.f32.mrf.mxu0
    %v616 = vadd.f32 %v100, %v615
    %617 = vmatmul.f32.gmra.mxu0 %v190
    %v618 = vpop.f32.mrf.mxu0
    %v619 = vadd.f32 %v100, %v618
    %620 = vmatmul.f32.gmra.mxu0 %v193
    %v621 = vpop.f32.mrf.mxu0
    %v622 = vadd.f32 %v100, %v621
    %623 = vmatmul.f32.gmra.mxu0 %v196
    %v624 = vpop.f32.mrf.mxu0
    %v625 = vadd.f32 %v100, %v624
    %626 = vdwg.mxu0
    %627 = vmatpush.msra.mxu0 0.0
    %628 = vmatpush.msra.mxu0 0.0
    %629 = vmatpush.msra.mxu0 0.0
    %630 = vmatpush.msra.mxu0 0.0
    %631 = vmatpush.msra.mxu0 0.0
    %632 = vmatpush.msra.mxu0 0.0
    %633 = vmatpush.msra.mxu0 0.0
    %634 = vmatpush.msra.mxu0 0.0
    %635 = vmatpush.msra.mxu0 0.0
    %636 = vmatpush.msra.mxu0 0.0
    %637 = vmatpush.msra.mxu0 0.0
    %638 = vmatpush.msra.mxu0 0.0
    %639 = vmatpush.msra.mxu0 %v212
    %640 = vmatpush.msra.mxu0 %v83
    %641 = vmatpush.msra.mxu0 %v75
    %642 = vmatpush.msra.mxu0 %v67
    %643 = vmatmul.f32.gmra.mxu0 %v115
    %v644 = vpop.f32.mrf.mxu0
    %v645 = vadd.f32 %v101, %v644
    %646 = vmatmul.f32.gmra.mxu0 %v118
    %v647 = vpop.f32.mrf.mxu0
    %v648 = vadd.f32 %v101, %v647
    %649 = vmatmul.f32.gmra.mxu0 %v121
    %v650 = vpop.f32.mrf.mxu0
    %v651 = vadd.f32 %v101, %v650
    %652 = vmatmul.f32.gmra.mxu0 %v124
    %v653 = vpop.f32.mrf.mxu0
    %v654 = vadd.f32 %v101, %v653
    %655 = vmatmul.f32.gmra.mxu0 %v127
    %v656 = vpop.f32.mrf.mxu0
    %v657 = vadd.f32 %v101, %v656
    %658 = vmatmul.f32.gmra.mxu0 %v130
    %v659 = vpop.f32.mrf.mxu0
    %v660 = vadd.f32 %v101, %v659
    %661 = vmatmul.f32.gmra.mxu0 %v133
    %v662 = vpop.f32.mrf.mxu0
    %v663 = vadd.f32 %v101, %v662
    %664 = vmatmul.f32.gmra.mxu0 %v136
    %v665 = vpop.f32.mrf.mxu0
    %v666 = vadd.f32 %v101, %v665
    %667 = vmatmul.f32.gmra.mxu0 %v139
    %v668 = vpop.f32.mrf.mxu0
    %v669 = vadd.f32 %v101, %v668
    %670 = vmatmul.f32.gmra.mxu0 %v142
    %v671 = vpop.f32.mrf.mxu0
    %v672 = vadd.f32 %v101, %v671
    %673 = vmatmul.f32.gmra.mxu0 %v145
    %v674 = vpop.f32.mrf.mxu0
    %v675 = vadd.f32 %v101, %v674
    %676 = vmatmul.f32.gmra.mxu0 %v148
    %v677 = vpop.f32.mrf.mxu0
    %v678 = vadd.f32 %v101, %v677
    %679 = vmatmul.f32.gmra.mxu0 %v151
    %v680 = vpop.f32.mrf.mxu0
    %v681 = vadd.f32 %v101, %v680
    %682 = vmatmul.f32.gmra.mxu0 %v154
    %v683 = vpop.f32.mrf.mxu0
    %v684 = vadd.f32 %v101, %v683
    %685 = vmatmul.f32.gmra.mxu0 %v157
    %v686 = vpop.f32.mrf.mxu0
    %v687 = vadd.f32 %v101, %v686
    %688 = vmatmul.f32.gmra.mxu0 %v160
    %v689 = vpop.f32.mrf.mxu0
    %v690 = vadd.f32 %v101, %v689
    %691 = vmatmul.f32.gmra.mxu0 %v163
    %v692 = vpop.f32.mrf.mxu0
    %v693 = vadd.f32 %v101, %v692
    %694 = vmatmul.f32.gmra.mxu0 %v166
    %v695 = vpop.f32.mrf.mxu0
    %v696 = vadd.f32 %v101, %v695
    %697 = vmatmul.f32.gmra.mxu0 %v169
    %v698 = vpop.f32.mrf.mxu0
    %v699 = vadd.f32 %v101, %v698
    %700 = vmatmul.f32.gmra.mxu0 %v172
    %v701 = vpop.f32.mrf.mxu0
    %v702 = vadd.f32 %v101, %v701
    %703 = vmatmul.f32.gmra.mxu0 %v175
    %v704 = vpop.f32.mrf.mxu0
    %v705 = vadd.f32 %v101, %v704
    %706 = vmatmul.f32.gmra.mxu0 %v178
    %v707 = vpop.f32.mrf.mxu0
    %v708 = vadd.f32 %v101, %v707
    %709 = vmatmul.f32.gmra.mxu0 %v181
    %v710 = vpop.f32.mrf.mxu0
    %v711 = vadd.f32 %v101, %v710
    %712 = vmatmul.f32.gmra.mxu0 %v184
    %v713 = vpop.f32.mrf.mxu0
    %v714 = vadd.f32 %v101, %v713
    %715 = vmatmul.f32.gmra.mxu0 %v187
    %v716 = vpop.f32.mrf.mxu0
    %v717 = vadd.f32 %v101, %v716
    %718 = vmatmul.f32.gmra.mxu0 %v190
    %v719 = vpop.f32.mrf.mxu0
    %v720 = vadd.f32 %v101, %v719
    %721 = vmatmul.f32.gmra.mxu0 %v193
    %v722 = vpop.f32.mrf.mxu0
    %v723 = vadd.f32 %v101, %v722
    %724 = vmatmul.f32.gmra.mxu0 %v196
    %v725 = vpop.f32.mrf.mxu0
    %v726 = vadd.f32 %v101, %v725
    %727 = vdwg.mxu0
    %728 = vmatpush.msra.mxu0 0.0
    %729 = vmatpush.msra.mxu0 0.0
    %730 = vmatpush.msra.mxu0 0.0
    %731 = vmatpush.msra.mxu0 0.0
    %732 = vmatpush.msra.mxu0 0.0
    %733 = vmatpush.msra.mxu0 0.0
    %734 = vmatpush.msra.mxu0 0.0
    %735 = vmatpush.msra.mxu0 0.0
    %736 = vmatpush.msra.mxu0 0.0
    %737 = vmatpush.msra.mxu0 0.0
    %738 = vmatpush.msra.mxu0 0.0
    %739 = vmatpush.msra.mxu0 0.0
    %740 = vmatpush.msra.mxu0 %v215
    %741 = vmatpush.msra.mxu0 %v84
    %742 = vmatpush.msra.mxu0 %v76
    %743 = vmatpush.msra.mxu0 %v68
    %744 = vmatmul.f32.gmra.mxu0 %v115
    %v745 = vpop.f32.mrf.mxu0
    %v746 = vadd.f32 %v102, %v745
    %747 = vmatmul.f32.gmra.mxu0 %v118
    %v748 = vpop.f32.mrf.mxu0
    %v749 = vadd.f32 %v102, %v748
    %750 = vmatmul.f32.gmra.mxu0 %v121
    %v751 = vpop.f32.mrf.mxu0
    %v752 = vadd.f32 %v102, %v751
    %753 = vmatmul.f32.gmra.mxu0 %v124
    %v754 = vpop.f32.mrf.mxu0
    %v755 = vadd.f32 %v102, %v754
    %756 = vmatmul.f32.gmra.mxu0 %v127
    %v757 = vpop.f32.mrf.mxu0
    %v758 = vadd.f32 %v102, %v757
    %759 = vmatmul.f32.gmra.mxu0 %v130
    %v760 = vpop.f32.mrf.mxu0
    %v761 = vadd.f32 %v102, %v760
    %762 = vmatmul.f32.gmra.mxu0 %v133
    %v763 = vpop.f32.mrf.mxu0
    %v764 = vadd.f32 %v102, %v763
    %765 = vmatmul.f32.gmra.mxu0 %v136
    %v766 = vpop.f32.mrf.mxu0
    %v767 = vadd.f32 %v102, %v766
    %768 = vmatmul.f32.gmra.mxu0 %v139
    %v769 = vpop.f32.mrf.mxu0
    %v770 = vadd.f32 %v102, %v769
    %771 = vmatmul.f32.gmra.mxu0 %v142
    %v772 = vpop.f32.mrf.mxu0
    %v773 = vadd.f32 %v102, %v772
    %774 = vmatmul.f32.gmra.mxu0 %v145
    %v775 = vpop.f32.mrf.mxu0
    %v776 = vadd.f32 %v102, %v775
    %777 = vmatmul.f32.gmra.mxu0 %v148
    %v778 = vpop.f32.mrf.mxu0
    %v779 = vadd.f32 %v102, %v778
    %780 = vmatmul.f32.gmra.mxu0 %v151
    %v781 = vpop.f32.mrf.mxu0
    %v782 = vadd.f32 %v102, %v781
    %783 = vmatmul.f32.gmra.mxu0 %v154
    %v784 = vpop.f32.mrf.mxu0
    %v785 = vadd.f32 %v102, %v784
    %786 = vmatmul.f32.gmra.mxu0 %v157
    %v787 = vpop.f32.mrf.mxu0
    %v788 = vadd.f32 %v102, %v787
    %789 = vmatmul.f32.gmra.mxu0 %v160
    %v790 = vpop.f32.mrf.mxu0
    %v791 = vadd.f32 %v102, %v790
    %792 = vmatmul.f32.gmra.mxu0 %v163
    %v793 = vpop.f32.mrf.mxu0
    %v794 = vadd.f32 %v102, %v793
    %795 = vmatmul.f32.gmra.mxu0 %v166
    %v796 = vpop.f32.mrf.mxu0
    %v797 = vadd.f32 %v102, %v796
    %798 = vmatmul.f32.gmra.mxu0 %v169
    %v799 = vpop.f32.mrf.mxu0
    %v800 = vadd.f32 %v102, %v799
    %801 = vmatmul.f32.gmra.mxu0 %v172
    %v802 = vpop.f32.mrf.mxu0
    %v803 = vadd.f32 %v102, %v802
    %804 = vmatmul.f32.gmra.mxu0 %v175
    %v805 = vpop.f32.mrf.mxu0
    %v806 = vadd.f32 %v102, %v805
    %807 = vmatmul.f32.gmra.mxu0 %v178
    %v808 = vpop.f32.mrf.mxu0
    %v809 = vadd.f32 %v102, %v808
    %810 = vmatmul.f32.gmra.mxu0 %v181
    %v811 = vpop.f32.mrf.mxu0
    %v812 = vadd.f32 %v102, %v811
    %813 = vmatmul.f32.gmra.mxu0 %v184
    %v814 = vpop.f32.mrf.mxu0
    %v815 = vadd.f32 %v102, %v814
    %816 = vmatmul.f32.gmra.mxu0 %v187
    %v817 = vpop.f32.mrf.mxu0
    %v818 = vadd.f32 %v102, %v817
    %819 = vmatmul.f32.gmra.mxu0 %v190
    %v820 = vpop.f32.mrf.mxu0
    %v821 = vadd.f32 %v102, %v820
    %822 = vmatmul.f32.gmra.mxu0 %v193
    %v823 = vpop.f32.mrf.mxu0
    %v824 = vadd.f32 %v102, %v823
    %825 = vmatmul.f32.gmra.mxu0 %v196
    %v826 = vpop.f32.mrf.mxu0
    %v827 = vadd.f32 %v102, %v826
    %828 = vdwg.mxu0
    %829 = vmatpush.msra.mxu0 0.0
    %830 = vmatpush.msra.mxu0 0.0
    %831 = vmatpush.msra.mxu0 0.0
    %832 = vmatpush.msra.mxu0 0.0
    %833 = vmatpush.msra.mxu0 0.0
    %834 = vmatpush.msra.mxu0 0.0
    %835 = vmatpush.msra.mxu0 0.0
    %836 = vmatpush.msra.mxu0 0.0
    %837 = vmatpush.msra.mxu0 0.0
    %838 = vmatpush.msra.mxu0 0.0
    %839 = vmatpush.msra.mxu0 0.0
    %840 = vmatpush.msra.mxu0 0.0
    %841 = vmatpush.msra.mxu0 %v218
    %842 = vmatpush.msra.mxu0 %v85
    %843 = vmatpush.msra.mxu0 %v77
    %844 = vmatpush.msra.mxu0 %v69
    %845 = vmatmul.f32.gmra.mxu0 %v115
    %v846 = vpop.f32.mrf.mxu0
    %v847 = vadd.f32 %v103, %v846
    %848 = vmatmul.f32.gmra.mxu0 %v118
    %v849 = vpop.f32.mrf.mxu0
    %v850 = vadd.f32 %v103, %v849
    %851 = vmatmul.f32.gmra.mxu0 %v121
    %v852 = vpop.f32.mrf.mxu0
    %v853 = vadd.f32 %v103, %v852
    %854 = vmatmul.f32.gmra.mxu0 %v124
    %v855 = vpop.f32.mrf.mxu0
    %v856 = vadd.f32 %v103, %v855
    %857 = vmatmul.f32.gmra.mxu0 %v127
    %v858 = vpop.f32.mrf.mxu0
    %v859 = vadd.f32 %v103, %v858
    %860 = vmatmul.f32.gmra.mxu0 %v130
    %v861 = vpop.f32.mrf.mxu0
    %v862 = vadd.f32 %v103, %v861
    %863 = vmatmul.f32.gmra.mxu0 %v133
    %v864 = vpop.f32.mrf.mxu0
    %v865 = vadd.f32 %v103, %v864
    %866 = vmatmul.f32.gmra.mxu0 %v136
    %v867 = vpop.f32.mrf.mxu0
    %v868 = vadd.f32 %v103, %v867
    %869 = vmatmul.f32.gmra.mxu0 %v139
    %v870 = vpop.f32.mrf.mxu0
    %v871 = vadd.f32 %v103, %v870
    %872 = vmatmul.f32.gmra.mxu0 %v142
    %v873 = vpop.f32.mrf.mxu0
    %v874 = vadd.f32 %v103, %v873
    %875 = vmatmul.f32.gmra.mxu0 %v145
    %v876 = vpop.f32.mrf.mxu0
    %v877 = vadd.f32 %v103, %v876
    %878 = vmatmul.f32.gmra.mxu0 %v148
    %v879 = vpop.f32.mrf.mxu0
    %v880 = vadd.f32 %v103, %v879
    %881 = vmatmul.f32.gmra.mxu0 %v151
    %v882 = vpop.f32.mrf.mxu0
    %v883 = vadd.f32 %v103, %v882
    %884 = vmatmul.f32.gmra.mxu0 %v154
    %v885 = vpop.f32.mrf.mxu0
    %v886 = vadd.f32 %v103, %v885
    %887 = vmatmul.f32.gmra.mxu0 %v157
    %v888 = vpop.f32.mrf.mxu0
    %v889 = vadd.f32 %v103, %v888
    %890 = vmatmul.f32.gmra.mxu0 %v160
    %v891 = vpop.f32.mrf.mxu0
    %v892 = vadd.f32 %v103, %v891
    %893 = vmatmul.f32.gmra.mxu0 %v163
    %v894 = vpop.f32.mrf.mxu0
    %v895 = vadd.f32 %v103, %v894
    %896 = vmatmul.f32.gmra.mxu0 %v166
    %v897 = vpop.f32.mrf.mxu0
    %v898 = vadd.f32 %v103, %v897
    %899 = vmatmul.f32.gmra.mxu0 %v169
    %v900 = vpop.f32.mrf.mxu0
    %v901 = vadd.f32 %v103, %v900
    %902 = vmatmul.f32.gmra.mxu0 %v172
    %v903 = vpop.f32.mrf.mxu0
    %v904 = vadd.f32 %v103, %v903
    %905 = vmatmul.f32.gmra.mxu0 %v175
    %v906 = vpop.f32.mrf.mxu0
    %v907 = vadd.f32 %v103, %v906
    %908 = vmatmul.f32.gmra.mxu0 %v178
    %v909 = vpop.f32.mrf.mxu0
    %v910 = vadd.f32 %v103, %v909
    %911 = vmatmul.f32.gmra.mxu0 %v181
    %v912 = vpop.f32.mrf.mxu0
    %v913 = vadd.f32 %v103, %v912
    %914 = vmatmul.f32.gmra.mxu0 %v184
    %v915 = vpop.f32.mrf.mxu0
    %v916 = vadd.f32 %v103, %v915
    %917 = vmatmul.f32.gmra.mxu0 %v187
    %v918 = vpop.f32.mrf.mxu0
    %v919 = vadd.f32 %v103, %v918
    %920 = vmatmul.f32.gmra.mxu0 %v190
    %v921 = vpop.f32.mrf.mxu0
    %v922 = vadd.f32 %v103, %v921
    %923 = vmatmul.f32.gmra.mxu0 %v193
    %v924 = vpop.f32.mrf.mxu0
    %v925 = vadd.f32 %v103, %v924
    %926 = vmatmul.f32.gmra.mxu0 %v196
    %v927 = vpop.f32.mrf.mxu0
    %v928 = vadd.f32 %v103, %v927
    %929 = vdwg.mxu0
    %930 = vmatpush.msra.mxu0 0.0
    %931 = vmatpush.msra.mxu0 0.0
    %932 = vmatpush.msra.mxu0 0.0
    %933 = vmatpush.msra.mxu0 0.0
    %934 = vmatpush.msra.mxu0 0.0
    %935 = vmatpush.msra.mxu0 0.0
    %936 = vmatpush.msra.mxu0 0.0
    %937 = vmatpush.msra.mxu0 0.0
    %938 = vmatpush.msra.mxu0 0.0
    %939 = vmatpush.msra.mxu0 0.0
    %940 = vmatpush.msra.mxu0 0.0
    %941 = vmatpush.msra.mxu0 0.0
    %942 = vmatpush.msra.mxu0 %v221
    %943 = vmatpush.msra.mxu0 %v86
    %944 = vmatpush.msra.mxu0 %v78
    %945 = vmatpush.msra.mxu0 %v70
    %946 = vmatmul.f32.gmra.mxu0 %v115
    %v947 = vpop.f32.mrf.mxu0
    %v948 = vadd.f32 %v104, %v947
    %949 = vmatmul.f32.gmra.mxu0 %v118
    %v950 = vpop.f32.mrf.mxu0
    %v951 = vadd.f32 %v104, %v950
    %952 = vmatmul.f32.gmra.mxu0 %v121
    %v953 = vpop.f32.mrf.mxu0
    %v954 = vadd.f32 %v104, %v953
    %955 = vmatmul.f32.gmra.mxu0 %v124
    %v956 = vpop.f32.mrf.mxu0
    %v957 = vadd.f32 %v104, %v956
    %958 = vmatmul.f32.gmra.mxu0 %v127
    %v959 = vpop.f32.mrf.mxu0
    %v960 = vadd.f32 %v104, %v959
    %961 = vmatmul.f32.gmra.mxu0 %v130
    %v962 = vpop.f32.mrf.mxu0
    %v963 = vadd.f32 %v104, %v962
    %964 = vmatmul.f32.gmra.mxu0 %v133
    %v965 = vpop.f32.mrf.mxu0
    %v966 = vadd.f32 %v104, %v965
    %967 = vmatmul.f32.gmra.mxu0 %v136
    %v968 = vpop.f32.mrf.mxu0
    %v969 = vadd.f32 %v104, %v968
    %970 = vmatmul.f32.gmra.mxu0 %v139
    %v971 = vpop.f32.mrf.mxu0
    %v972 = vadd.f32 %v104, %v971
    %973 = vmatmul.f32.gmra.mxu0 %v142
    %v974 = vpop.f32.mrf.mxu0
    %v975 = vadd.f32 %v104, %v974
    %976 = vmatmul.f32.gmra.mxu0 %v145
    %v977 = vpop.f32.mrf.mxu0
    %v978 = vadd.f32 %v104, %v977
    %979 = vmatmul.f32.gmra.mxu0 %v148
    %v980 = vpop.f32.mrf.mxu0
    %v981 = vadd.f32 %v104, %v980
    %982 = vmatmul.f32.gmra.mxu0 %v151
    %v983 = vpop.f32.mrf.mxu0
    %v984 = vadd.f32 %v104, %v983
    %985 = vmatmul.f32.gmra.mxu0 %v154
    %v986 = vpop.f32.mrf.mxu0
    %v987 = vadd.f32 %v104, %v986
    %988 = vmatmul.f32.gmra.mxu0 %v157
    %v989 = vpop.f32.mrf.mxu0
    %v990 = vadd.f32 %v104, %v989
    %991 = vmatmul.f32.gmra.mxu0 %v160
    %v992 = vpop.f32.mrf.mxu0
    %v993 = vadd.f32 %v104, %v992
    %994 = vmatmul.f32.gmra.mxu0 %v163
    %v995 = vpop.f32.mrf.mxu0
    %v996 = vadd.f32 %v104, %v995
    %997 = vmatmul.f32.gmra.mxu0 %v166
    %v998 = vpop.f32.mrf.mxu0
    %v999 = vadd.f32 %v104, %v998
    %1000 = vmatmul.f32.gmra.mxu0 %v169
    %v1001 = vpop.f32.mrf.mxu0
    %v1002 = vadd.f32 %v104, %v1001
    %1003 = vmatmul.f32.gmra.mxu0 %v172
    %v1004 = vpop.f32.mrf.mxu0
    %v1005 = vadd.f32 %v104, %v1004
    %1006 = vmatmul.f32.gmra.mxu0 %v175
    %v1007 = vpop.f32.mrf.mxu0
    %v1008 = vadd.f32 %v104, %v1007
    %1009 = vmatmul.f32.gmra.mxu0 %v178
    %v1010 = vpop.f32.mrf.mxu0
    %v1011 = vadd.f32 %v104, %v1010
    %1012 = vmatmul.f32.gmra.mxu0 %v181
    %v1013 = vpop.f32.mrf.mxu0
    %v1014 = vadd.f32 %v104, %v1013
    %1015 = vmatmul.f32.gmra.mxu0 %v184
    %v1016 = vpop.f32.mrf.mxu0
    %v1017 = vadd.f32 %v104, %v1016
    %1018 = vmatmul.f32.gmra.mxu0 %v187
    %v1019 = vpop.f32.mrf.mxu0
    %v1020 = vadd.f32 %v104, %v1019
    %1021 = vmatmul.f32.gmra.mxu0 %v190
    %v1022 = vpop.f32.mrf.mxu0
    %v1023 = vadd.f32 %v104, %v1022
    %1024 = vmatmul.f32.gmra.mxu0 %v193
    %v1025 = vpop.f32.mrf.mxu0
    %v1026 = vadd.f32 %v104, %v1025
    %1027 = vmatmul.f32.gmra.mxu0 %v196
    %v1028 = vpop.f32.mrf.mxu0
    %v1029 = vadd.f32 %v104, %v1028
    %1030 = vdwg.mxu0
    %1031 = vst [vmem:[#allocation2] sm:$0xff] %v241
    %1032 = vst [vmem:[#allocation2 + $0x8] sm:$0xff] %v342
    %1033 = vst [vmem:[#allocation2 + $0x10] sm:$0xff] %v443
    %1034 = vst [vmem:[#allocation2 + $0x18] sm:$0xff] %v544
    %1035 = vst [vmem:[#allocation2 + $0x20] sm:$0xff] %v645
    %1036 = vst [vmem:[#allocation2 + $0x28] sm:$0xff] %v746
    %1037 = vst [vmem:[#allocation2 + $0x30] sm:$0xff] %v847
    %1038 = vst [vmem:[#allocation2 + $0x38] sm:$0xff] %v948
    %1039 = vst [vmem:[#allocation2 + $0x40] sm:$0xff] %v244
    %1040 = vst [vmem:[#allocation2 + $0x48] sm:$0xff] %v345
    %1041 = vst [vmem:[#allocation2 + $0x50] sm:$0xff] %v446
    %1042 = vst [vmem:[#allocation2 + $0x58] sm:$0xff] %v547
    %1043 = vst [vmem:[#allocation2 + $0x60] sm:$0xff] %v648
    %1044 = vst [vmem:[#allocation2 + $0x68] sm:$0xff] %v749
    %1045 = vst [vmem:[#allocation2 + $0x70] sm:$0xff] %v850
    %1046 = vst [vmem:[#allocation2 + $0x78] sm:$0xff] %v951
    %1047 = vst [vmem:[#allocation2 + $0x80] sm:$0xff] %v247
    %1048 = vst [vmem:[#allocation2 + $0x88] sm:$0xff] %v348
    %1049 = vst [vmem:[#allocation2 + $0x90] sm:$0xff] %v449
    %1050 = vst [vmem:[#allocation2 + $0x98] sm:$0xff] %v550
    %1051 = vst [vmem:[#allocation2 + $0xa0] sm:$0xff] %v651
    %1052 = vst [vmem:[#allocation2 + $0xa8] sm:$0xff] %v752
    %1053 = vst [vmem:[#allocation2 + $0xb0] sm:$0xff] %v853
    %1054 = vst [vmem:[#allocation2 + $0xb8] sm:$0xff] %v954
    %1055 = vst [vmem:[#allocation2 + $0xc0] sm:$0xff] %v250
    %1056 = vst [vmem:[#allocation2 + $0xc8] sm:$0xff] %v351
    %1057 = vst [vmem:[#allocation2 + $0xd0] sm:$0xff] %v452
    %1058 = vst [vmem:[#allocation2 + $0xd8] sm:$0xff] %v553
    %1059 = vst [vmem:[#allocation2 + $0xe0] sm:$0xff] %v654
    %1060 = vst [vmem:[#allocation2 + $0xe8] sm:$0xff] %v755
    %1061 = vst [vmem:[#allocation2 + $0xf0] sm:$0xff] %v856
    %1062 = vst [vmem:[#allocation2 + $0xf8] sm:$0xff] %v957
    %1063 = vst [vmem:[#allocation2 + $0x100] sm:$0xff] %v253
    %1064 = vst [vmem:[#allocation2 + $0x108] sm:$0xff] %v354
    %1065 = vst [vmem:[#allocation2 + $0x110] sm:$0xff] %v455
    %1066 = vst [vmem:[#allocation2 + $0x118] sm:$0xff] %v556
    %1067 = vst [vmem:[#allocation2 + $0x120] sm:$0xff] %v657
    %1068 = vst [vmem:[#allocation2 + $0x128] sm:$0xff] %v758
    %1069 = vst [vmem:[#allocation2 + $0x130] sm:$0xff] %v859
    %1070 = vst [vmem:[#allocation2 + $0x138] sm:$0xff] %v960
    %1071 = vst [vmem:[#allocation2 + $0x140] sm:$0xff] %v256
    %1072 = vst [vmem:[#allocation2 + $0x148] sm:$0xff] %v357
    %1073 = vst [vmem:[#allocation2 + $0x150] sm:$0xff] %v458
    %1074 = vst [vmem:[#allocation2 + $0x158] sm:$0xff] %v559
    %1075 = vst [vmem:[#allocation2 + $0x160] sm:$0xff] %v660
    %1076 = vst [vmem:[#allocation2 + $0x168] sm:$0xff] %v761
    %1077 = vst [vmem:[#allocation2 + $0x170] sm:$0xff] %v862
    %1078 = vst [vmem:[#allocation2 + $0x178] sm:$0xff] %v963
    %1079 = vst [vmem:[#allocation2 + $0x180] sm:$0xff] %v259
    %1080 = vst [vmem:[#allocation2 + $0x188] sm:$0xff] %v360
    %1081 = vst [vmem:[#allocation2 + $0x190] sm:$0xff] %v461
    %1082 = vst [vmem:[#allocation2 + $0x198] sm:$0xff] %v562
    %1083 = vst [vmem:[#allocation2 + $0x1a0] sm:$0xff] %v663
    %1084 = vst [vmem:[#allocation2 + $0x1a8] sm:$0xff] %v764
    %1085 = vst [vmem:[#allocation2 + $0x1b0] sm:$0xff] %v865
    %1086 = vst [vmem:[#allocation2 + $0x1b8] sm:$0xff] %v966
    %1087 = vst [vmem:[#allocation2 + $0x1c0] sm:$0xff] %v262
    %1088 = vst [vmem:[#allocation2 + $0x1c8] sm:$0xff] %v363
    %1089 = vst [vmem:[#allocation2 + $0x1d0] sm:$0xff] %v464
    %1090 = vst [vmem:[#allocation2 + $0x1d8] sm:$0xff] %v565
    %1091 = vst [vmem:[#allocation2 + $0x1e0] sm:$0xff] %v666
    %1092 = vst [vmem:[#allocation2 + $0x1e8] sm:$0xff] %v767
    %1093 = vst [vmem:[#allocation2 + $0x1f0] sm:$0xff] %v868
    %1094 = vst [vmem:[#allocation2 + $0x1f8] sm:$0xff] %v969
    %1095 = vst [vmem:[#allocation2 + $0x200] sm:$0xff] %v265
    %1096 = vst [vmem:[#allocation2 + $0x208] sm:$0xff] %v366
    %1097 = vst [vmem:[#allocation2 + $0x210] sm:$0xff] %v467
    %1098 = vst [vmem:[#allocation2 + $0x218] sm:$0xff] %v568
    %1099 = vst [vmem:[#allocation2 + $0x220] sm:$0xff] %v669
    %1100 = vst [vmem:[#allocation2 + $0x228] sm:$0xff] %v770
    %1101 = vst [vmem:[#allocation2 + $0x230] sm:$0xff] %v871
    %1102 = vst [vmem:[#allocation2 + $0x238] sm:$0xff] %v972
    %1103 = vst [vmem:[#allocation2 + $0x240] sm:$0xff] %v268
    %1104 = vst [vmem:[#allocation2 + $0x248] sm:$0xff] %v369
    %1105 = vst [vmem:[#allocation2 + $0x250] sm:$0xff] %v470
    %1106 = vst [vmem:[#allocation2 + $0x258] sm:$0xff] %v571
    %1107 = vst [vmem:[#allocation2 + $0x260] sm:$0xff] %v672
    %1108 = vst [vmem:[#allocation2 + $0x268] sm:$0xff] %v773
    %1109 = vst [vmem:[#allocation2 + $0x270] sm:$0xff] %v874
    %1110 = vst [vmem:[#allocation2 + $0x278] sm:$0xff] %v975
    %1111 = vst [vmem:[#allocation2 + $0x280] sm:$0xff] %v271
    %1112 = vst [vmem:[#allocation2 + $0x288] sm:$0xff] %v372
    %1113 = vst [vmem:[#allocation2 + $0x290] sm:$0xff] %v473
    %1114 = vst [vmem:[#allocation2 + $0x298] sm:$0xff] %v574
    %1115 = vst [vmem:[#allocation2 + $0x2a0] sm:$0xff] %v675
    %1116 = vst [vmem:[#allocation2 + $0x2a8] sm:$0xff] %v776
    %1117 = vst [vmem:[#allocation2 + $0x2b0] sm:$0xff] %v877
    %1118 = vst [vmem:[#allocation2 + $0x2b8] sm:$0xff] %v978
    %1119 = vst [vmem:[#allocation2 + $0x2c0] sm:$0xff] %v274
    %1120 = vst [vmem:[#allocation2 + $0x2c8] sm:$0xff] %v375
    %1121 = vst [vmem:[#allocation2 + $0x2d0] sm:$0xff] %v476
    %1122 = vst [vmem:[#allocation2 + $0x2d8] sm:$0xff] %v577
    %1123 = vst [vmem:[#allocation2 + $0x2e0] sm:$0xff] %v678
    %1124 = vst [vmem:[#allocation2 + $0x2e8] sm:$0xff] %v779
    %1125 = vst [vmem:[#allocation2 + $0x2f0] sm:$0xff] %v880
    %1126 = vst [vmem:[#allocation2 + $0x2f8] sm:$0xff] %v981
    %1127 = vst [vmem:[#allocation2 + $0x300] sm:$0xff] %v277
    %1128 = vst [vmem:[#allocation2 + $0x308] sm:$0xff] %v378
    %1129 = vst [vmem:[#allocation2 + $0x310] sm:$0xff] %v479
    %1130 = vst [vmem:[#allocation2 + $0x318] sm:$0xff] %v580
    %1131 = vst [vmem:[#allocation2 + $0x320] sm:$0xff] %v681
    %1132 = vst [vmem:[#allocation2 + $0x328] sm:$0xff] %v782
    %1133 = vst [vmem:[#allocation2 + $0x330] sm:$0xff] %v883
    %1134 = vst [vmem:[#allocation2 + $0x338] sm:$0xff] %v984
    %1135 = vst [vmem:[#allocation2 + $0x340] sm:$0xff] %v280
    %1136 = vst [vmem:[#allocation2 + $0x348] sm:$0xff] %v381
    %1137 = vst [vmem:[#allocation2 + $0x350] sm:$0xff] %v482
    %1138 = vst [vmem:[#allocation2 + $0x358] sm:$0xff] %v583
    %1139 = vst [vmem:[#allocation2 + $0x360] sm:$0xff] %v684
    %1140 = vst [vmem:[#allocation2 + $0x368] sm:$0xff] %v785
    %1141 = vst [vmem:[#allocation2 + $0x370] sm:$0xff] %v886
    %1142 = vst [vmem:[#allocation2 + $0x378] sm:$0xff] %v987
    %1143 = vst [vmem:[#allocation2 + $0x380] sm:$0xff] %v283
    %1144 = vst [vmem:[#allocation2 + $0x388] sm:$0xff] %v384
    %1145 = vst [vmem:[#allocation2 + $0x390] sm:$0xff] %v485
    %1146 = vst [vmem:[#allocation2 + $0x398] sm:$0xff] %v586
    %1147 = vst [vmem:[#allocation2 + $0x3a0] sm:$0xff] %v687
    %1148 = vst [vmem:[#allocation2 + $0x3a8] sm:$0xff] %v788
    %1149 = vst [vmem:[#allocation2 + $0x3b0] sm:$0xff] %v889
    %1150 = vst [vmem:[#allocation2 + $0x3b8] sm:$0xff] %v990
    %1151 = vst [vmem:[#allocation2 + $0x3c0] sm:$0xff] %v286
    %1152 = vst [vmem:[#allocation2 + $0x3c8] sm:$0xff] %v387
    %1153 = vst [vmem:[#allocation2 + $0x3d0] sm:$0xff] %v488
    %1154 = vst [vmem:[#allocation2 + $0x3d8] sm:$0xff] %v589
    %1155 = vst [vmem:[#allocation2 + $0x3e0] sm:$0xff] %v690
    %1156 = vst [vmem:[#allocation2 + $0x3e8] sm:$0xff] %v791
    %1157 = vst [vmem:[#allocation2 + $0x3f0] sm:$0xff] %v892
    %1158 = vst [vmem:[#allocation2 + $0x3f8] sm:$0xff] %v993
    %1159 = vst [vmem:[#allocation2 + $0x400] sm:$0xff] %v289
    %1160 = vst [vmem:[#allocation2 + $0x408] sm:$0xff] %v390
    %1161 = vst [vmem:[#allocation2 + $0x410] sm:$0xff] %v491
    %1162 = vst [vmem:[#allocation2 + $0x418] sm:$0xff] %v592
    %1163 = vst [vmem:[#allocation2 + $0x420] sm:$0xff] %v693
    %1164 = vst [vmem:[#allocation2 + $0x428] sm:$0xff] %v794
    %1165 = vst [vmem:[#allocation2 + $0x430] sm:$0xff] %v895
    %1166 = vst [vmem:[#allocation2 + $0x438] sm:$0xff] %v996
    %1167 = vst [vmem:[#allocation2 + $0x440] sm:$0xff] %v292
    %1168 = vst [vmem:[#allocation2 + $0x448] sm:$0xff] %v393
    %1169 = vst [vmem:[#allocation2 + $0x450] sm:$0xff] %v494
    %1170 = vst [vmem:[#allocation2 + $0x458] sm:$0xff] %v595
    %1171 = vst [vmem:[#allocation2 + $0x460] sm:$0xff] %v696
    %1172 = vst [vmem:[#allocation2 + $0x468] sm:$0xff] %v797
    %1173 = vst [vmem:[#allocation2 + $0x470] sm:$0xff] %v898
    %1174 = vst [vmem:[#allocation2 + $0x478] sm:$0xff] %v999
    %1175 = vst [vmem:[#allocation2 + $0x480] sm:$0xff] %v295
    %1176 = vst [vmem:[#allocation2 + $0x488] sm:$0xff] %v396
    %1177 = vst [vmem:[#allocation2 + $0x490] sm:$0xff] %v497
    %1178 = vst [vmem:[#allocation2 + $0x498] sm:$0xff] %v598
    %1179 = vst [vmem:[#allocation2 + $0x4a0] sm:$0xff] %v699
    %1180 = vst [vmem:[#allocation2 + $0x4a8] sm:$0xff] %v800
    %1181 = vst [vmem:[#allocation2 + $0x4b0] sm:$0xff] %v901
    %1182 = vst [vmem:[#allocation2 + $0x4b8] sm:$0xff] %v1002
    %1183 = vst [vmem:[#allocation2 + $0x4c0] sm:$0xff] %v298
    %1184 = vst [vmem:[#allocation2 + $0x4c8] sm:$0xff] %v399
    %1185 = vst [vmem:[#allocation2 + $0x4d0] sm:$0xff] %v500
    %1186 = vst [vmem:[#allocation2 + $0x4d8] sm:$0xff] %v601
    %1187 = vst [vmem:[#allocation2 + $0x4e0] sm:$0xff] %v702
    %1188 = vst [vmem:[#allocation2 + $0x4e8] sm:$0xff] %v803
    %1189 = vst [vmem:[#allocation2 + $0x4f0] sm:$0xff] %v904
    %1190 = vst [vmem:[#allocation2 + $0x4f8] sm:$0xff] %v1005
    %1191 = vst [vmem:[#allocation2 + $0x500] sm:$0xff] %v301
    %1192 = vst [vmem:[#allocation2 + $0x508] sm:$0xff] %v402
    %1193 = vst [vmem:[#allocation2 + $0x510] sm:$0xff] %v503
    %1194 = vst [vmem:[#allocation2 + $0x518] sm:$0xff] %v604
    %1195 = vst [vmem:[#allocation2 + $0x520] sm:$0xff] %v705
    %1196 = vst [vmem:[#allocation2 + $0x528] sm:$0xff] %v806
    %1197 = vst [vmem:[#allocation2 + $0x530] sm:$0xff] %v907
    %1198 = vst [vmem:[#allocation2 + $0x538] sm:$0xff] %v1008
    %1199 = vst [vmem:[#allocation2 + $0x540] sm:$0xff] %v304
    %1200 = vst [vmem:[#allocation2 + $0x548] sm:$0xff] %v405
    %1201 = vst [vmem:[#allocation2 + $0x550] sm:$0xff] %v506
    %1202 = vst [vmem:[#allocation2 + $0x558] sm:$0xff] %v607
    %1203 = vst [vmem:[#allocation2 + $0x560] sm:$0xff] %v708
    %1204 = vst [vmem:[#allocation2 + $0x568] sm:$0xff] %v809
    %1205 = vst [vmem:[#allocation2 + $0x570] sm:$0xff] %v910
    %1206 = vst [vmem:[#allocation2 + $0x578] sm:$0xff] %v1011
    %1207 = vst [vmem:[#allocation2 + $0x580] sm:$0xff] %v307
    %1208 = vst [vmem:[#allocation2 + $0x588] sm:$0xff] %v408
    %1209 = vst [vmem:[#allocation2 + $0x590] sm:$0xff] %v509
    %1210 = vst [vmem:[#allocation2 + $0x598] sm:$0xff] %v610
    %1211 = vst [vmem:[#allocation2 + $0x5a0] sm:$0xff] %v711
    %1212 = vst [vmem:[#allocation2 + $0x5a8] sm:$0xff] %v812
    %1213 = vst [vmem:[#allocation2 + $0x5b0] sm:$0xff] %v913
    %1214 = vst [vmem:[#allocation2 + $0x5b8] sm:$0xff] %v1014
    %1215 = vst [vmem:[#allocation2 + $0x5c0] sm:$0xff] %v310
    %1216 = vst [vmem:[#allocation2 + $0x5c8] sm:$0xff] %v411
    %1217 = vst [vmem:[#allocation2 + $0x5d0] sm:$0xff] %v512
    %1218 = vst [vmem:[#allocation2 + $0x5d8] sm:$0xff] %v613
    %1219 = vst [vmem:[#allocation2 + $0x5e0] sm:$0xff] %v714
    %1220 = vst [vmem:[#allocation2 + $0x5e8] sm:$0xff] %v815
    %1221 = vst [vmem:[#allocation2 + $0x5f0] sm:$0xff] %v916
    %1222 = vst [vmem:[#allocation2 + $0x5f8] sm:$0xff] %v1017
    %1223 = vst [vmem:[#allocation2 + $0x600] sm:$0xff] %v313
    %1224 = vst [vmem:[#allocation2 + $0x608] sm:$0xff] %v414
    %1225 = vst [vmem:[#allocation2 + $0x610] sm:$0xff] %v515
    %1226 = vst [vmem:[#allocation2 + $0x618] sm:$0xff] %v616
    %1227 = vst [vmem:[#allocation2 + $0x620] sm:$0xff] %v717
    %1228 = vst [vmem:[#allocation2 + $0x628] sm:$0xff] %v818
    %1229 = vst [vmem:[#allocation2 + $0x630] sm:$0xff] %v919
    %1230 = vst [vmem:[#allocation2 + $0x638] sm:$0xff] %v1020
    %1231 = vst [vmem:[#allocation2 + $0x640] sm:$0xff] %v316
    %1232 = vst [vmem:[#allocation2 + $0x648] sm:$0xff] %v417
    %1233 = vst [vmem:[#allocation2 + $0x650] sm:$0xff] %v518
    %1234 = vst [vmem:[#allocation2 + $0x658] sm:$0xff] %v619
    %1235 = vst [vmem:[#allocation2 + $0x660] sm:$0xff] %v720
    %1236 = vst [vmem:[#allocation2 + $0x668] sm:$0xff] %v821
    %1237 = vst [vmem:[#allocation2 + $0x670] sm:$0xff] %v922
    %1238 = vst [vmem:[#allocation2 + $0x678] sm:$0xff] %v1023
    %1239 = vst [vmem:[#allocation2 + $0x680] sm:$0xff] %v319
    %1240 = vst [vmem:[#allocation2 + $0x688] sm:$0xff] %v420
    %1241 = vst [vmem:[#allocation2 + $0x690] sm:$0xff] %v521
    %1242 = vst [vmem:[#allocation2 + $0x698] sm:$0xff] %v622
    %1243 = vst [vmem:[#allocation2 + $0x6a0] sm:$0xff] %v723
    %1244 = vst [vmem:[#allocation2 + $0x6a8] sm:$0xff] %v824
    %1245 = vst [vmem:[#allocation2 + $0x6b0] sm:$0xff] %v925
    %1246 = vst [vmem:[#allocation2 + $0x6b8] sm:$0xff] %v1026
    %1247 = vst [vmem:[#allocation2 + $0x6c0] sm:$0xff] %v322
    %1248 = vst [vmem:[#allocation2 + $0x6c8] sm:$0xff] %v423
    %1249 = vst [vmem:[#allocation2 + $0x6d0] sm:$0xff] %v524
    %1250 = vst [vmem:[#allocation2 + $0x6d8] sm:$0xff] %v625
    %1251 = vst [vmem:[#allocation2 + $0x6e0] sm:$0xff] %v726
    %1252 = vst [vmem:[#allocation2 + $0x6e8] sm:$0xff] %v827
    %1253 = vst [vmem:[#allocation2 + $0x6f0] sm:$0xff] %v928
    %1254 = vst [vmem:[#allocation2 + $0x6f8] sm:$0xff] %v1029
    %s1255 = smul.u32 8, 32
    %s1256 = smul.u32 %s1255, 8
    %s1257 = sshll.u32 %s1256, 4
    %1258 = dma.done [#allocation4], %s1257
    %v1259 = vld [vmem:[#allocation2 + $0x18] sm:$0xff]
    %v1260 = vld [vmem:[#allocation2 + $0x28] sm:$0xff]
    %v1261 = vld [vmem:[#allocation2 + $0x38] sm:$0xff]
    %v1262 = vmul.f32 %v1259, 0.5
    %v1263 = vmul.f32 %v1260, 0.5
    %v1264 = vtanh.pop %v1262
    %v1265 = vtanh.pop %v1263
    %v1266 = vmul.f32 %v1264, 0.5
    %v1267 = vmul.f32 %v1265, 0.5
    %v1268 = vadd.f32 %v1266, 0.5
    %v1269 = vadd.f32 %v1267, 0.5
    %v1270 = vtanh.pop %v1261
    %v1271 = vmul.f32 %v1268, %v1270
    %v1272 = vtanh.pop %v1271
    %v1273 = vmul.f32 %v1269, %v1272
    loop: start=0, step=1, limit=13
    $region26: #{tpu_custom_call.1} parent=1 // loop_pre_header
      _
    $region27: #{tpu_custom_call.1} parent=1 // loop_header
      %s1275 = sphi 0, %s1279
      %p1276 = scmp.ge.s32.totalorder %s1275, 13
      %v1280 = vphi %v1273, %v2282
      %v1281 = vphi %v1271, %v2278
      %v1282 = vphi 0.0, %v2281
      %v1283 = vphi 0.0, %v2275
    $region28: #{tpu_custom_call.1} parent=1 // loop_header_branch
      %1278 = sbr.rel (%p1276) target = $region32
    $region29: #{tpu_custom_call.1} parent=1 // loop_body
      %s1284 = smul.u32 %s1275, 2
      %v1285 = vld [vmem:[#allocation3] sm:$0xff]
      %v1286 = vld [vmem:[#allocation3 + $0x8] sm:$0xff]
      %v1287 = vld [vmem:[#allocation3 + $0x10] sm:$0xff]
      %v1288 = vld [vmem:[#allocation3 + $0x18] sm:$0xff]
      %v1289 = vld [vmem:[#allocation3 + $0x20] sm:$0xff]
      %v1290 = vld [vmem:[#allocation3 + $0x28] sm:$0xff]
      %v1291 = vld [vmem:[#allocation3 + $0x30] sm:$0xff]
      %v1292 = vld [vmem:[#allocation3 + $0x38] sm:$0xff]
      %v1293 = vld [vmem:[#allocation3 + $0x40] sm:$0xff]
      %v1294 = vld [vmem:[#allocation3 + $0x48] sm:$0xff]
      %v1295 = vld [vmem:[#allocation3 + $0x50] sm:$0xff]
      %v1296 = vld [vmem:[#allocation3 + $0x58] sm:$0xff]
      %v1297 = vld [vmem:[#allocation3 + $0x60] sm:$0xff]
      %v1298 = vld [vmem:[#allocation3 + $0x68] sm:$0xff]
      %v1299 = vld [vmem:[#allocation3 + $0x70] sm:$0xff]
      %v1300 = vld [vmem:[#allocation3 + $0x78] sm:$0xff]
      %v1301 = vld [vmem:[#allocation3 + $0x80] sm:$0xff]
      %v1302 = vld [vmem:[#allocation3 + $0x88] sm:$0xff]
      %v1303 = vld [vmem:[#allocation3 + $0x90] sm:$0xff]
      %v1304 = vld [vmem:[#allocation3 + $0x98] sm:$0xff]
      %v1305 = vld [vmem:[#allocation3 + $0xa0] sm:$0xff]
      %v1306 = vld [vmem:[#allocation3 + $0xa8] sm:$0xff]
      %v1307 = vld [vmem:[#allocation3 + $0xb0] sm:$0xff]
      %v1308 = vld [vmem:[#allocation3 + $0xb8] sm:$0xff]
      %v1309 = vld [vmem:[#allocation3 + $0xc0] sm:$0xff]
      %v1310 = vld [vmem:[#allocation3 + $0xc8] sm:$0xff]
      %v1311 = vld [vmem:[#allocation3 + $0xd0] sm:$0xff]
      %v1312 = vld [vmem:[#allocation3 + $0xd8] sm:$0xff]
      %v1313 = vld [vmem:[#allocation3 + $0xe0] sm:$0xff]
      %v1314 = vld [vmem:[#allocation3 + $0xe8] sm:$0xff]
      %v1315 = vld [vmem:[#allocation3 + $0xf0] sm:$0xff]
      %v1316 = vld [vmem:[#allocation3 + $0xf8] sm:$0xff]
      %v1317 = vld [vmem:[#allocation3 + $0x100] sm:$0xff]
      %v1318 = vld [vmem:[#allocation3 + $0x108] sm:$0xff]
      %v1319 = vld [vmem:[#allocation3 + $0x110] sm:$0xff]
      %v1320 = vld [vmem:[#allocation3 + $0x118] sm:$0xff]
      %v1321 = vld [vmem:[#allocation3 + $0x120] sm:$0xff]
      %v1322 = vld [vmem:[#allocation3 + $0x128] sm:$0xff]
      %v1323 = vld [vmem:[#allocation3 + $0x130] sm:$0xff]
      %v1324 = vld [vmem:[#allocation3 + $0x138] sm:$0xff]
      %v1325 = vld [vmem:[#allocation3 + $0x140] sm:$0xff]
      %v1326 = vld [vmem:[#allocation3 + $0x148] sm:$0xff]
      %v1327 = vld [vmem:[#allocation3 + $0x150] sm:$0xff]
      %v1328 = vld [vmem:[#allocation3 + $0x158] sm:$0xff]
      %v1329 = vld [vmem:[#allocation3 + $0x160] sm:$0xff]
      %v1330 = vld [vmem:[#allocation3 + $0x168] sm:$0xff]
      %v1331 = vld [vmem:[#allocation3 + $0x170] sm:$0xff]
      %v1332 = vld [vmem:[#allocation3 + $0x178] sm:$0xff]
      %v1333 = vld [vmem:[#allocation3 + $0x180] sm:$0xff]
      %v1334 = vld [vmem:[#allocation3 + $0x188] sm:$0xff]
      %v1335 = vld [vmem:[#allocation3 + $0x190] sm:$0xff]
      %v1336 = vld [vmem:[#allocation3 + $0x198] sm:$0xff]
      %v1337 = vld [vmem:[#allocation3 + $0x1a0] sm:$0xff]
      %v1338 = vld [vmem:[#allocation3 + $0x1a8] sm:$0xff]
      %v1339 = vld [vmem:[#allocation3 + $0x1b0] sm:$0xff]
      %v1340 = vld [vmem:[#allocation3 + $0x1b8] sm:$0xff]
      %v1341 = vld [vmem:[#allocation3 + $0x1c0] sm:$0xff]
      %v1342 = vld [vmem:[#allocation3 + $0x1c8] sm:$0xff]
      %v1343 = vld [vmem:[#allocation3 + $0x1d0] sm:$0xff]
      %v1344 = vld [vmem:[#allocation3 + $0x1d8] sm:$0xff]
      %v1345 = vld [vmem:[#allocation3 + $0x1e0] sm:$0xff]
      %v1346 = vld [vmem:[#allocation3 + $0x1e8] sm:$0xff]
      %v1347 = vld [vmem:[#allocation3 + $0x1f0] sm:$0xff]
      %v1348 = vld [vmem:[#allocation3 + $0x1f8] sm:$0xff]
      %v1349 = vld [vmem:[#allocation3 + $0x200] sm:$0xff]
      %v1350 = vld [vmem:[#allocation3 + $0x208] sm:$0xff]
      %v1351 = vld [vmem:[#allocation3 + $0x210] sm:$0xff]
      %v1352 = vld [vmem:[#allocation3 + $0x218] sm:$0xff]
      %v1353 = vld [vmem:[#allocation3 + $0x220] sm:$0xff]
      %v1354 = vld [vmem:[#allocation3 + $0x228] sm:$0xff]
      %v1355 = vld [vmem:[#allocation3 + $0x230] sm:$0xff]
      %v1356 = vld [vmem:[#allocation3 + $0x238] sm:$0xff]
      %v1357 = vld [vmem:[#allocation3 + $0x240] sm:$0xff]
      %v1358 = vld [vmem:[#allocation3 + $0x248] sm:$0xff]
      %v1359 = vld [vmem:[#allocation3 + $0x250] sm:$0xff]
      %v1360 = vld [vmem:[#allocation3 + $0x258] sm:$0xff]
      %v1361 = vld [vmem:[#allocation3 + $0x260] sm:$0xff]
      %v1362 = vld [vmem:[#allocation3 + $0x268] sm:$0xff]
      %v1363 = vld [vmem:[#allocation3 + $0x270] sm:$0xff]
      %v1364 = vld [vmem:[#allocation3 + $0x278] sm:$0xff]
      %v1365 = vld [vmem:[#allocation3 + $0x280] sm:$0xff]
      %v1366 = vld [vmem:[#allocation3 + $0x288] sm:$0xff]
      %v1367 = vld [vmem:[#allocation3 + $0x290] sm:$0xff]
      %v1368 = vld [vmem:[#allocation3 + $0x298] sm:$0xff]
      %v1369 = vld [vmem:[#allocation3 + $0x2a0] sm:$0xff]
      %v1370 = vld [vmem:[#allocation3 + $0x2a8] sm:$0xff]
      %v1371 = vld [vmem:[#allocation3 + $0x2b0] sm:$0xff]
      %v1372 = vld [vmem:[#allocation3 + $0x2b8] sm:$0xff]
      %v1373 = vld [vmem:[#allocation3 + $0x2c0] sm:$0xff]
      %v1374 = vld [vmem:[#allocation3 + $0x2c8] sm:$0xff]
      %v1375 = vld [vmem:[#allocation3 + $0x2d0] sm:$0xff]
      %v1376 = vld [vmem:[#allocation3 + $0x2d8] sm:$0xff]
      %v1377 = vld [vmem:[#allocation3 + $0x2e0] sm:$0xff]
      %v1378 = vld [vmem:[#allocation3 + $0x2e8] sm:$0xff]
      %v1379 = vld [vmem:[#allocation3 + $0x2f0] sm:$0xff]
      %v1380 = vld [vmem:[#allocation3 + $0x2f8] sm:$0xff]
      %v1381 = vld [vmem:[#allocation3 + $0x300] sm:$0xff]
      %v1382 = vld [vmem:[#allocation3 + $0x308] sm:$0xff]
      %v1383 = vld [vmem:[#allocation3 + $0x310] sm:$0xff]
      %v1384 = vld [vmem:[#allocation3 + $0x318] sm:$0xff]
      %v1385 = vld [vmem:[#allocation3 + $0x320] sm:$0xff]
      %v1386 = vld [vmem:[#allocation3 + $0x328] sm:$0xff]
      %v1387 = vld [vmem:[#allocation3 + $0x330] sm:$0xff]
      %v1388 = vld [vmem:[#allocation3 + $0x338] sm:$0xff]
      %v1389 = vld [vmem:[#allocation3 + $0x340] sm:$0xff]
      %v1390 = vld [vmem:[#allocation3 + $0x348] sm:$0xff]
      %v1391 = vld [vmem:[#allocation3 + $0x350] sm:$0xff]
      %v1392 = vld [vmem:[#allocation3 + $0x358] sm:$0xff]
      %v1393 = vld [vmem:[#allocation3 + $0x360] sm:$0xff]
      %v1394 = vld [vmem:[#allocation3 + $0x368] sm:$0xff]
      %v1395 = vld [vmem:[#allocation3 + $0x370] sm:$0xff]
      %v1396 = vld [vmem:[#allocation3 + $0x378] sm:$0xff]
      %v1397 = vld [vmem:[#allocation3 + $0x380] sm:$0xff]
      %v1398 = vld [vmem:[#allocation3 + $0x388] sm:$0xff]
      %v1399 = vld [vmem:[#allocation3 + $0x390] sm:$0xff]
      %v1400 = vld [vmem:[#allocation3 + $0x398] sm:$0xff]
      %v1401 = vld [vmem:[#allocation3 + $0x3a0] sm:$0xff]
      %v1402 = vld [vmem:[#allocation3 + $0x3a8] sm:$0xff]
      %v1403 = vld [vmem:[#allocation3 + $0x3b0] sm:$0xff]
      %v1404 = vld [vmem:[#allocation3 + $0x3b8] sm:$0xff]
      %v1405 = vld [vmem:[#allocation3 + $0x3c0] sm:$0xff]
      %v1406 = vld [vmem:[#allocation3 + $0x3c8] sm:$0xff]
      %v1407 = vld [vmem:[#allocation3 + $0x3d0] sm:$0xff]
      %v1408 = vld [vmem:[#allocation3 + $0x3d8] sm:$0xff]
      %v1409 = vld [vmem:[#allocation3 + $0x3e0] sm:$0xff]
      %v1410 = vld [vmem:[#allocation3 + $0x3e8] sm:$0xff]
      %v1411 = vld [vmem:[#allocation3 + $0x3f0] sm:$0xff]
      %v1412 = vld [vmem:[#allocation3 + $0x3f8] sm:$0xff]
      %v1413 = vld [vmem:[#allocation3 + $0x400] sm:$0xff]
      %v1414 = vld [vmem:[#allocation3 + $0x408] sm:$0xff]
      %v1415 = vld [vmem:[#allocation3 + $0x410] sm:$0xff]
      %v1416 = vld [vmem:[#allocation3 + $0x418] sm:$0xff]
      %v1417 = vld [vmem:[#allocation3 + $0x420] sm:$0xff]
      %v1418 = vld [vmem:[#allocation3 + $0x428] sm:$0xff]
      %v1419 = vld [vmem:[#allocation3 + $0x430] sm:$0xff]
      %v1420 = vld [vmem:[#allocation3 + $0x438] sm:$0xff]
      %v1421 = vld [vmem:[#allocation3 + $0x440] sm:$0xff]
      %v1422 = vld [vmem:[#allocation3 + $0x448] sm:$0xff]
      %v1423 = vld [vmem:[#allocation3 + $0x450] sm:$0xff]
      %v1424 = vld [vmem:[#allocation3 + $0x458] sm:$0xff]
      %v1425 = vld [vmem:[#allocation3 + $0x460] sm:$0xff]
      %v1426 = vld [vmem:[#allocation3 + $0x468] sm:$0xff]
      %v1427 = vld [vmem:[#allocation3 + $0x470] sm:$0xff]
      %v1428 = vld [vmem:[#allocation3 + $0x478] sm:$0xff]
      %v1429 = vld [vmem:[#allocation3 + $0x480] sm:$0xff]
      %v1430 = vld [vmem:[#allocation3 + $0x488] sm:$0xff]
      %v1431 = vld [vmem:[#allocation3 + $0x490] sm:$0xff]
      %v1432 = vld [vmem:[#allocation3 + $0x498] sm:$0xff]
      %v1433 = vld [vmem:[#allocation3 + $0x4a0] sm:$0xff]
      %v1434 = vld [vmem:[#allocation3 + $0x4a8] sm:$0xff]
      %v1435 = vld [vmem:[#allocation3 + $0x4b0] sm:$0xff]
      %v1436 = vld [vmem:[#allocation3 + $0x4b8] sm:$0xff]
      %v1437 = vld [vmem:[#allocation3 + $0x4c0] sm:$0xff]
      %v1438 = vld [vmem:[#allocation3 + $0x4c8] sm:$0xff]
      %v1439 = vld [vmem:[#allocation3 + $0x4d0] sm:$0xff]
      %v1440 = vld [vmem:[#allocation3 + $0x4d8] sm:$0xff]
      %v1441 = vld [vmem:[#allocation3 + $0x4e0] sm:$0xff]
      %v1442 = vld [vmem:[#allocation3 + $0x4e8] sm:$0xff]
      %v1443 = vld [vmem:[#allocation3 + $0x4f0] sm:$0xff]
      %v1444 = vld [vmem:[#allocation3 + $0x4f8] sm:$0xff]
      %v1445 = vld [vmem:[#allocation3 + $0x500] sm:$0xff]
      %v1446 = vld [vmem:[#allocation3 + $0x508] sm:$0xff]
      %v1447 = vld [vmem:[#allocation3 + $0x510] sm:$0xff]
      %v1448 = vld [vmem:[#allocation3 + $0x518] sm:$0xff]
      %v1449 = vld [vmem:[#allocation3 + $0x520] sm:$0xff]
      %v1450 = vld [vmem:[#allocation3 + $0x528] sm:$0xff]
      %v1451 = vld [vmem:[#allocation3 + $0x530] sm:$0xff]
      %v1452 = vld [vmem:[#allocation3 + $0x538] sm:$0xff]
      %v1453 = vld [vmem:[#allocation3 + $0x540] sm:$0xff]
      %v1454 = vld [vmem:[#allocation3 + $0x548] sm:$0xff]
      %v1455 = vld [vmem:[#allocation3 + $0x550] sm:$0xff]
      %v1456 = vld [vmem:[#allocation3 + $0x558] sm:$0xff]
      %v1457 = vld [vmem:[#allocation3 + $0x560] sm:$0xff]
      %v1458 = vld [vmem:[#allocation3 + $0x568] sm:$0xff]
      %v1459 = vld [vmem:[#allocation3 + $0x570] sm:$0xff]
      %v1460 = vld [vmem:[#allocation3 + $0x578] sm:$0xff]
      %v1461 = vld [vmem:[#allocation3 + $0x580] sm:$0xff]
      %v1462 = vld [vmem:[#allocation3 + $0x588] sm:$0xff]
      %v1463 = vld [vmem:[#allocation3 + $0x590] sm:$0xff]
      %v1464 = vld [vmem:[#allocation3 + $0x598] sm:$0xff]
      %v1465 = vld [vmem:[#allocation3 + $0x5a0] sm:$0xff]
      %v1466 = vld [vmem:[#allocation3 + $0x5a8] sm:$0xff]
      %v1467 = vld [vmem:[#allocation3 + $0x5b0] sm:$0xff]
      %v1468 = vld [vmem:[#allocation3 + $0x5b8] sm:$0xff]
      %v1469 = vld [vmem:[#allocation3 + $0x5c0] sm:$0xff]
      %v1470 = vld [vmem:[#allocation3 + $0x5c8] sm:$0xff]
      %v1471 = vld [vmem:[#allocation3 + $0x5d0] sm:$0xff]
      %v1472 = vld [vmem:[#allocation3 + $0x5d8] sm:$0xff]
      %v1473 = vld [vmem:[#allocation3 + $0x5e0] sm:$0xff]
      %v1474 = vld [vmem:[#allocation3 + $0x5e8] sm:$0xff]
      %v1475 = vld [vmem:[#allocation3 + $0x5f0] sm:$0xff]
      %v1476 = vld [vmem:[#allocation3 + $0x5f8] sm:$0xff]
      %v1477 = vld [vmem:[#allocation3 + $0x600] sm:$0xff]
      %v1478 = vld [vmem:[#allocation3 + $0x608] sm:$0xff]
      %v1479 = vld [vmem:[#allocation3 + $0x610] sm:$0xff]
      %v1480 = vld [vmem:[#allocation3 + $0x618] sm:$0xff]
      %v1481 = vld [vmem:[#allocation3 + $0x620] sm:$0xff]
      %v1482 = vld [vmem:[#allocation3 + $0x628] sm:$0xff]
      %v1483 = vld [vmem:[#allocation3 + $0x630] sm:$0xff]
      %v1484 = vld [vmem:[#allocation3 + $0x638] sm:$0xff]
      %v1485 = vld [vmem:[#allocation3 + $0x640] sm:$0xff]
      %v1486 = vld [vmem:[#allocation3 + $0x648] sm:$0xff]
      %v1487 = vld [vmem:[#allocation3 + $0x650] sm:$0xff]
      %v1488 = vld [vmem:[#allocation3 + $0x658] sm:$0xff]
      %v1489 = vld [vmem:[#allocation3 + $0x660] sm:$0xff]
      %v1490 = vld [vmem:[#allocation3 + $0x668] sm:$0xff]
      %v1491 = vld [vmem:[#allocation3 + $0x670] sm:$0xff]
      %v1492 = vld [vmem:[#allocation3 + $0x678] sm:$0xff]
      %v1493 = vld [vmem:[#allocation3 + $0x680] sm:$0xff]
      %v1494 = vld [vmem:[#allocation3 + $0x688] sm:$0xff]
      %v1495 = vld [vmem:[#allocation3 + $0x690] sm:$0xff]
      %v1496 = vld [vmem:[#allocation3 + $0x698] sm:$0xff]
      %v1497 = vld [vmem:[#allocation3 + $0x6a0] sm:$0xff]
      %v1498 = vld [vmem:[#allocation3 + $0x6a8] sm:$0xff]
      %v1499 = vld [vmem:[#allocation3 + $0x6b0] sm:$0xff]
      %v1500 = vld [vmem:[#allocation3 + $0x6b8] sm:$0xff]
      %v1501 = vld [vmem:[#allocation3 + $0x6c0] sm:$0xff]
      %v1502 = vld [vmem:[#allocation3 + $0x6c8] sm:$0xff]
      %v1503 = vld [vmem:[#allocation3 + $0x6d0] sm:$0xff]
      %v1504 = vld [vmem:[#allocation3 + $0x6d8] sm:$0xff]
      %v1505 = vld [vmem:[#allocation3 + $0x6e0] sm:$0xff]
      %v1506 = vld [vmem:[#allocation3 + $0x6e8] sm:$0xff]
      %v1507 = vld [vmem:[#allocation3 + $0x6f0] sm:$0xff]
      %v1508 = vld [vmem:[#allocation3 + $0x6f8] sm:$0xff]
      %v1509 = vld [vmem:[#allocation3 + $0x700] sm:$0xff]
      %v1510 = vld [vmem:[#allocation3 + $0x708] sm:$0xff]
      %v1511 = vld [vmem:[#allocation3 + $0x710] sm:$0xff]
      %v1512 = vld [vmem:[#allocation3 + $0x718] sm:$0xff]
      %v1513 = vld [vmem:[#allocation3 + $0x720] sm:$0xff]
      %v1514 = vld [vmem:[#allocation3 + $0x728] sm:$0xff]
      %v1515 = vld [vmem:[#allocation3 + $0x730] sm:$0xff]
      %v1516 = vld [vmem:[#allocation3 + $0x738] sm:$0xff]
      %v1517 = vld [vmem:[#allocation3 + $0x740] sm:$0xff]
      %v1518 = vld [vmem:[#allocation3 + $0x748] sm:$0xff]
      %v1519 = vld [vmem:[#allocation3 + $0x750] sm:$0xff]
      %v1520 = vld [vmem:[#allocation3 + $0x758] sm:$0xff]
      %v1521 = vld [vmem:[#allocation3 + $0x760] sm:$0xff]
      %v1522 = vld [vmem:[#allocation3 + $0x768] sm:$0xff]
      %v1523 = vld [vmem:[#allocation3 + $0x770] sm:$0xff]
      %v1524 = vld [vmem:[#allocation3 + $0x778] sm:$0xff]
      %v1525 = vld [vmem:[#allocation3 + $0x780] sm:$0xff]
      %v1526 = vld [vmem:[#allocation3 + $0x788] sm:$0xff]
      %v1527 = vld [vmem:[#allocation3 + $0x790] sm:$0xff]
      %v1528 = vld [vmem:[#allocation3 + $0x798] sm:$0xff]
      %v1529 = vld [vmem:[#allocation3 + $0x7a0] sm:$0xff]
      %v1530 = vld [vmem:[#allocation3 + $0x7a8] sm:$0xff]
      %v1531 = vld [vmem:[#allocation3 + $0x7b0] sm:$0xff]
      %v1532 = vld [vmem:[#allocation3 + $0x7b8] sm:$0xff]
      %v1533 = vld [vmem:[#allocation3 + $0x7c0] sm:$0xff]
      %v1534 = vld [vmem:[#allocation3 + $0x7c8] sm:$0xff]
      %v1535 = vld [vmem:[#allocation3 + $0x7d0] sm:$0xff]
      %v1536 = vld [vmem:[#allocation3 + $0x7d8] sm:$0xff]
      %v1537 = vld [vmem:[#allocation3 + $0x7e0] sm:$0xff]
      %v1538 = vld [vmem:[#allocation3 + $0x7e8] sm:$0xff]
      %v1539 = vld [vmem:[#allocation3 + $0x7f0] sm:$0xff]
      %v1540 = vld [vmem:[#allocation3 + $0x7f8] sm:$0xff]
      %s1541 = sadd.s32 %s1284, 1
      %s1542 = smul.u32 %s1541, 8
      %s1543 = sshra.s32 %s1542, 3
      %s1544 = sand.u32 %s1542, 7
      %s1545 = smul.u32 %s1543, 8
      %s1546 = smul.addr %s1545, 8
      %s1547 = scalar_lea.vmem [#allocation2], %s1546
      %v1548 = vld [vmem:[%s1547] sm:$0xff]
      %v1549 = vld [vmem:[%s1547 + $0x8] sm:$0xff]
      %v1550 = vld [vmem:[%s1547 + $0x10] sm:$0xff]
      %v1551 = vld [vmem:[%s1547 + $0x18] sm:$0xff]
      %v1552 = vld [vmem:[%s1547 + $0x20] sm:$0xff]
      %v1553 = vld [vmem:[%s1547 + $0x28] sm:$0xff]
      %v1554 = vld [vmem:[%s1547 + $0x30] sm:$0xff]
      %v1555 = vld [vmem:[%s1547 + $0x38] sm:$0xff]
      %1556 = vmatpush.msra.mxu0 %v1405
      %1557 = vmatpush.msra.mxu0 %v1397
      %1558 = vmatpush.msra.mxu0 %v1389
      %1559 = vmatpush.msra.mxu0 %v1381
      %1560 = vmatpush.msra.mxu0 %v1373
      %1561 = vmatpush.msra.mxu0 %v1365
      %1562 = vmatpush.msra.mxu0 %v1357
      %1563 = vmatpush.msra.mxu0 %v1349
      %1564 = vmatpush.msra.mxu0 %v1341
      %1565 = vmatpush.msra.mxu0 %v1333
      %1566 = vmatpush.msra.mxu0 %v1325
      %1567 = vmatpush.msra.mxu0 %v1317
      %1568 = vmatpush.msra.mxu0 %v1309
      %1569 = vmatpush.msra.mxu0 %v1301
      %1570 = vmatpush.msra.mxu0 %v1293
      %1571 = vmatpush.msra.mxu0 %v1285
      %1572 = vmatmul.f32.gmra.mxu0 %v1280
      %v1573 = vpop.f32.mrf.mxu0
      %v1574 = vadd.f32 %v1548, %v1573
      %1575 = vdwg.mxu0
      %1576 = vmatpush.msra.mxu0 %v1533
      %1577 = vmatpush.msra.mxu0 %v1525
      %1578 = vmatpush.msra.mxu0 %v1517
      %1579 = vmatpush.msra.mxu0 %v1509
      %1580 = vmatpush.msra.mxu0 %v1501
      %1581 = vmatpush.msra.mxu0 %v1493
      %1582 = vmatpush.msra.mxu0 %v1485
      %1583 = vmatpush.msra.mxu0 %v1477
      %1584 = vmatpush.msra.mxu0 %v1469
      %1585 = vmatpush.msra.mxu0 %v1461
      %1586 = vmatpush.msra.mxu0 %v1453
      %1587 = vmatpush.msra.mxu0 %v1445
      %1588 = vmatpush.msra.mxu0 %v1437
      %1589 = vmatpush.msra.mxu0 %v1429
      %1590 = vmatpush.msra.mxu0 %v1421
      %1591 = vmatpush.msra.mxu0 %v1413
      %1592 = vmatmul.f32.gmra.mxu0 %v1282
      %v1593 = vpop.f32.mrf.mxu0
      %v1594 = vadd.f32 %v1574, %v1593
      %1595 = vdwg.mxu0
      %1596 = vmatpush.msra.mxu0 %v1406
      %1597 = vmatpush.msra.mxu0 %v1398
      %1598 = vmatpush.msra.mxu0 %v1390
      %1599 = vmatpush.msra.mxu0 %v1382
      %1600 = vmatpush.msra.mxu0 %v1374
      %1601 = vmatpush.msra.mxu0 %v1366
      %1602 = vmatpush.msra.mxu0 %v1358
      %1603 = vmatpush.msra.mxu0 %v1350
      %1604 = vmatpush.msra.mxu0 %v1342
      %1605 = vmatpush.msra.mxu0 %v1334
      %1606 = vmatpush.msra.mxu0 %v1326
      %1607 = vmatpush.msra.mxu0 %v1318
      %1608 = vmatpush.msra.mxu0 %v1310
      %1609 = vmatpush.msra.mxu0 %v1302
      %1610 = vmatpush.msra.mxu0 %v1294
      %1611 = vmatpush.msra.mxu0 %v1286
      %1612 = vmatmul.f32.gmra.mxu0 %v1280
      %v1613 = vpop.f32.mrf.mxu0
      %v1614 = vadd.f32 %v1549, %v1613
      %1615 = vdwg.mxu0
      %1616 = vmatpush.msra.mxu0 %v1534
      %1617 = vmatpush.msra.mxu0 %v1526
      %1618 = vmatpush.msra.mxu0 %v1518
      %1619 = vmatpush.msra.mxu0 %v1510
      %1620 = vmatpush.msra.mxu0 %v1502
      %1621 = vmatpush.msra.mxu0 %v1494
      %1622 = vmatpush.msra.mxu0 %v1486
      %1623 = vmatpush.msra.mxu0 %v1478
      %1624 = vmatpush.msra.mxu0 %v1470
      %1625 = vmatpush.msra.mxu0 %v1462
      %1626 = vmatpush.msra.mxu0 %v1454
      %1627 = vmatpush.msra.mxu0 %v1446
      %1628 = vmatpush.msra.mxu0 %v1438
      %1629 = vmatpush.msra.mxu0 %v1430
      %1630 = vmatpush.msra.mxu0 %v1422
      %1631 = vmatpush.msra.mxu0 %v1414
      %1632 = vmatmul.f32.gmra.mxu0 %v1282
      %v1633 = vpop.f32.mrf.mxu0
      %v1634 = vadd.f32 %v1614, %v1633
      %1635 = vdwg.mxu0
      %1636 = vmatpush.msra.mxu0 %v1407
      %1637 = vmatpush.msra.mxu0 %v1399
      %1638 = vmatpush.msra.mxu0 %v1391
      %1639 = vmatpush.msra.mxu0 %v1383
      %1640 = vmatpush.msra.mxu0 %v1375
      %1641 = vmatpush.msra.mxu0 %v1367
      %1642 = vmatpush.msra.mxu0 %v1359
      %1643 = vmatpush.msra.mxu0 %v1351
      %1644 = vmatpush.msra.mxu0 %v1343
      %1645 = vmatpush.msra.mxu0 %v1335
      %1646 = vmatpush.msra.mxu0 %v1327
      %1647 = vmatpush.msra.mxu0 %v1319
      %1648 = vmatpush.msra.mxu0 %v1311
      %1649 = vmatpush.msra.mxu0 %v1303
      %1650 = vmatpush.msra.mxu0 %v1295
      %1651 = vmatpush.msra.mxu0 %v1287
      %1652 = vmatmul.f32.gmra.mxu0 %v1280
      %v1653 = vpop.f32.mrf.mxu0
      %v1654 = vadd.f32 %v1550, %v1653
      %1655 = vdwg.mxu0
      %1656 = vmatpush.msra.mxu0 %v1535
      %1657 = vmatpush.msra.mxu0 %v1527
      %1658 = vmatpush.msra.mxu0 %v1519
      %1659 = vmatpush.msra.mxu0 %v1511
      %1660 = vmatpush.msra.mxu0 %v1503
      %1661 = vmatpush.msra.mxu0 %v1495
      %1662 = vmatpush.msra.mxu0 %v1487
      %1663 = vmatpush.msra.mxu0 %v1479
      %1664 = vmatpush.msra.mxu0 %v1471
      %1665 = vmatpush.msra.mxu0 %v1463
      %1666 = vmatpush.msra.mxu0 %v1455
      %1667 = vmatpush.msra.mxu0 %v1447
      %1668 = vmatpush.msra.mxu0 %v1439
      %1669 = vmatpush.msra.mxu0 %v1431
      %1670 = vmatpush.msra.mxu0 %v1423
      %1671 = vmatpush.msra.mxu0 %v1415
      %1672 = vmatmul.f32.gmra.mxu0 %v1282
      %v1673 = vpop.f32.mrf.mxu0
      %v1674 = vadd.f32 %v1654, %v1673
      %1675 = vdwg.mxu0
      %1676 = vmatpush.msra.mxu0 %v1408
      %1677 = vmatpush.msra.mxu0 %v1400
      %1678 = vmatpush.msra.mxu0 %v1392
      %1679 = vmatpush.msra.mxu0 %v1384
      %1680 = vmatpush.msra.mxu0 %v1376
      %1681 = vmatpush.msra.mxu0 %v1368
      %1682 = vmatpush.msra.mxu0 %v1360
      %1683 = vmatpush.msra.mxu0 %v1352
      %1684 = vmatpush.msra.mxu0 %v1344
      %1685 = vmatpush.msra.mxu0 %v1336
      %1686 = vmatpush.msra.mxu0 %v1328
      %1687 = vmatpush.msra.mxu0 %v1320
      %1688 = vmatpush.msra.mxu0 %v1312
      %1689 = vmatpush.msra.mxu0 %v1304
      %1690 = vmatpush.msra.mxu0 %v1296
      %1691 = vmatpush.msra.mxu0 %v1288
      %1692 = vmatmul.f32.gmra.mxu0 %v1280
      %v1693 = vpop.f32.mrf.mxu0
      %v1694 = vadd.f32 %v1551, %v1693
      %1695 = vdwg.mxu0
      %1696 = vmatpush.msra.mxu0 %v1536
      %1697 = vmatpush.msra.mxu0 %v1528
      %1698 = vmatpush.msra.mxu0 %v1520
      %1699 = vmatpush.msra.mxu0 %v1512
      %1700 = vmatpush.msra.mxu0 %v1504
      %1701 = vmatpush.msra.mxu0 %v1496
      %1702 = vmatpush.msra.mxu0 %v1488
      %1703 = vmatpush.msra.mxu0 %v1480
      %1704 = vmatpush.msra.mxu0 %v1472
      %1705 = vmatpush.msra.mxu0 %v1464
      %1706 = vmatpush.msra.mxu0 %v1456
      %1707 = vmatpush.msra.mxu0 %v1448
      %1708 = vmatpush.msra.mxu0 %v1440
      %1709 = vmatpush.msra.mxu0 %v1432
      %1710 = vmatpush.msra.mxu0 %v1424
      %1711 = vmatpush.msra.mxu0 %v1416
      %1712 = vmatmul.f32.gmra.mxu0 %v1282
      %v1713 = vpop.f32.mrf.mxu0
      %v1714 = vadd.f32 %v1694, %v1713
      %1715 = vdwg.mxu0
      %1716 = vmatpush.msra.mxu0 %v1409
      %1717 = vmatpush.msra.mxu0 %v1401
      %1718 = vmatpush.msra.mxu0 %v1393
      %1719 = vmatpush.msra.mxu0 %v1385
      %1720 = vmatpush.msra.mxu0 %v1377
      %1721 = vmatpush.msra.mxu0 %v1369
      %1722 = vmatpush.msra.mxu0 %v1361
      %1723 = vmatpush.msra.mxu0 %v1353
      %1724 = vmatpush.msra.mxu0 %v1345
      %1725 = vmatpush.msra.mxu0 %v1337
      %1726 = vmatpush.msra.mxu0 %v1329
      %1727 = vmatpush.msra.mxu0 %v1321
      %1728 = vmatpush.msra.mxu0 %v1313
      %1729 = vmatpush.msra.mxu0 %v1305
      %1730 = vmatpush.msra.mxu0 %v1297
      %1731 = vmatpush.msra.mxu0 %v1289
      %1732 = vmatmul.f32.gmra.mxu0 %v1280
      %v1733 = vpop.f32.mrf.mxu0
      %v1734 = vadd.f32 %v1552, %v1733
      %1735 = vdwg.mxu0
      %1736 = vmatpush.msra.mxu0 %v1537
      %1737 = vmatpush.msra.mxu0 %v1529
      %1738 = vmatpush.msra.mxu0 %v1521
      %1739 = vmatpush.msra.mxu0 %v1513
      %1740 = vmatpush.msra.mxu0 %v1505
      %1741 = vmatpush.msra.mxu0 %v1497
      %1742 = vmatpush.msra.mxu0 %v1489
      %1743 = vmatpush.msra.mxu0 %v1481
      %1744 = vmatpush.msra.mxu0 %v1473
      %1745 = vmatpush.msra.mxu0 %v1465
      %1746 = vmatpush.msra.mxu0 %v1457
      %1747 = vmatpush.msra.mxu0 %v1449
      %1748 = vmatpush.msra.mxu0 %v1441
      %1749 = vmatpush.msra.mxu0 %v1433
      %1750 = vmatpush.msra.mxu0 %v1425
      %1751 = vmatpush.msra.mxu0 %v1417
      %1752 = vmatmul.f32.gmra.mxu0 %v1282
      %v1753 = vpop.f32.mrf.mxu0
      %v1754 = vadd.f32 %v1734, %v1753
      %1755 = vdwg.mxu0
      %1756 = vmatpush.msra.mxu0 %v1410
      %1757 = vmatpush.msra.mxu0 %v1402
      %1758 = vmatpush.msra.mxu0 %v1394
      %1759 = vmatpush.msra.mxu0 %v1386
      %1760 = vmatpush.msra.mxu0 %v1378
      %1761 = vmatpush.msra.mxu0 %v1370
      %1762 = vmatpush.msra.mxu0 %v1362
      %1763 = vmatpush.msra.mxu0 %v1354
      %1764 = vmatpush.msra.mxu0 %v1346
      %1765 = vmatpush.msra.mxu0 %v1338
      %1766 = vmatpush.msra.mxu0 %v1330
      %1767 = vmatpush.msra.mxu0 %v1322
      %1768 = vmatpush.msra.mxu0 %v1314
      %1769 = vmatpush.msra.mxu0 %v1306
      %1770 = vmatpush.msra.mxu0 %v1298
      %1771 = vmatpush.msra.mxu0 %v1290
      %1772 = vmatmul.f32.gmra.mxu0 %v1280
      %v1773 = vpop.f32.mrf.mxu0
      %v1774 = vadd.f32 %v1553, %v1773
      %1775 = vdwg.mxu0
      %1776 = vmatpush.msra.mxu0 %v1538
      %1777 = vmatpush.msra.mxu0 %v1530
      %1778 = vmatpush.msra.mxu0 %v1522
      %1779 = vmatpush.msra.mxu0 %v1514
      %1780 = vmatpush.msra.mxu0 %v1506
      %1781 = vmatpush.msra.mxu0 %v1498
      %1782 = vmatpush.msra.mxu0 %v1490
      %1783 = vmatpush.msra.mxu0 %v1482
      %1784 = vmatpush.msra.mxu0 %v1474
      %1785 = vmatpush.msra.mxu0 %v1466
      %1786 = vmatpush.msra.mxu0 %v1458
      %1787 = vmatpush.msra.mxu0 %v1450
      %1788 = vmatpush.msra.mxu0 %v1442
      %1789 = vmatpush.msra.mxu0 %v1434
      %1790 = vmatpush.msra.mxu0 %v1426
      %1791 = vmatpush.msra.mxu0 %v1418
      %1792 = vmatmul.f32.gmra.mxu0 %v1282
      %v1793 = vpop.f32.mrf.mxu0
      %v1794 = vadd.f32 %v1774, %v1793
      %1795 = vdwg.mxu0
      %1796 = vmatpush.msra.mxu0 %v1411
      %1797 = vmatpush.msra.mxu0 %v1403
      %1798 = vmatpush.msra.mxu0 %v1395
      %1799 = vmatpush.msra.mxu0 %v1387
      %1800 = vmatpush.msra.mxu0 %v1379
      %1801 = vmatpush.msra.mxu0 %v1371
      %1802 = vmatpush.msra.mxu0 %v1363
      %1803 = vmatpush.msra.mxu0 %v1355
      %1804 = vmatpush.msra.mxu0 %v1347
      %1805 = vmatpush.msra.mxu0 %v1339
      %1806 = vmatpush.msra.mxu0 %v1331
      %1807 = vmatpush.msra.mxu0 %v1323
      %1808 = vmatpush.msra.mxu0 %v1315
      %1809 = vmatpush.msra.mxu0 %v1307
      %1810 = vmatpush.msra.mxu0 %v1299
      %1811 = vmatpush.msra.mxu0 %v1291
      %1812 = vmatmul.f32.gmra.mxu0 %v1280
      %v1813 = vpop.f32.mrf.mxu0
      %v1814 = vadd.f32 %v1554, %v1813
      %1815 = vdwg.mxu0
      %1816 = vmatpush.msra.mxu0 %v1539
      %1817 = vmatpush.msra.mxu0 %v1531
      %1818 = vmatpush.msra.mxu0 %v1523
      %1819 = vmatpush.msra.mxu0 %v1515
      %1820 = vmatpush.msra.mxu0 %v1507
      %1821 = vmatpush.msra.mxu0 %v1499
      %1822 = vmatpush.msra.mxu0 %v1491
      %1823 = vmatpush.msra.mxu0 %v1483
      %1824 = vmatpush.msra.mxu0 %v1475
      %1825 = vmatpush.msra.mxu0 %v1467
      %1826 = vmatpush.msra.mxu0 %v1459
      %1827 = vmatpush.msra.mxu0 %v1451
      %1828 = vmatpush.msra.mxu0 %v1443
      %1829 = vmatpush.msra.mxu0 %v1435
      %1830 = vmatpush.msra.mxu0 %v1427
      %1831 = vmatpush.msra.mxu0 %v1419
      %1832 = vmatmul.f32.gmra.mxu0 %v1282
      %v1833 = vpop.f32.mrf.mxu0
      %v1834 = vadd.f32 %v1814, %v1833
      %1835 = vdwg.mxu0
      %1836 = vmatpush.msra.mxu0 %v1412
      %1837 = vmatpush.msra.mxu0 %v1404
      %1838 = vmatpush.msra.mxu0 %v1396
      %1839 = vmatpush.msra.mxu0 %v1388
      %1840 = vmatpush.msra.mxu0 %v1380
      %1841 = vmatpush.msra.mxu0 %v1372
      %1842 = vmatpush.msra.mxu0 %v1364
      %1843 = vmatpush.msra.mxu0 %v1356
      %1844 = vmatpush.msra.mxu0 %v1348
      %1845 = vmatpush.msra.mxu0 %v1340
      %1846 = vmatpush.msra.mxu0 %v1332
      %1847 = vmatpush.msra.mxu0 %v1324
      %1848 = vmatpush.msra.mxu0 %v1316
      %1849 = vmatpush.msra.mxu0 %v1308
      %1850 = vmatpush.msra.mxu0 %v1300
      %1851 = vmatpush.msra.mxu0 %v1292
      %1852 = vmatmul.f32.gmra.mxu0 %v1280
      %v1853 = vpop.f32.mrf.mxu0
      %v1854 = vadd.f32 %v1555, %v1853
      %1855 = vdwg.mxu0
      %1856 = vmatpush.msra.mxu0 %v1540
      %1857 = vmatpush.msra.mxu0 %v1532
      %1858 = vmatpush.msra.mxu0 %v1524
      %1859 = vmatpush.msra.mxu0 %v1516
      %1860 = vmatpush.msra.mxu0 %v1508
      %1861 = vmatpush.msra.mxu0 %v1500
      %1862 = vmatpush.msra.mxu0 %v1492
      %1863 = vmatpush.msra.mxu0 %v1484
      %1864 = vmatpush.msra.mxu0 %v1476
      %1865 = vmatpush.msra.mxu0 %v1468
      %1866 = vmatpush.msra.mxu0 %v1460
      %1867 = vmatpush.msra.mxu0 %v1452
      %1868 = vmatpush.msra.mxu0 %v1444
      %1869 = vmatpush.msra.mxu0 %v1436
      %1870 = vmatpush.msra.mxu0 %v1428
      %1871 = vmatpush.msra.mxu0 %v1420
      %1872 = vmatmul.f32.gmra.mxu0 %v1282
      %v1873 = vpop.f32.mrf.mxu0
      %v1874 = vadd.f32 %v1854, %v1873
      %1875 = vdwg.mxu0
      %v1876 = vmul.f32 %v1594, 0.5
      %v1877 = vmul.f32 %v1634, 0.5
      %v1878 = vmul.f32 %v1674, 0.5
      %v1879 = vmul.f32 %v1714, 0.5
      %v1880 = vmul.f32 %v1754, 0.5
      %v1881 = vmul.f32 %v1794, 0.5
      %v1882 = vtanh.pop %v1876
      %v1883 = vtanh.pop %v1877
      %v1884 = vtanh.pop %v1878
      %v1885 = vtanh.pop %v1879
      %v1886 = vtanh.pop %v1880
      %v1887 = vtanh.pop %v1881
      %v1888 = vmul.f32 %v1882, 0.5
      %v1889 = vmul.f32 %v1883, 0.5
      %v1890 = vmul.f32 %v1884, 0.5
      %v1891 = vmul.f32 %v1885, 0.5
      %v1892 = vmul.f32 %v1886, 0.5
      %v1893 = vmul.f32 %v1887, 0.5
      %v1894 = vadd.f32 %v1888, 0.5
      %v1895 = vadd.f32 %v1889, 0.5
      %v1896 = vadd.f32 %v1890, 0.5
      %v1897 = vadd.f32 %v1891, 0.5
      %v1898 = vadd.f32 %v1892, 0.5
      %v1899 = vadd.f32 %v1893, 0.5
      %v1900 = vtanh.pop %v1834
      %v1901 = vtanh.pop %v1874
      %v1902 = vmul.f32 %v1895, %v1283
      %v1903 = vmul.f32 %v1894, %v1900
      %v1904 = vadd.f32 %v1902, %v1903
      %v1905 = vmul.f32 %v1898, %v1281
      %v1906 = vmul.f32 %v1897, %v1901
      %v1907 = vadd.f32 %v1905, %v1906
      %v1908 = vtanh.pop %v1904
      %v1909 = vtanh.pop %v1907
      %v1910 = vmul.f32 %v1896, %v1908
      %v1911 = vmul.f32 %v1899, %v1909
      %s1912 = sadd.s32 %s1284, 2
      %s1913 = smul.u32 %s1912, 8
      %s1914 = sshra.s32 %s1913, 3
      %s1915 = sand.u32 %s1913, 7
      %s1916 = smul.u32 %s1914, 8
      %s1917 = smul.addr %s1916, 8
      %s1918 = scalar_lea.vmem [#allocation2], %s1917
      %v1919 = vld [vmem:[%s1918] sm:$0xff]
      %v1920 = vld [vmem:[%s1918 + $0x8] sm:$0xff]
      %v1921 = vld [vmem:[%s1918 + $0x10] sm:$0xff]
      %v1922 = vld [vmem:[%s1918 + $0x18] sm:$0xff]
      %v1923 = vld [vmem:[%s1918 + $0x20] sm:$0xff]
      %v1924 = vld [vmem:[%s1918 + $0x28] sm:$0xff]
      %v1925 = vld [vmem:[%s1918 + $0x30] sm:$0xff]
      %v1926 = vld [vmem:[%s1918 + $0x38] sm:$0xff]
      %1927 = vmatpush.msra.mxu0 %v1405
      %1928 = vmatpush.msra.mxu0 %v1397
      %1929 = vmatpush.msra.mxu0 %v1389
      %1930 = vmatpush.msra.mxu0 %v1381
      %1931 = vmatpush.msra.mxu0 %v1373
      %1932 = vmatpush.msra.mxu0 %v1365
      %1933 = vmatpush.msra.mxu0 %v1357
      %1934 = vmatpush.msra.mxu0 %v1349
      %1935 = vmatpush.msra.mxu0 %v1341
      %1936 = vmatpush.msra.mxu0 %v1333
      %1937 = vmatpush.msra.mxu0 %v1325
      %1938 = vmatpush.msra.mxu0 %v1317
      %1939 = vmatpush.msra.mxu0 %v1309
      %1940 = vmatpush.msra.mxu0 %v1301
      %1941 = vmatpush.msra.mxu0 %v1293
      %1942 = vmatpush.msra.mxu0 %v1285
      %1943 = vmatmul.f32.gmra.mxu0 %v1911
      %v1944 = vpop.f32.mrf.mxu0
      %v1945 = vadd.f32 %v1919, %v1944
      %1946 = vdwg.mxu0
      %1947 = vmatpush.msra.mxu0 %v1533
      %1948 = vmatpush.msra.mxu0 %v1525
      %1949 = vmatpush.msra.mxu0 %v1517
      %1950 = vmatpush.msra.mxu0 %v1509
      %1951 = vmatpush.msra.mxu0 %v1501
      %1952 = vmatpush.msra.mxu0 %v1493
      %1953 = vmatpush.msra.mxu0 %v1485
      %1954 = vmatpush.msra.mxu0 %v1477
      %1955 = vmatpush.msra.mxu0 %v1469
      %1956 = vmatpush.msra.mxu0 %v1461
      %1957 = vmatpush.msra.mxu0 %v1453
      %1958 = vmatpush.msra.mxu0 %v1445
      %1959 = vmatpush.msra.mxu0 %v1437
      %1960 = vmatpush.msra.mxu0 %v1429
      %1961 = vmatpush.msra.mxu0 %v1421
      %1962 = vmatpush.msra.mxu0 %v1413
      %1963 = vmatmul.f32.gmra.mxu0 %v1910
      %v1964 = vpop.f32.mrf.mxu0
      %v1965 = vadd.f32 %v1945, %v1964
      %1966 = vdwg.mxu0
      %1967 = vmatpush.msra.mxu0 %v1406
      %1968 = vmatpush.msra.mxu0 %v1398
      %1969 = vmatpush.msra.mxu0 %v1390
      %1970 = vmatpush.msra.mxu0 %v1382
      %1971 = vmatpush.msra.mxu0 %v1374
      %1972 = vmatpush.msra.mxu0 %v1366
      %1973 = vmatpush.msra.mxu0 %v1358
      %1974 = vmatpush.msra.mxu0 %v1350
      %1975 = vmatpush.msra.mxu0 %v1342
      %1976 = vmatpush.msra.mxu0 %v1334
      %1977 = vmatpush.msra.mxu0 %v1326
      %1978 = vmatpush.msra.mxu0 %v1318
      %1979 = vmatpush.msra.mxu0 %v1310
      %1980 = vmatpush.msra.mxu0 %v1302
      %1981 = vmatpush.msra.mxu0 %v1294
      %1982 = vmatpush.msra.mxu0 %v1286
      %1983 = vmatmul.f32.gmra.mxu0 %v1911
      %v1984 = vpop.f32.mrf.mxu0
      %v1985 = vadd.f32 %v1920, %v1984
      %1986 = vdwg.mxu0
      %1987 = vmatpush.msra.mxu0 %v1534
      %1988 = vmatpush.msra.mxu0 %v1526
      %1989 = vmatpush.msra.mxu0 %v1518
      %1990 = vmatpush.msra.mxu0 %v1510
      %1991 = vmatpush.msra.mxu0 %v1502
      %1992 = vmatpush.msra.mxu0 %v1494
      %1993 = vmatpush.msra.mxu0 %v1486
      %1994 = vmatpush.msra.mxu0 %v1478
      %1995 = vmatpush.msra.mxu0 %v1470
      %1996 = vmatpush.msra.mxu0 %v1462
      %1997 = vmatpush.msra.mxu0 %v1454
      %1998 = vmatpush.msra.mxu0 %v1446
      %1999 = vmatpush.msra.mxu0 %v1438
      %2000 = vmatpush.msra.mxu0 %v1430
      %2001 = vmatpush.msra.mxu0 %v1422
      %2002 = vmatpush.msra.mxu0 %v1414
      %2003 = vmatmul.f32.gmra.mxu0 %v1910
      %v2004 = vpop.f32.mrf.mxu0
      %v2005 = vadd.f32 %v1985, %v2004
      %2006 = vdwg.mxu0
      %2007 = vmatpush.msra.mxu0 %v1407
      %2008 = vmatpush.msra.mxu0 %v1399
      %2009 = vmatpush.msra.mxu0 %v1391
      %2010 = vmatpush.msra.mxu0 %v1383
      %2011 = vmatpush.msra.mxu0 %v1375
      %2012 = vmatpush.msra.mxu0 %v1367
      %2013 = vmatpush.msra.mxu0 %v1359
      %2014 = vmatpush.msra.mxu0 %v1351
      %2015 = vmatpush.msra.mxu0 %v1343
      %2016 = vmatpush.msra.mxu0 %v1335
      %2017 = vmatpush.msra.mxu0 %v1327
      %2018 = vmatpush.msra.mxu0 %v1319
      %2019 = vmatpush.msra.mxu0 %v1311
      %2020 = vmatpush.msra.mxu0 %v1303
      %2021 = vmatpush.msra.mxu0 %v1295
      %2022 = vmatpush.msra.mxu0 %v1287
      %2023 = vmatmul.f32.gmra.mxu0 %v1911
      %v2024 = vpop.f32.mrf.mxu0
      %v2025 = vadd.f32 %v1921, %v2024
      %2026 = vdwg.mxu0
      %2027 = vmatpush.msra.mxu0 %v1535
      %2028 = vmatpush.msra.mxu0 %v1527
      %2029 = vmatpush.msra.mxu0 %v1519
      %2030 = vmatpush.msra.mxu0 %v1511
      %2031 = vmatpush.msra.mxu0 %v1503
      %2032 = vmatpush.msra.mxu0 %v1495
      %2033 = vmatpush.msra.mxu0 %v1487
      %2034 = vmatpush.msra.mxu0 %v1479
      %2035 = vmatpush.msra.mxu0 %v1471
      %2036 = vmatpush.msra.mxu0 %v1463
      %2037 = vmatpush.msra.mxu0 %v1455
      %2038 = vmatpush.msra.mxu0 %v1447
      %2039 = vmatpush.msra.mxu0 %v1439
      %2040 = vmatpush.msra.mxu0 %v1431
      %2041 = vmatpush.msra.mxu0 %v1423
      %2042 = vmatpush.msra.mxu0 %v1415
      %2043 = vmatmul.f32.gmra.mxu0 %v1910
      %v2044 = vpop.f32.mrf.mxu0
      %v2045 = vadd.f32 %v2025, %v2044
      %2046 = vdwg.mxu0
      %2047 = vmatpush.msra.mxu0 %v1408
      %2048 = vmatpush.msra.mxu0 %v1400
      %2049 = vmatpush.msra.mxu0 %v1392
      %2050 = vmatpush.msra.mxu0 %v1384
      %2051 = vmatpush.msra.mxu0 %v1376
      %2052 = vmatpush.msra.mxu0 %v1368
      %2053 = vmatpush.msra.mxu0 %v1360
      %2054 = vmatpush.msra.mxu0 %v1352
      %2055 = vmatpush.msra.mxu0 %v1344
      %2056 = vmatpush.msra.mxu0 %v1336
      %2057 = vmatpush.msra.mxu0 %v1328
      %2058 = vmatpush.msra.mxu0 %v1320
      %2059 = vmatpush.msra.mxu0 %v1312
      %2060 = vmatpush.msra.mxu0 %v1304
      %2061 = vmatpush.msra.mxu0 %v1296
      %2062 = vmatpush.msra.mxu0 %v1288
      %2063 = vmatmul.f32.gmra.mxu0 %v1911
      %v2064 = vpop.f32.mrf.mxu0
      %v2065 = vadd.f32 %v1922, %v2064
      %2066 = vdwg.mxu0
      %2067 = vmatpush.msra.mxu0 %v1536
      %2068 = vmatpush.msra.mxu0 %v1528
      %2069 = vmatpush.msra.mxu0 %v1520
      %2070 = vmatpush.msra.mxu0 %v1512
      %2071 = vmatpush.msra.mxu0 %v1504
      %2072 = vmatpush.msra.mxu0 %v1496
      %2073 = vmatpush.msra.mxu0 %v1488
      %2074 = vmatpush.msra.mxu0 %v1480
      %2075 = vmatpush.msra.mxu0 %v1472
      %2076 = vmatpush.msra.mxu0 %v1464
      %2077 = vmatpush.msra.mxu0 %v1456
      %2078 = vmatpush.msra.mxu0 %v1448
      %2079 = vmatpush.msra.mxu0 %v1440
      %2080 = vmatpush.msra.mxu0 %v1432
      %2081 = vmatpush.msra.mxu0 %v1424
      %2082 = vmatpush.msra.mxu0 %v1416
      %2083 = vmatmul.f32.gmra.mxu0 %v1910
      %v2084 = vpop.f32.mrf.mxu0
      %v2085 = vadd.f32 %v2065, %v2084
      %2086 = vdwg.mxu0
      %2087 = vmatpush.msra.mxu0 %v1409
      %2088 = vmatpush.msra.mxu0 %v1401
      %2089 = vmatpush.msra.mxu0 %v1393
      %2090 = vmatpush.msra.mxu0 %v1385
      %2091 = vmatpush.msra.mxu0 %v1377
      %2092 = vmatpush.msra.mxu0 %v1369
      %2093 = vmatpush.msra.mxu0 %v1361
      %2094 = vmatpush.msra.mxu0 %v1353
      %2095 = vmatpush.msra.mxu0 %v1345
      %2096 = vmatpush.msra.mxu0 %v1337
      %2097 = vmatpush.msra.mxu0 %v1329
      %2098 = vmatpush.msra.mxu0 %v1321
      %2099 = vmatpush.msra.mxu0 %v1313
      %2100 = vmatpush.msra.mxu0 %v1305
      %2101 = vmatpush.msra.mxu0 %v1297
      %2102 = vmatpush.msra.mxu0 %v1289
      %2103 = vmatmul.f32.gmra.mxu0 %v1911
      %v2104 = vpop.f32.mrf.mxu0
      %v2105 = vadd.f32 %v1923, %v2104
      %2106 = vdwg.mxu0
      %2107 = vmatpush.msra.mxu0 %v1537
      %2108 = vmatpush.msra.mxu0 %v1529
      %2109 = vmatpush.msra.mxu0 %v1521
      %2110 = vmatpush.msra.mxu0 %v1513
      %2111 = vmatpush.msra.mxu0 %v1505
      %2112 = vmatpush.msra.mxu0 %v1497
      %2113 = vmatpush.msra.mxu0 %v1489
      %2114 = vmatpush.msra.mxu0 %v1481
      %2115 = vmatpush.msra.mxu0 %v1473
      %2116 = vmatpush.msra.mxu0 %v1465
      %2117 = vmatpush.msra.mxu0 %v1457
      %2118 = vmatpush.msra.mxu0 %v1449
      %2119 = vmatpush.msra.mxu0 %v1441
      %2120 = vmatpush.msra.mxu0 %v1433
      %2121 = vmatpush.msra.mxu0 %v1425
      %2122 = vmatpush.msra.mxu0 %v1417
      %2123 = vmatmul.f32.gmra.mxu0 %v1910
      %v2124 = vpop.f32.mrf.mxu0
      %v2125 = vadd.f32 %v2105, %v2124
      %2126 = vdwg.mxu0
      %2127 = vmatpush.msra.mxu0 %v1410
      %2128 = vmatpush.msra.mxu0 %v1402
      %2129 = vmatpush.msra.mxu0 %v1394
      %2130 = vmatpush.msra.mxu0 %v1386
      %2131 = vmatpush.msra.mxu0 %v1378
      %2132 = vmatpush.msra.mxu0 %v1370
      %2133 = vmatpush.msra.mxu0 %v1362
      %2134 = vmatpush.msra.mxu0 %v1354
      %2135 = vmatpush.msra.mxu0 %v1346
      %2136 = vmatpush.msra.mxu0 %v1338
      %2137 = vmatpush.msra.mxu0 %v1330
      %2138 = vmatpush.msra.mxu0 %v1322
      %2139 = vmatpush.msra.mxu0 %v1314
      %2140 = vmatpush.msra.mxu0 %v1306
      %2141 = vmatpush.msra.mxu0 %v1298
      %2142 = vmatpush.msra.mxu0 %v1290
      %2143 = vmatmul.f32.gmra.mxu0 %v1911
      %v2144 = vpop.f32.mrf.mxu0
      %v2145 = vadd.f32 %v1924, %v2144
      %2146 = vdwg.mxu0
      %2147 = vmatpush.msra.mxu0 %v1538
      %2148 = vmatpush.msra.mxu0 %v1530
      %2149 = vmatpush.msra.mxu0 %v1522
      %2150 = vmatpush.msra.mxu0 %v1514
      %2151 = vmatpush.msra.mxu0 %v1506
      %2152 = vmatpush.msra.mxu0 %v1498
      %2153 = vmatpush.msra.mxu0 %v1490
      %2154 = vmatpush.msra.mxu0 %v1482
      %2155 = vmatpush.msra.mxu0 %v1474
      %2156 = vmatpush.msra.mxu0 %v1466
      %2157 = vmatpush.msra.mxu0 %v1458
      %2158 = vmatpush.msra.mxu0 %v1450
      %2159 = vmatpush.msra.mxu0 %v1442
      %2160 = vmatpush.msra.mxu0 %v1434
      %2161 = vmatpush.msra.mxu0 %v1426
      %2162 = vmatpush.msra.mxu0 %v1418
      %2163 = vmatmul.f32.gmra.mxu0 %v1910
      %v2164 = vpop.f32.mrf.mxu0
      %v2165 = vadd.f32 %v2145, %v2164
      %2166 = vdwg.mxu0
      %2167 = vmatpush.msra.mxu0 %v1411
      %2168 = vmatpush.msra.mxu0 %v1403
      %2169 = vmatpush.msra.mxu0 %v1395
      %2170 = vmatpush.msra.mxu0 %v1387
      %2171 = vmatpush.msra.mxu0 %v1379
      %2172 = vmatpush.msra.mxu0 %v1371
      %2173 = vmatpush.msra.mxu0 %v1363
      %2174 = vmatpush.msra.mxu0 %v1355
      %2175 = vmatpush.msra.mxu0 %v1347
      %2176 = vmatpush.msra.mxu0 %v1339
      %2177 = vmatpush.msra.mxu0 %v1331
      %2178 = vmatpush.msra.mxu0 %v1323
      %2179 = vmatpush.msra.mxu0 %v1315
      %2180 = vmatpush.msra.mxu0 %v1307
      %2181 = vmatpush.msra.mxu0 %v1299
      %2182 = vmatpush.msra.mxu0 %v1291
      %2183 = vmatmul.f32.gmra.mxu0 %v1911
      %v2184 = vpop.f32.mrf.mxu0
      %v2185 = vadd.f32 %v1925, %v2184
      %2186 = vdwg.mxu0
      %2187 = vmatpush.msra.mxu0 %v1539
      %2188 = vmatpush.msra.mxu0 %v1531
      %2189 = vmatpush.msra.mxu0 %v1523
      %2190 = vmatpush.msra.mxu0 %v1515
      %2191 = vmatpush.msra.mxu0 %v1507
      %2192 = vmatpush.msra.mxu0 %v1499
      %2193 = vmatpush.msra.mxu0 %v1491
      %2194 = vmatpush.msra.mxu0 %v1483
      %2195 = vmatpush.msra.mxu0 %v1475
      %2196 = vmatpush.msra.mxu0 %v1467
      %2197 = vmatpush.msra.mxu0 %v1459
      %2198 = vmatpush.msra.mxu0 %v1451
      %2199 = vmatpush.msra.mxu0 %v1443
      %2200 = vmatpush.msra.mxu0 %v1435
      %2201 = vmatpush.msra.mxu0 %v1427
      %2202 = vmatpush.msra.mxu0 %v1419
      %2203 = vmatmul.f32.gmra.mxu0 %v1910
      %v2204 = vpop.f32.mrf.mxu0
      %v2205 = vadd.f32 %v2185, %v2204
      %2206 = vdwg.mxu0
      %2207 = vmatpush.msra.mxu0 %v1412
      %2208 = vmatpush.msra.mxu0 %v1404
      %2209 = vmatpush.msra.mxu0 %v1396
      %2210 = vmatpush.msra.mxu0 %v1388
      %2211 = vmatpush.msra.mxu0 %v1380
      %2212 = vmatpush.msra.mxu0 %v1372
      %2213 = vmatpush.msra.mxu0 %v1364
      %2214 = vmatpush.msra.mxu0 %v1356
      %2215 = vmatpush.msra.mxu0 %v1348
      %2216 = vmatpush.msra.mxu0 %v1340
      %2217 = vmatpush.msra.mxu0 %v1332
      %2218 = vmatpush.msra.mxu0 %v1324
      %2219 = vmatpush.msra.mxu0 %v1316
      %2220 = vmatpush.msra.mxu0 %v1308
      %2221 = vmatpush.msra.mxu0 %v1300
      %2222 = vmatpush.msra.mxu0 %v1292
      %2223 = vmatmul.f32.gmra.mxu0 %v1911
      %v2224 = vpop.f32.mrf.mxu0
      %v2225 = vadd.f32 %v1926, %v2224
      %2226 = vdwg.mxu0
      %2227 = vmatpush.msra.mxu0 %v1540
      %2228 = vmatpush.msra.mxu0 %v1532
      %2229 = vmatpush.msra.mxu0 %v1524
      %2230 = vmatpush.msra.mxu0 %v1516
      %2231 = vmatpush.msra.mxu0 %v1508
      %2232 = vmatpush.msra.mxu0 %v1500
      %2233 = vmatpush.msra.mxu0 %v1492
      %2234 = vmatpush.msra.mxu0 %v1484
      %2235 = vmatpush.msra.mxu0 %v1476
      %2236 = vmatpush.msra.mxu0 %v1468
      %2237 = vmatpush.msra.mxu0 %v1460
      %2238 = vmatpush.msra.mxu0 %v1452
      %2239 = vmatpush.msra.mxu0 %v1444
      %2240 = vmatpush.msra.mxu0 %v1436
      %2241 = vmatpush.msra.mxu0 %v1428
      %2242 = vmatpush.msra.mxu0 %v1420
      %2243 = vmatmul.f32.gmra.mxu0 %v1910
      %v2244 = vpop.f32.mrf.mxu0
      %v2245 = vadd.f32 %v2225, %v2244
      %2246 = vdwg.mxu0
      %v2247 = vmul.f32 %v1965, 0.5
      %v2248 = vmul.f32 %v2005, 0.5
      %v2249 = vmul.f32 %v2045, 0.5
      %v2250 = vmul.f32 %v2085, 0.5
      %v2251 = vmul.f32 %v2125, 0.5
      %v2252 = vmul.f32 %v2165, 0.5
      %v2253 = vtanh.pop %v2247
      %v2254 = vtanh.pop %v2248
      %v2255 = vtanh.pop %v2249
      %v2256 = vtanh.pop %v2250
      %v2257 = vtanh.pop %v2251
      %v2258 = vtanh.pop %v2252
      %v2259 = vmul.f32 %v2253, 0.5
      %v2260 = vmul.f32 %v2254, 0.5
      %v2261 = vmul.f32 %v2255, 0.5
      %v2262 = vmul.f32 %v2256, 0.5
      %v2263 = vmul.f32 %v2257, 0.5
      %v2264 = vmul.f32 %v2258, 0.5
      %v2265 = vadd.f32 %v2259, 0.5
      %v2266 = vadd.f32 %v2260, 0.5
      %v2267 = vadd.f32 %v2261, 0.5
      %v2268 = vadd.f32 %v2262, 0.5
      %v2269 = vadd.f32 %v2263, 0.5
      %v2270 = vadd.f32 %v2264, 0.5
      %v2271 = vtanh.pop %v2205
      %v2272 = vtanh.pop %v2245
      %v2273 = vmul.f32 %v2266, %v1904
      %v2274 = vmul.f32 %v2265, %v2271
      %v2275 = vadd.f32 %v2273, %v2274
      %v2276 = vmul.f32 %v2269, %v1907
      %v2277 = vmul.f32 %v2268, %v2272
      %v2278 = vadd.f32 %v2276, %v2277
      %v2279 = vtanh.pop %v2275
      %v2280 = vtanh.pop %v2278
      %v2281 = vmul.f32 %v2267, %v2279
      %v2282 = vmul.f32 %v2270, %v2280
    $region30: #{tpu_custom_call.1} parent=1 // loop_footer
      %s1279 = sadd.s32 1, %s1275
    $region31: #{tpu_custom_call.1} parent=1 // loop_footer_branch
      %1274 = sbr.rel target = $region27
    $region32: #{tpu_custom_call.1} parent=1 // loop_exit
      _
    %v2283 = vld [vmem:[#allocation3] sm:$0xff]
    %v2284 = vld [vmem:[#allocation3 + $0x8] sm:$0xff]
    %v2285 = vld [vmem:[#allocation3 + $0x10] sm:$0xff]
    %v2286 = vld [vmem:[#allocation3 + $0x18] sm:$0xff]
    %v2287 = vld [vmem:[#allocation3 + $0x20] sm:$0xff]
    %v2288 = vld [vmem:[#allocation3 + $0x28] sm:$0xff]
    %v2289 = vld [vmem:[#allocation3 + $0x30] sm:$0xff]
    %v2290 = vld [vmem:[#allocation3 + $0x38] sm:$0xff]
    %v2291 = vld [vmem:[#allocation3 + $0x40] sm:$0xff]
    %v2292 = vld [vmem:[#allocation3 + $0x48] sm:$0xff]
    %v2293 = vld [vmem:[#allocation3 + $0x50] sm:$0xff]
    %v2294 = vld [vmem:[#allocation3 + $0x58] sm:$0xff]
    %v2295 = vld [vmem:[#allocation3 + $0x60] sm:$0xff]
    %v2296 = vld [vmem:[#allocation3 + $0x68] sm:$0xff]
    %v2297 = vld [vmem:[#allocation3 + $0x70] sm:$0xff]
    %v2298 = vld [vmem:[#allocation3 + $0x78] sm:$0xff]
    %v2299 = vld [vmem:[#allocation3 + $0x80] sm:$0xff]
    %v2300 = vld [vmem:[#allocation3 + $0x88] sm:$0xff]
    %v2301 = vld [vmem:[#allocation3 + $0x90] sm:$0xff]
    %v2302 = vld [vmem:[#allocation3 + $0x98] sm:$0xff]
    %v2303 = vld [vmem:[#allocation3 + $0xa0] sm:$0xff]
    %v2304 = vld [vmem:[#allocation3 + $0xa8] sm:$0xff]
    %v2305 = vld [vmem:[#allocation3 + $0xb0] sm:$0xff]
    %v2306 = vld [vmem:[#allocation3 + $0xb8] sm:$0xff]
    %v2307 = vld [vmem:[#allocation3 + $0xc0] sm:$0xff]
    %v2308 = vld [vmem:[#allocation3 + $0xc8] sm:$0xff]
    %v2309 = vld [vmem:[#allocation3 + $0xd0] sm:$0xff]
    %v2310 = vld [vmem:[#allocation3 + $0xd8] sm:$0xff]
    %v2311 = vld [vmem:[#allocation3 + $0xe0] sm:$0xff]
    %v2312 = vld [vmem:[#allocation3 + $0xe8] sm:$0xff]
    %v2313 = vld [vmem:[#allocation3 + $0xf0] sm:$0xff]
    %v2314 = vld [vmem:[#allocation3 + $0xf8] sm:$0xff]
    %v2315 = vld [vmem:[#allocation3 + $0x100] sm:$0xff]
    %v2316 = vld [vmem:[#allocation3 + $0x108] sm:$0xff]
    %v2317 = vld [vmem:[#allocation3 + $0x110] sm:$0xff]
    %v2318 = vld [vmem:[#allocation3 + $0x118] sm:$0xff]
    %v2319 = vld [vmem:[#allocation3 + $0x120] sm:$0xff]
    %v2320 = vld [vmem:[#allocation3 + $0x128] sm:$0xff]
    %v2321 = vld [vmem:[#allocation3 + $0x130] sm:$0xff]
    %v2322 = vld [vmem:[#allocation3 + $0x138] sm:$0xff]
    %v2323 = vld [vmem:[#allocation3 + $0x140] sm:$0xff]
    %v2324 = vld [vmem:[#allocation3 + $0x148] sm:$0xff]
    %v2325 = vld [vmem:[#allocation3 + $0x150] sm:$0xff]
    %v2326 = vld [vmem:[#allocation3 + $0x158] sm:$0xff]
    %v2327 = vld [vmem:[#allocation3 + $0x160] sm:$0xff]
    %v2328 = vld [vmem:[#allocation3 + $0x168] sm:$0xff]
    %v2329 = vld [vmem:[#allocation3 + $0x170] sm:$0xff]
    %v2330 = vld [vmem:[#allocation3 + $0x178] sm:$0xff]
    %v2331 = vld [vmem:[#allocation3 + $0x180] sm:$0xff]
    %v2332 = vld [vmem:[#allocation3 + $0x188] sm:$0xff]
    %v2333 = vld [vmem:[#allocation3 + $0x190] sm:$0xff]
    %v2334 = vld [vmem:[#allocation3 + $0x198] sm:$0xff]
    %v2335 = vld [vmem:[#allocation3 + $0x1a0] sm:$0xff]
    %v2336 = vld [vmem:[#allocation3 + $0x1a8] sm:$0xff]
    %v2337 = vld [vmem:[#allocation3 + $0x1b0] sm:$0xff]
    %v2338 = vld [vmem:[#allocation3 + $0x1b8] sm:$0xff]
    %v2339 = vld [vmem:[#allocation3 + $0x1c0] sm:$0xff]
    %v2340 = vld [vmem:[#allocation3 + $0x1c8] sm:$0xff]
    %v2341 = vld [vmem:[#allocation3 + $0x1d0] sm:$0xff]
    %v2342 = vld [vmem:[#allocation3 + $0x1d8] sm:$0xff]
    %v2343 = vld [vmem:[#allocation3 + $0x1e0] sm:$0xff]
    %v2344 = vld [vmem:[#allocation3 + $0x1e8] sm:$0xff]
    %v2345 = vld [vmem:[#allocation3 + $0x1f0] sm:$0xff]
    %v2346 = vld [vmem:[#allocation3 + $0x1f8] sm:$0xff]
    %v2347 = vld [vmem:[#allocation3 + $0x200] sm:$0xff]
    %v2348 = vld [vmem:[#allocation3 + $0x208] sm:$0xff]
    %v2349 = vld [vmem:[#allocation3 + $0x210] sm:$0xff]
    %v2350 = vld [vmem:[#allocation3 + $0x218] sm:$0xff]
    %v2351 = vld [vmem:[#allocation3 + $0x220] sm:$0xff]
    %v2352 = vld [vmem:[#allocation3 + $0x228] sm:$0xff]
    %v2353 = vld [vmem:[#allocation3 + $0x230] sm:$0xff]
    %v2354 = vld [vmem:[#allocation3 + $0x238] sm:$0xff]
    %v2355 = vld [vmem:[#allocation3 + $0x240] sm:$0xff]
    %v2356 = vld [vmem:[#allocation3 + $0x248] sm:$0xff]
    %v2357 = vld [vmem:[#allocation3 + $0x250] sm:$0xff]
    %v2358 = vld [vmem:[#allocation3 + $0x258] sm:$0xff]
    %v2359 = vld [vmem:[#allocation3 + $0x260] sm:$0xff]
    %v2360 = vld [vmem:[#allocation3 + $0x268] sm:$0xff]
    %v2361 = vld [vmem:[#allocation3 + $0x270] sm:$0xff]
    %v2362 = vld [vmem:[#allocation3 + $0x278] sm:$0xff]
    %v2363 = vld [vmem:[#allocation3 + $0x280] sm:$0xff]
    %v2364 = vld [vmem:[#allocation3 + $0x288] sm:$0xff]
    %v2365 = vld [vmem:[#allocation3 + $0x290] sm:$0xff]
    %v2366 = vld [vmem:[#allocation3 + $0x298] sm:$0xff]
    %v2367 = vld [vmem:[#allocation3 + $0x2a0] sm:$0xff]
    %v2368 = vld [vmem:[#allocation3 + $0x2a8] sm:$0xff]
    %v2369 = vld [vmem:[#allocation3 + $0x2b0] sm:$0xff]
    %v2370 = vld [vmem:[#allocation3 + $0x2b8] sm:$0xff]
    %v2371 = vld [vmem:[#allocation3 + $0x2c0] sm:$0xff]
    %v2372 = vld [vmem:[#allocation3 + $0x2c8] sm:$0xff]
    %v2373 = vld [vmem:[#allocation3 + $0x2d0] sm:$0xff]
    %v2374 = vld [vmem:[#allocation3 + $0x2d8] sm:$0xff]
    %v2375 = vld [vmem:[#allocation3 + $0x2e0] sm:$0xff]
    %v2376 = vld [vmem:[#allocation3 + $0x2e8] sm:$0xff]
    %v2377 = vld [vmem:[#allocation3 + $0x2f0] sm:$0xff]
    %v2378 = vld [vmem:[#allocation3 + $0x2f8] sm:$0xff]
    %v2379 = vld [vmem:[#allocation3 + $0x300] sm:$0xff]
    %v2380 = vld [vmem:[#allocation3 + $0x308] sm:$0xff]
    %v2381 = vld [vmem:[#allocation3 + $0x310] sm:$0xff]
    %v2382 = vld [vmem:[#allocation3 + $0x318] sm:$0xff]
    %v2383 = vld [vmem:[#allocation3 + $0x320] sm:$0xff]
    %v2384 = vld [vmem:[#allocation3 + $0x328] sm:$0xff]
    %v2385 = vld [vmem:[#allocation3 + $0x330] sm:$0xff]
    %v2386 = vld [vmem:[#allocation3 + $0x338] sm:$0xff]
    %v2387 = vld [vmem:[#allocation3 + $0x340] sm:$0xff]
    %v2388 = vld [vmem:[#allocation3 + $0x348] sm:$0xff]
    %v2389 = vld [vmem:[#allocation3 + $0x350] sm:$0xff]
    %v2390 = vld [vmem:[#allocation3 + $0x358] sm:$0xff]
    %v2391 = vld [vmem:[#allocation3 + $0x360] sm:$0xff]
    %v2392 = vld [vmem:[#allocation3 + $0x368] sm:$0xff]
    %v2393 = vld [vmem:[#allocation3 + $0x370] sm:$0xff]
    %v2394 = vld [vmem:[#allocation3 + $0x378] sm:$0xff]
    %v2395 = vld [vmem:[#allocation3 + $0x380] sm:$0xff]
    %v2396 = vld [vmem:[#allocation3 + $0x388] sm:$0xff]
    %v2397 = vld [vmem:[#allocation3 + $0x390] sm:$0xff]
    %v2398 = vld [vmem:[#allocation3 + $0x398] sm:$0xff]
    %v2399 = vld [vmem:[#allocation3 + $0x3a0] sm:$0xff]
    %v2400 = vld [vmem:[#allocation3 + $0x3a8] sm:$0xff]
    %v2401 = vld [vmem:[#allocation3 + $0x3b0] sm:$0xff]
    %v2402 = vld [vmem:[#allocation3 + $0x3b8] sm:$0xff]
    %v2403 = vld [vmem:[#allocation3 + $0x3c0] sm:$0xff]
    %v2404 = vld [vmem:[#allocation3 + $0x3c8] sm:$0xff]
    %v2405 = vld [vmem:[#allocation3 + $0x3d0] sm:$0xff]
    %v2406 = vld [vmem:[#allocation3 + $0x3d8] sm:$0xff]
    %v2407 = vld [vmem:[#allocation3 + $0x3e0] sm:$0xff]
    %v2408 = vld [vmem:[#allocation3 + $0x3e8] sm:$0xff]
    %v2409 = vld [vmem:[#allocation3 + $0x3f0] sm:$0xff]
    %v2410 = vld [vmem:[#allocation3 + $0x3f8] sm:$0xff]
    %v2411 = vld [vmem:[#allocation3 + $0x400] sm:$0xff]
    %v2412 = vld [vmem:[#allocation3 + $0x408] sm:$0xff]
    %v2413 = vld [vmem:[#allocation3 + $0x410] sm:$0xff]
    %v2414 = vld [vmem:[#allocation3 + $0x418] sm:$0xff]
    %v2415 = vld [vmem:[#allocation3 + $0x420] sm:$0xff]
    %v2416 = vld [vmem:[#allocation3 + $0x428] sm:$0xff]
    %v2417 = vld [vmem:[#allocation3 + $0x430] sm:$0xff]
    %v2418 = vld [vmem:[#allocation3 + $0x438] sm:$0xff]
    %v2419 = vld [vmem:[#allocation3 + $0x440] sm:$0xff]
    %v2420 = vld [vmem:[#allocation3 + $0x448] sm:$0xff]
    %v2421 = vld [vmem:[#allocation3 + $0x450] sm:$0xff]
    %v2422 = vld [vmem:[#allocation3 + $0x458] sm:$0xff]
    %v2423 = vld [vmem:[#allocation3 + $0x460] sm:$0xff]
    %v2424 = vld [vmem:[#allocation3 + $0x468] sm:$0xff]
    %v2425 = vld [vmem:[#allocation3 + $0x470] sm:$0xff]
    %v2426 = vld [vmem:[#allocation3 + $0x478] sm:$0xff]
    %v2427 = vld [vmem:[#allocation3 + $0x480] sm:$0xff]
    %v2428 = vld [vmem:[#allocation3 + $0x488] sm:$0xff]
    %v2429 = vld [vmem:[#allocation3 + $0x490] sm:$0xff]
    %v2430 = vld [vmem:[#allocation3 + $0x498] sm:$0xff]
    %v2431 = vld [vmem:[#allocation3 + $0x4a0] sm:$0xff]
    %v2432 = vld [vmem:[#allocation3 + $0x4a8] sm:$0xff]
    %v2433 = vld [vmem:[#allocation3 + $0x4b0] sm:$0xff]
    %v2434 = vld [vmem:[#allocation3 + $0x4b8] sm:$0xff]
    %v2435 = vld [vmem:[#allocation3 + $0x4c0] sm:$0xff]
    %v2436 = vld [vmem:[#allocation3 + $0x4c8] sm:$0xff]
    %v2437 = vld [vmem:[#allocation3 + $0x4d0] sm:$0xff]
    %v2438 = vld [vmem:[#allocation3 + $0x4d8] sm:$0xff]
    %v2439 = vld [vmem:[#allocation3 + $0x4e0] sm:$0xff]
    %v2440 = vld [vmem:[#allocation3 + $0x4e8] sm:$0xff]
    %v2441 = vld [vmem:[#allocation3 + $0x4f0] sm:$0xff]
    %v2442 = vld [vmem:[#allocation3 + $0x4f8] sm:$0xff]
    %v2443 = vld [vmem:[#allocation3 + $0x500] sm:$0xff]
    %v2444 = vld [vmem:[#allocation3 + $0x508] sm:$0xff]
    %v2445 = vld [vmem:[#allocation3 + $0x510] sm:$0xff]
    %v2446 = vld [vmem:[#allocation3 + $0x518] sm:$0xff]
    %v2447 = vld [vmem:[#allocation3 + $0x520] sm:$0xff]
    %v2448 = vld [vmem:[#allocation3 + $0x528] sm:$0xff]
    %v2449 = vld [vmem:[#allocation3 + $0x530] sm:$0xff]
    %v2450 = vld [vmem:[#allocation3 + $0x538] sm:$0xff]
    %v2451 = vld [vmem:[#allocation3 + $0x540] sm:$0xff]
    %v2452 = vld [vmem:[#allocation3 + $0x548] sm:$0xff]
    %v2453 = vld [vmem:[#allocation3 + $0x550] sm:$0xff]
    %v2454 = vld [vmem:[#allocation3 + $0x558] sm:$0xff]
    %v2455 = vld [vmem:[#allocation3 + $0x560] sm:$0xff]
    %v2456 = vld [vmem:[#allocation3 + $0x568] sm:$0xff]
    %v2457 = vld [vmem:[#allocation3 + $0x570] sm:$0xff]
    %v2458 = vld [vmem:[#allocation3 + $0x578] sm:$0xff]
    %v2459 = vld [vmem:[#allocation3 + $0x580] sm:$0xff]
    %v2460 = vld [vmem:[#allocation3 + $0x588] sm:$0xff]
    %v2461 = vld [vmem:[#allocation3 + $0x590] sm:$0xff]
    %v2462 = vld [vmem:[#allocation3 + $0x598] sm:$0xff]
    %v2463 = vld [vmem:[#allocation3 + $0x5a0] sm:$0xff]
    %v2464 = vld [vmem:[#allocation3 + $0x5a8] sm:$0xff]
    %v2465 = vld [vmem:[#allocation3 + $0x5b0] sm:$0xff]
    %v2466 = vld [vmem:[#allocation3 + $0x5b8] sm:$0xff]
    %v2467 = vld [vmem:[#allocation3 + $0x5c0] sm:$0xff]
    %v2468 = vld [vmem:[#allocation3 + $0x5c8] sm:$0xff]
    %v2469 = vld [vmem:[#allocation3 + $0x5d0] sm:$0xff]
    %v2470 = vld [vmem:[#allocation3 + $0x5d8] sm:$0xff]
    %v2471 = vld [vmem:[#allocation3 + $0x5e0] sm:$0xff]
    %v2472 = vld [vmem:[#allocation3 + $0x5e8] sm:$0xff]
    %v2473 = vld [vmem:[#allocation3 + $0x5f0] sm:$0xff]
    %v2474 = vld [vmem:[#allocation3 + $0x5f8] sm:$0xff]
    %v2475 = vld [vmem:[#allocation3 + $0x600] sm:$0xff]
    %v2476 = vld [vmem:[#allocation3 + $0x608] sm:$0xff]
    %v2477 = vld [vmem:[#allocation3 + $0x610] sm:$0xff]
    %v2478 = vld [vmem:[#allocation3 + $0x618] sm:$0xff]
    %v2479 = vld [vmem:[#allocation3 + $0x620] sm:$0xff]
    %v2480 = vld [vmem:[#allocation3 + $0x628] sm:$0xff]
    %v2481 = vld [vmem:[#allocation3 + $0x630] sm:$0xff]
    %v2482 = vld [vmem:[#allocation3 + $0x638] sm:$0xff]
    %v2483 = vld [vmem:[#allocation3 + $0x640] sm:$0xff]
    %v2484 = vld [vmem:[#allocation3 + $0x648] sm:$0xff]
    %v2485 = vld [vmem:[#allocation3 + $0x650] sm:$0xff]
    %v2486 = vld [vmem:[#allocation3 + $0x658] sm:$0xff]
    %v2487 = vld [vmem:[#allocation3 + $0x660] sm:$0xff]
    %v2488 = vld [vmem:[#allocation3 + $0x668] sm:$0xff]
    %v2489 = vld [vmem:[#allocation3 + $0x670] sm:$0xff]
    %v2490 = vld [vmem:[#allocation3 + $0x678] sm:$0xff]
    %v2491 = vld [vmem:[#allocation3 + $0x680] sm:$0xff]
    %v2492 = vld [vmem:[#allocation3 + $0x688] sm:$0xff]
    %v2493 = vld [vmem:[#allocation3 + $0x690] sm:$0xff]
    %v2494 = vld [vmem:[#allocation3 + $0x698] sm:$0xff]
    %v2495 = vld [vmem:[#allocation3 + $0x6a0] sm:$0xff]
    %v2496 = vld [vmem:[#allocation3 + $0x6a8] sm:$0xff]
    %v2497 = vld [vmem:[#allocation3 + $0x6b0] sm:$0xff]
    %v2498 = vld [vmem:[#allocation3 + $0x6b8] sm:$0xff]
    %v2499 = vld [vmem:[#allocation3 + $0x6c0] sm:$0xff]
    %v2500 = vld [vmem:[#allocation3 + $0x6c8] sm:$0xff]
    %v2501 = vld [vmem:[#allocation3 + $0x6d0] sm:$0xff]
    %v2502 = vld [vmem:[#allocation3 + $0x6d8] sm:$0xff]
    %v2503 = vld [vmem:[#allocation3 + $0x6e0] sm:$0xff]
    %v2504 = vld [vmem:[#allocation3 + $0x6e8] sm:$0xff]
    %v2505 = vld [vmem:[#allocation3 + $0x6f0] sm:$0xff]
    %v2506 = vld [vmem:[#allocation3 + $0x6f8] sm:$0xff]
    %v2507 = vld [vmem:[#allocation3 + $0x700] sm:$0xff]
    %v2508 = vld [vmem:[#allocation3 + $0x708] sm:$0xff]
    %v2509 = vld [vmem:[#allocation3 + $0x710] sm:$0xff]
    %v2510 = vld [vmem:[#allocation3 + $0x718] sm:$0xff]
    %v2511 = vld [vmem:[#allocation3 + $0x720] sm:$0xff]
    %v2512 = vld [vmem:[#allocation3 + $0x728] sm:$0xff]
    %v2513 = vld [vmem:[#allocation3 + $0x730] sm:$0xff]
    %v2514 = vld [vmem:[#allocation3 + $0x738] sm:$0xff]
    %v2515 = vld [vmem:[#allocation3 + $0x740] sm:$0xff]
    %v2516 = vld [vmem:[#allocation3 + $0x748] sm:$0xff]
    %v2517 = vld [vmem:[#allocation3 + $0x750] sm:$0xff]
    %v2518 = vld [vmem:[#allocation3 + $0x758] sm:$0xff]
    %v2519 = vld [vmem:[#allocation3 + $0x760] sm:$0xff]
    %v2520 = vld [vmem:[#allocation3 + $0x768] sm:$0xff]
    %v2521 = vld [vmem:[#allocation3 + $0x770] sm:$0xff]
    %v2522 = vld [vmem:[#allocation3 + $0x778] sm:$0xff]
    %v2523 = vld [vmem:[#allocation3 + $0x780] sm:$0xff]
    %v2524 = vld [vmem:[#allocation3 + $0x788] sm:$0xff]
    %v2525 = vld [vmem:[#allocation3 + $0x790] sm:$0xff]
    %v2526 = vld [vmem:[#allocation3 + $0x798] sm:$0xff]
    %v2527 = vld [vmem:[#allocation3 + $0x7a0] sm:$0xff]
    %v2528 = vld [vmem:[#allocation3 + $0x7a8] sm:$0xff]
    %v2529 = vld [vmem:[#allocation3 + $0x7b0] sm:$0xff]
    %v2530 = vld [vmem:[#allocation3 + $0x7b8] sm:$0xff]
    %v2531 = vld [vmem:[#allocation3 + $0x7c0] sm:$0xff]
    %v2532 = vld [vmem:[#allocation3 + $0x7c8] sm:$0xff]
    %v2533 = vld [vmem:[#allocation3 + $0x7d0] sm:$0xff]
    %v2534 = vld [vmem:[#allocation3 + $0x7d8] sm:$0xff]
    %v2535 = vld [vmem:[#allocation3 + $0x7e0] sm:$0xff]
    %v2536 = vld [vmem:[#allocation3 + $0x7e8] sm:$0xff]
    %v2537 = vld [vmem:[#allocation3 + $0x7f0] sm:$0xff]
    %v2538 = vld [vmem:[#allocation3 + $0x7f8] sm:$0xff]
    %s2539 = smul.u32 27, 8
    %s2540 = smul.addr %s2539, 8
    %s2541 = scalar_lea.vmem [#allocation2], %s2540
    %v2542 = vld [vmem:[%s2541] sm:$0xff]
    %v2543 = vld [vmem:[%s2541 + $0x8] sm:$0xff]
    %v2544 = vld [vmem:[%s2541 + $0x10] sm:$0xff]
    %v2545 = vld [vmem:[%s2541 + $0x18] sm:$0xff]
    %v2546 = vld [vmem:[%s2541 + $0x20] sm:$0xff]
    %v2547 = vld [vmem:[%s2541 + $0x28] sm:$0xff]
    %v2548 = vld [vmem:[%s2541 + $0x30] sm:$0xff]
    %v2549 = vld [vmem:[%s2541 + $0x38] sm:$0xff]
    %2550 = vmatpush.msra.mxu0 %v2403
    %2551 = vmatpush.msra.mxu0 %v2395
    %2552 = vmatpush.msra.mxu0 %v2387
    %2553 = vmatpush.msra.mxu0 %v2379
    %2554 = vmatpush.msra.mxu0 %v2371
    %2555 = vmatpush.msra.mxu0 %v2363
    %2556 = vmatpush.msra.mxu0 %v2355
    %2557 = vmatpush.msra.mxu0 %v2347
    %2558 = vmatpush.msra.mxu0 %v2339
    %2559 = vmatpush.msra.mxu0 %v2331
    %2560 = vmatpush.msra.mxu0 %v2323
    %2561 = vmatpush.msra.mxu0 %v2315
    %2562 = vmatpush.msra.mxu0 %v2307
    %2563 = vmatpush.msra.mxu0 %v2299
    %2564 = vmatpush.msra.mxu0 %v2291
    %2565 = vmatpush.msra.mxu0 %v2283
    %2566 = vmatmul.f32.gmra.mxu0 %v1280
    %v2567 = vpop.f32.mrf.mxu0
    %v2568 = vadd.f32 %v2542, %v2567
    %2569 = vdwg.mxu0
    %2570 = vmatpush.msra.mxu0 %v2531
    %2571 = vmatpush.msra.mxu0 %v2523
    %2572 = vmatpush.msra.mxu0 %v2515
    %2573 = vmatpush.msra.mxu0 %v2507
    %2574 = vmatpush.msra.mxu0 %v2499
    %2575 = vmatpush.msra.mxu0 %v2491
    %2576 = vmatpush.msra.mxu0 %v2483
    %2577 = vmatpush.msra.mxu0 %v2475
    %2578 = vmatpush.msra.mxu0 %v2467
    %2579 = vmatpush.msra.mxu0 %v2459
    %2580 = vmatpush.msra.mxu0 %v2451
    %2581 = vmatpush.msra.mxu0 %v2443
    %2582 = vmatpush.msra.mxu0 %v2435
    %2583 = vmatpush.msra.mxu0 %v2427
    %2584 = vmatpush.msra.mxu0 %v2419
    %2585 = vmatpush.msra.mxu0 %v2411
    %2586 = vmatmul.f32.gmra.mxu0 %v1282
    %v2587 = vpop.f32.mrf.mxu0
    %v2588 = vadd.f32 %v2568, %v2587
    %2589 = vdwg.mxu0
    %2590 = vmatpush.msra.mxu0 %v2404
    %2591 = vmatpush.msra.mxu0 %v2396
    %2592 = vmatpush.msra.mxu0 %v2388
    %2593 = vmatpush.msra.mxu0 %v2380
    %2594 = vmatpush.msra.mxu0 %v2372
    %2595 = vmatpush.msra.mxu0 %v2364
    %2596 = vmatpush.msra.mxu0 %v2356
    %2597 = vmatpush.msra.mxu0 %v2348
    %2598 = vmatpush.msra.mxu0 %v2340
    %2599 = vmatpush.msra.mxu0 %v2332
    %2600 = vmatpush.msra.mxu0 %v2324
    %2601 = vmatpush.msra.mxu0 %v2316
    %2602 = vmatpush.msra.mxu0 %v2308
    %2603 = vmatpush.msra.mxu0 %v2300
    %2604 = vmatpush.msra.mxu0 %v2292
    %2605 = vmatpush.msra.mxu0 %v2284
    %2606 = vmatmul.f32.gmra.mxu0 %v1280
    %v2607 = vpop.f32.mrf.mxu0
    %v2608 = vadd.f32 %v2543, %v2607
    %2609 = vdwg.mxu0
    %2610 = vmatpush.msra.mxu0 %v2532
    %2611 = vmatpush.msra.mxu0 %v2524
    %2612 = vmatpush.msra.mxu0 %v2516
    %2613 = vmatpush.msra.mxu0 %v2508
    %2614 = vmatpush.msra.mxu0 %v2500
    %2615 = vmatpush.msra.mxu0 %v2492
    %2616 = vmatpush.msra.mxu0 %v2484
    %2617 = vmatpush.msra.mxu0 %v2476
    %2618 = vmatpush.msra.mxu0 %v2468
    %2619 = vmatpush.msra.mxu0 %v2460
    %2620 = vmatpush.msra.mxu0 %v2452
    %2621 = vmatpush.msra.mxu0 %v2444
    %2622 = vmatpush.msra.mxu0 %v2436
    %2623 = vmatpush.msra.mxu0 %v2428
    %2624 = vmatpush.msra.mxu0 %v2420
    %2625 = vmatpush.msra.mxu0 %v2412
    %2626 = vmatmul.f32.gmra.mxu0 %v1282
    %v2627 = vpop.f32.mrf.mxu0
    %v2628 = vadd.f32 %v2608, %v2627
    %2629 = vdwg.mxu0
    %2630 = vmatpush.msra.mxu0 %v2405
    %2631 = vmatpush.msra.mxu0 %v2397
    %2632 = vmatpush.msra.mxu0 %v2389
    %2633 = vmatpush.msra.mxu0 %v2381
    %2634 = vmatpush.msra.mxu0 %v2373
    %2635 = vmatpush.msra.mxu0 %v2365
    %2636 = vmatpush.msra.mxu0 %v2357
    %2637 = vmatpush.msra.mxu0 %v2349
    %2638 = vmatpush.msra.mxu0 %v2341
    %2639 = vmatpush.msra.mxu0 %v2333
    %2640 = vmatpush.msra.mxu0 %v2325
    %2641 = vmatpush.msra.mxu0 %v2317
    %2642 = vmatpush.msra.mxu0 %v2309
    %2643 = vmatpush.msra.mxu0 %v2301
    %2644 = vmatpush.msra.mxu0 %v2293
    %2645 = vmatpush.msra.mxu0 %v2285
    %2646 = vmatmul.f32.gmra.mxu0 %v1280
    %v2647 = vpop.f32.mrf.mxu0
    %v2648 = vadd.f32 %v2544, %v2647
    %2649 = vdwg.mxu0
    %2650 = vmatpush.msra.mxu0 %v2533
    %2651 = vmatpush.msra.mxu0 %v2525
    %2652 = vmatpush.msra.mxu0 %v2517
    %2653 = vmatpush.msra.mxu0 %v2509
    %2654 = vmatpush.msra.mxu0 %v2501
    %2655 = vmatpush.msra.mxu0 %v2493
    %2656 = vmatpush.msra.mxu0 %v2485
    %2657 = vmatpush.msra.mxu0 %v2477
    %2658 = vmatpush.msra.mxu0 %v2469
    %2659 = vmatpush.msra.mxu0 %v2461
    %2660 = vmatpush.msra.mxu0 %v2453
    %2661 = vmatpush.msra.mxu0 %v2445
    %2662 = vmatpush.msra.mxu0 %v2437
    %2663 = vmatpush.msra.mxu0 %v2429
    %2664 = vmatpush.msra.mxu0 %v2421
    %2665 = vmatpush.msra.mxu0 %v2413
    %2666 = vmatmul.f32.gmra.mxu0 %v1282
    %v2667 = vpop.f32.mrf.mxu0
    %v2668 = vadd.f32 %v2648, %v2667
    %2669 = vdwg.mxu0
    %2670 = vmatpush.msra.mxu0 %v2406
    %2671 = vmatpush.msra.mxu0 %v2398
    %2672 = vmatpush.msra.mxu0 %v2390
    %2673 = vmatpush.msra.mxu0 %v2382
    %2674 = vmatpush.msra.mxu0 %v2374
    %2675 = vmatpush.msra.mxu0 %v2366
    %2676 = vmatpush.msra.mxu0 %v2358
    %2677 = vmatpush.msra.mxu0 %v2350
    %2678 = vmatpush.msra.mxu0 %v2342
    %2679 = vmatpush.msra.mxu0 %v2334
    %2680 = vmatpush.msra.mxu0 %v2326
    %2681 = vmatpush.msra.mxu0 %v2318
    %2682 = vmatpush.msra.mxu0 %v2310
    %2683 = vmatpush.msra.mxu0 %v2302
    %2684 = vmatpush.msra.mxu0 %v2294
    %2685 = vmatpush.msra.mxu0 %v2286
    %2686 = vmatmul.f32.gmra.mxu0 %v1280
    %v2687 = vpop.f32.mrf.mxu0
    %v2688 = vadd.f32 %v2545, %v2687
    %2689 = vdwg.mxu0
    %2690 = vmatpush.msra.mxu0 %v2534
    %2691 = vmatpush.msra.mxu0 %v2526
    %2692 = vmatpush.msra.mxu0 %v2518
    %2693 = vmatpush.msra.mxu0 %v2510
    %2694 = vmatpush.msra.mxu0 %v2502
    %2695 = vmatpush.msra.mxu0 %v2494
    %2696 = vmatpush.msra.mxu0 %v2486
    %2697 = vmatpush.msra.mxu0 %v2478
    %2698 = vmatpush.msra.mxu0 %v2470
    %2699 = vmatpush.msra.mxu0 %v2462
    %2700 = vmatpush.msra.mxu0 %v2454
    %2701 = vmatpush.msra.mxu0 %v2446
    %2702 = vmatpush.msra.mxu0 %v2438
    %2703 = vmatpush.msra.mxu0 %v2430
    %2704 = vmatpush.msra.mxu0 %v2422
    %2705 = vmatpush.msra.mxu0 %v2414
    %2706 = vmatmul.f32.gmra.mxu0 %v1282
    %v2707 = vpop.f32.mrf.mxu0
    %v2708 = vadd.f32 %v2688, %v2707
    %2709 = vdwg.mxu0
    %2710 = vmatpush.msra.mxu0 %v2407
    %2711 = vmatpush.msra.mxu0 %v2399
    %2712 = vmatpush.msra.mxu0 %v2391
    %2713 = vmatpush.msra.mxu0 %v2383
    %2714 = vmatpush.msra.mxu0 %v2375
    %2715 = vmatpush.msra.mxu0 %v2367
    %2716 = vmatpush.msra.mxu0 %v2359
    %2717 = vmatpush.msra.mxu0 %v2351
    %2718 = vmatpush.msra.mxu0 %v2343
    %2719 = vmatpush.msra.mxu0 %v2335
    %2720 = vmatpush.msra.mxu0 %v2327
    %2721 = vmatpush.msra.mxu0 %v2319
    %2722 = vmatpush.msra.mxu0 %v2311
    %2723 = vmatpush.msra.mxu0 %v2303
    %2724 = vmatpush.msra.mxu0 %v2295
    %2725 = vmatpush.msra.mxu0 %v2287
    %2726 = vmatmul.f32.gmra.mxu0 %v1280
    %v2727 = vpop.f32.mrf.mxu0
    %v2728 = vadd.f32 %v2546, %v2727
    %2729 = vdwg.mxu0
    %2730 = vmatpush.msra.mxu0 %v2535
    %2731 = vmatpush.msra.mxu0 %v2527
    %2732 = vmatpush.msra.mxu0 %v2519
    %2733 = vmatpush.msra.mxu0 %v2511
    %2734 = vmatpush.msra.mxu0 %v2503
    %2735 = vmatpush.msra.mxu0 %v2495
    %2736 = vmatpush.msra.mxu0 %v2487
    %2737 = vmatpush.msra.mxu0 %v2479
    %2738 = vmatpush.msra.mxu0 %v2471
    %2739 = vmatpush.msra.mxu0 %v2463
    %2740 = vmatpush.msra.mxu0 %v2455
    %2741 = vmatpush.msra.mxu0 %v2447
    %2742 = vmatpush.msra.mxu0 %v2439
    %2743 = vmatpush.msra.mxu0 %v2431
    %2744 = vmatpush.msra.mxu0 %v2423
    %2745 = vmatpush.msra.mxu0 %v2415
    %2746 = vmatmul.f32.gmra.mxu0 %v1282
    %v2747 = vpop.f32.mrf.mxu0
    %v2748 = vadd.f32 %v2728, %v2747
    %2749 = vdwg.mxu0
    %2750 = vmatpush.msra.mxu0 %v2408
    %2751 = vmatpush.msra.mxu0 %v2400
    %2752 = vmatpush.msra.mxu0 %v2392
    %2753 = vmatpush.msra.mxu0 %v2384
    %2754 = vmatpush.msra.mxu0 %v2376
    %2755 = vmatpush.msra.mxu0 %v2368
    %2756 = vmatpush.msra.mxu0 %v2360
    %2757 = vmatpush.msra.mxu0 %v2352
    %2758 = vmatpush.msra.mxu0 %v2344
    %2759 = vmatpush.msra.mxu0 %v2336
    %2760 = vmatpush.msra.mxu0 %v2328
    %2761 = vmatpush.msra.mxu0 %v2320
    %2762 = vmatpush.msra.mxu0 %v2312
    %2763 = vmatpush.msra.mxu0 %v2304
    %2764 = vmatpush.msra.mxu0 %v2296
    %2765 = vmatpush.msra.mxu0 %v2288
    %2766 = vmatmul.f32.gmra.mxu0 %v1280
    %v2767 = vpop.f32.mrf.mxu0
    %v2768 = vadd.f32 %v2547, %v2767
    %2769 = vdwg.mxu0
    %2770 = vmatpush.msra.mxu0 %v2536
    %2771 = vmatpush.msra.mxu0 %v2528
    %2772 = vmatpush.msra.mxu0 %v2520
    %2773 = vmatpush.msra.mxu0 %v2512
    %2774 = vmatpush.msra.mxu0 %v2504
    %2775 = vmatpush.msra.mxu0 %v2496
    %2776 = vmatpush.msra.mxu0 %v2488
    %2777 = vmatpush.msra.mxu0 %v2480
    %2778 = vmatpush.msra.mxu0 %v2472
    %2779 = vmatpush.msra.mxu0 %v2464
    %2780 = vmatpush.msra.mxu0 %v2456
    %2781 = vmatpush.msra.mxu0 %v2448
    %2782 = vmatpush.msra.mxu0 %v2440
    %2783 = vmatpush.msra.mxu0 %v2432
    %2784 = vmatpush.msra.mxu0 %v2424
    %2785 = vmatpush.msra.mxu0 %v2416
    %2786 = vmatmul.f32.gmra.mxu0 %v1282
    %v2787 = vpop.f32.mrf.mxu0
    %v2788 = vadd.f32 %v2768, %v2787
    %2789 = vdwg.mxu0
    %2790 = vmatpush.msra.mxu0 %v2409
    %2791 = vmatpush.msra.mxu0 %v2401
    %2792 = vmatpush.msra.mxu0 %v2393
    %2793 = vmatpush.msra.mxu0 %v2385
    %2794 = vmatpush.msra.mxu0 %v2377
    %2795 = vmatpush.msra.mxu0 %v2369
    %2796 = vmatpush.msra.mxu0 %v2361
    %2797 = vmatpush.msra.mxu0 %v2353
    %2798 = vmatpush.msra.mxu0 %v2345
    %2799 = vmatpush.msra.mxu0 %v2337
    %2800 = vmatpush.msra.mxu0 %v2329
    %2801 = vmatpush.msra.mxu0 %v2321
    %2802 = vmatpush.msra.mxu0 %v2313
    %2803 = vmatpush.msra.mxu0 %v2305
    %2804 = vmatpush.msra.mxu0 %v2297
    %2805 = vmatpush.msra.mxu0 %v2289
    %2806 = vmatmul.f32.gmra.mxu0 %v1280
    %v2807 = vpop.f32.mrf.mxu0
    %v2808 = vadd.f32 %v2548, %v2807
    %2809 = vdwg.mxu0
    %2810 = vmatpush.msra.mxu0 %v2537
    %2811 = vmatpush.msra.mxu0 %v2529
    %2812 = vmatpush.msra.mxu0 %v2521
    %2813 = vmatpush.msra.mxu0 %v2513
    %2814 = vmatpush.msra.mxu0 %v2505
    %2815 = vmatpush.msra.mxu0 %v2497
    %2816 = vmatpush.msra.mxu0 %v2489
    %2817 = vmatpush.msra.mxu0 %v2481
    %2818 = vmatpush.msra.mxu0 %v2473
    %2819 = vmatpush.msra.mxu0 %v2465
    %2820 = vmatpush.msra.mxu0 %v2457
    %2821 = vmatpush.msra.mxu0 %v2449
    %2822 = vmatpush.msra.mxu0 %v2441
    %2823 = vmatpush.msra.mxu0 %v2433
    %2824 = vmatpush.msra.mxu0 %v2425
    %2825 = vmatpush.msra.mxu0 %v2417
    %2826 = vmatmul.f32.gmra.mxu0 %v1282
    %v2827 = vpop.f32.mrf.mxu0
    %v2828 = vadd.f32 %v2808, %v2827
    %2829 = vdwg.mxu0
    %2830 = vmatpush.msra.mxu0 %v2410
    %2831 = vmatpush.msra.mxu0 %v2402
    %2832 = vmatpush.msra.mxu0 %v2394
    %2833 = vmatpush.msra.mxu0 %v2386
    %2834 = vmatpush.msra.mxu0 %v2378
    %2835 = vmatpush.msra.mxu0 %v2370
    %2836 = vmatpush.msra.mxu0 %v2362
    %2837 = vmatpush.msra.mxu0 %v2354
    %2838 = vmatpush.msra.mxu0 %v2346
    %2839 = vmatpush.msra.mxu0 %v2338
    %2840 = vmatpush.msra.mxu0 %v2330
    %2841 = vmatpush.msra.mxu0 %v2322
    %2842 = vmatpush.msra.mxu0 %v2314
    %2843 = vmatpush.msra.mxu0 %v2306
    %2844 = vmatpush.msra.mxu0 %v2298
    %2845 = vmatpush.msra.mxu0 %v2290
    %2846 = vmatmul.f32.gmra.mxu0 %v1280
    %v2847 = vpop.f32.mrf.mxu0
    %v2848 = vadd.f32 %v2549, %v2847
    %2849 = vdwg.mxu0
    %2850 = vmatpush.msra.mxu0 %v2538
    %2851 = vmatpush.msra.mxu0 %v2530
    %2852 = vmatpush.msra.mxu0 %v2522
    %2853 = vmatpush.msra.mxu0 %v2514
    %2854 = vmatpush.msra.mxu0 %v2506
    %2855 = vmatpush.msra.mxu0 %v2498
    %2856 = vmatpush.msra.mxu0 %v2490
    %2857 = vmatpush.msra.mxu0 %v2482
    %2858 = vmatpush.msra.mxu0 %v2474
    %2859 = vmatpush.msra.mxu0 %v2466
    %2860 = vmatpush.msra.mxu0 %v2458
    %2861 = vmatpush.msra.mxu0 %v2450
    %2862 = vmatpush.msra.mxu0 %v2442
    %2863 = vmatpush.msra.mxu0 %v2434
    %2864 = vmatpush.msra.mxu0 %v2426
    %2865 = vmatpush.msra.mxu0 %v2418
    %2866 = vmatmul.f32.gmra.mxu0 %v1282
    %v2867 = vpop.f32.mrf.mxu0
    %v2868 = vadd.f32 %v2848, %v2867
    %2869 = vdwg.mxu0
    %v2870 = vmul.f32 %v2588, 0.5
    %v2871 = vmul.f32 %v2628, 0.5
    %v2872 = vmul.f32 %v2668, 0.5
    %v2873 = vmul.f32 %v2708, 0.5
    %v2874 = vmul.f32 %v2748, 0.5
    %v2875 = vmul.f32 %v2788, 0.5
    %v2876 = vtanh.pop %v2870
    %v2877 = vtanh.pop %v2871
    %v2878 = vtanh.pop %v2872
    %v2879 = vtanh.pop %v2873
    %v2880 = vtanh.pop %v2874
    %v2881 = vtanh.pop %v2875
    %v2882 = vmul.f32 %v2876, 0.5
    %v2883 = vmul.f32 %v2877, 0.5
    %v2884 = vmul.f32 %v2878, 0.5
    %v2885 = vmul.f32 %v2879, 0.5
    %v2886 = vmul.f32 %v2880, 0.5
    %v2887 = vmul.f32 %v2881, 0.5
    %v2888 = vadd.f32 %v2882, 0.5
    %v2889 = vadd.f32 %v2883, 0.5
    %v2890 = vadd.f32 %v2884, 0.5
    %v2891 = vadd.f32 %v2885, 0.5
    %v2892 = vadd.f32 %v2886, 0.5
    %v2893 = vadd.f32 %v2887, 0.5
    %v2894 = vtanh.pop %v2828
    %v2895 = vtanh.pop %v2868
    %v2896 = vmul.f32 %v2889, %v1283
    %v2897 = vmul.f32 %v2888, %v2894
    %v2898 = vadd.f32 %v2896, %v2897
    %v2899 = vmul.f32 %v2892, %v1281
    %v2900 = vmul.f32 %v2891, %v2895
    %v2901 = vadd.f32 %v2899, %v2900
    %v2902 = vtanh.pop %v2898
    %v2903 = vtanh.pop %v2901
    %v2904 = vmul.f32 %v2890, %v2902
    %v2905 = vmul.f32 %v2893, %v2903
    %v2906 = vld [vmem:[%s2] sm:$0xff]
    %v2908 = vperm.slane %v2906, 0
    %v2909 = vperm.slane %v2906, 1
    %v2910 = vperm.slane %v2906, 2
    %v2911 = vperm.slane %v2906, 6
    %2916 = vmatpush.msra.mxu0 %v2403
    %2917 = vmatpush.msra.mxu0 %v2395
    %2918 = vmatpush.msra.mxu0 %v2387
    %2919 = vmatpush.msra.mxu0 %v2379
    %2920 = vmatpush.msra.mxu0 %v2371
    %2921 = vmatpush.msra.mxu0 %v2363
    %2922 = vmatpush.msra.mxu0 %v2355
    %2923 = vmatpush.msra.mxu0 %v2347
    %2924 = vmatpush.msra.mxu0 %v2339
    %2925 = vmatpush.msra.mxu0 %v2331
    %2926 = vmatpush.msra.mxu0 %v2323
    %2927 = vmatpush.msra.mxu0 %v2315
    %2928 = vmatpush.msra.mxu0 %v2307
    %2929 = vmatpush.msra.mxu0 %v2299
    %2930 = vmatpush.msra.mxu0 %v2291
    %2931 = vmatpush.msra.mxu0 %v2283
    %2932 = vmatmul.f32.gmra.mxu0 %v2905
    %v2933 = vpop.f32.mrf.mxu0
    %v2934 = vadd.f32 %v2908, %v2933
    %2935 = vdwg.mxu0
    %2936 = vmatpush.msra.mxu0 %v2531
    %2937 = vmatpush.msra.mxu0 %v2523
    %2938 = vmatpush.msra.mxu0 %v2515
    %2939 = vmatpush.msra.mxu0 %v2507
    %2940 = vmatpush.msra.mxu0 %v2499
    %2941 = vmatpush.msra.mxu0 %v2491
    %2942 = vmatpush.msra.mxu0 %v2483
    %2943 = vmatpush.msra.mxu0 %v2475
    %2944 = vmatpush.msra.mxu0 %v2467
    %2945 = vmatpush.msra.mxu0 %v2459
    %2946 = vmatpush.msra.mxu0 %v2451
    %2947 = vmatpush.msra.mxu0 %v2443
    %2948 = vmatpush.msra.mxu0 %v2435
    %2949 = vmatpush.msra.mxu0 %v2427
    %2950 = vmatpush.msra.mxu0 %v2419
    %2951 = vmatpush.msra.mxu0 %v2411
    %2952 = vmatmul.f32.gmra.mxu0 %v2904
    %v2953 = vpop.f32.mrf.mxu0
    %v2954 = vadd.f32 %v2934, %v2953
    %2955 = vdwg.mxu0
    %2956 = vmatpush.msra.mxu0 %v2404
    %2957 = vmatpush.msra.mxu0 %v2396
    %2958 = vmatpush.msra.mxu0 %v2388
    %2959 = vmatpush.msra.mxu0 %v2380
    %2960 = vmatpush.msra.mxu0 %v2372
    %2961 = vmatpush.msra.mxu0 %v2364
    %2962 = vmatpush.msra.mxu0 %v2356
    %2963 = vmatpush.msra.mxu0 %v2348
    %2964 = vmatpush.msra.mxu0 %v2340
    %2965 = vmatpush.msra.mxu0 %v2332
    %2966 = vmatpush.msra.mxu0 %v2324
    %2967 = vmatpush.msra.mxu0 %v2316
    %2968 = vmatpush.msra.mxu0 %v2308
    %2969 = vmatpush.msra.mxu0 %v2300
    %2970 = vmatpush.msra.mxu0 %v2292
    %2971 = vmatpush.msra.mxu0 %v2284
    %2972 = vmatmul.f32.gmra.mxu0 %v2905
    %v2973 = vpop.f32.mrf.mxu0
    %v2974 = vadd.f32 %v2909, %v2973
    %2975 = vdwg.mxu0
    %2976 = vmatpush.msra.mxu0 %v2532
    %2977 = vmatpush.msra.mxu0 %v2524
    %2978 = vmatpush.msra.mxu0 %v2516
    %2979 = vmatpush.msra.mxu0 %v2508
    %2980 = vmatpush.msra.mxu0 %v2500
    %2981 = vmatpush.msra.mxu0 %v2492
    %2982 = vmatpush.msra.mxu0 %v2484
    %2983 = vmatpush.msra.mxu0 %v2476
    %2984 = vmatpush.msra.mxu0 %v2468
    %2985 = vmatpush.msra.mxu0 %v2460
    %2986 = vmatpush.msra.mxu0 %v2452
    %2987 = vmatpush.msra.mxu0 %v2444
    %2988 = vmatpush.msra.mxu0 %v2436
    %2989 = vmatpush.msra.mxu0 %v2428
    %2990 = vmatpush.msra.mxu0 %v2420
    %2991 = vmatpush.msra.mxu0 %v2412
    %2992 = vmatmul.f32.gmra.mxu0 %v2904
    %v2993 = vpop.f32.mrf.mxu0
    %v2994 = vadd.f32 %v2974, %v2993
    %2995 = vdwg.mxu0
    %2996 = vmatpush.msra.mxu0 %v2405
    %2997 = vmatpush.msra.mxu0 %v2397
    %2998 = vmatpush.msra.mxu0 %v2389
    %2999 = vmatpush.msra.mxu0 %v2381
    %3000 = vmatpush.msra.mxu0 %v2373
    %3001 = vmatpush.msra.mxu0 %v2365
    %3002 = vmatpush.msra.mxu0 %v2357
    %3003 = vmatpush.msra.mxu0 %v2349
    %3004 = vmatpush.msra.mxu0 %v2341
    %3005 = vmatpush.msra.mxu0 %v2333
    %3006 = vmatpush.msra.mxu0 %v2325
    %3007 = vmatpush.msra.mxu0 %v2317
    %3008 = vmatpush.msra.mxu0 %v2309
    %3009 = vmatpush.msra.mxu0 %v2301
    %3010 = vmatpush.msra.mxu0 %v2293
    %3011 = vmatpush.msra.mxu0 %v2285
    %3012 = vmatmul.f32.gmra.mxu0 %v2905
    %v3013 = vpop.f32.mrf.mxu0
    %v3014 = vadd.f32 %v2910, %v3013
    %3015 = vdwg.mxu0
    %3016 = vmatpush.msra.mxu0 %v2533
    %3017 = vmatpush.msra.mxu0 %v2525
    %3018 = vmatpush.msra.mxu0 %v2517
    %3019 = vmatpush.msra.mxu0 %v2509
    %3020 = vmatpush.msra.mxu0 %v2501
    %3021 = vmatpush.msra.mxu0 %v2493
    %3022 = vmatpush.msra.mxu0 %v2485
    %3023 = vmatpush.msra.mxu0 %v2477
    %3024 = vmatpush.msra.mxu0 %v2469
    %3025 = vmatpush.msra.mxu0 %v2461
    %3026 = vmatpush.msra.mxu0 %v2453
    %3027 = vmatpush.msra.mxu0 %v2445
    %3028 = vmatpush.msra.mxu0 %v2437
    %3029 = vmatpush.msra.mxu0 %v2429
    %3030 = vmatpush.msra.mxu0 %v2421
    %3031 = vmatpush.msra.mxu0 %v2413
    %3032 = vmatmul.f32.gmra.mxu0 %v2904
    %v3033 = vpop.f32.mrf.mxu0
    %v3034 = vadd.f32 %v3014, %v3033
    %3035 = vdwg.mxu0
    %3036 = vmatpush.msra.mxu0 %v2409
    %3037 = vmatpush.msra.mxu0 %v2401
    %3038 = vmatpush.msra.mxu0 %v2393
    %3039 = vmatpush.msra.mxu0 %v2385
    %3040 = vmatpush.msra.mxu0 %v2377
    %3041 = vmatpush.msra.mxu0 %v2369
    %3042 = vmatpush.msra.mxu0 %v2361
    %3043 = vmatpush.msra.mxu0 %v2353
    %3044 = vmatpush.msra.mxu0 %v2345
    %3045 = vmatpush.msra.mxu0 %v2337
    %3046 = vmatpush.msra.mxu0 %v2329
    %3047 = vmatpush.msra.mxu0 %v2321
    %3048 = vmatpush.msra.mxu0 %v2313
    %3049 = vmatpush.msra.mxu0 %v2305
    %3050 = vmatpush.msra.mxu0 %v2297
    %3051 = vmatpush.msra.mxu0 %v2289
    %3052 = vmatmul.f32.gmra.mxu0 %v2905
    %v3053 = vpop.f32.mrf.mxu0
    %v3054 = vadd.f32 %v2911, %v3053
    %3055 = vdwg.mxu0
    %3056 = vmatpush.msra.mxu0 %v2537
    %3057 = vmatpush.msra.mxu0 %v2529
    %3058 = vmatpush.msra.mxu0 %v2521
    %3059 = vmatpush.msra.mxu0 %v2513
    %3060 = vmatpush.msra.mxu0 %v2505
    %3061 = vmatpush.msra.mxu0 %v2497
    %3062 = vmatpush.msra.mxu0 %v2489
    %3063 = vmatpush.msra.mxu0 %v2481
    %3064 = vmatpush.msra.mxu0 %v2473
    %3065 = vmatpush.msra.mxu0 %v2465
    %3066 = vmatpush.msra.mxu0 %v2457
    %3067 = vmatpush.msra.mxu0 %v2449
    %3068 = vmatpush.msra.mxu0 %v2441
    %3069 = vmatpush.msra.mxu0 %v2433
    %3070 = vmatpush.msra.mxu0 %v2425
    %3071 = vmatpush.msra.mxu0 %v2417
    %3072 = vmatmul.f32.gmra.mxu0 %v2904
    %v3073 = vpop.f32.mrf.mxu0
    %v3074 = vadd.f32 %v3054, %v3073
    %3075 = vdwg.mxu0
    %v3076 = vmul.f32 %v2954, 0.5
    %v3077 = vmul.f32 %v2994, 0.5
    %v3078 = vmul.f32 %v3034, 0.5
    %v3079 = vtanh.pop %v3076
    %v3080 = vtanh.pop %v3077
    %v3081 = vtanh.pop %v3078
    %v3082 = vmul.f32 %v3079, 0.5
    %v3083 = vmul.f32 %v3080, 0.5
    %v3084 = vmul.f32 %v3081, 0.5
    %v3085 = vadd.f32 %v3082, 0.5
    %v3086 = vadd.f32 %v3083, 0.5
    %v3087 = vadd.f32 %v3084, 0.5
    %v3088 = vtanh.pop %v3074
    %v3089 = vmul.f32 %v3086, %v2898
    %v3090 = vmul.f32 %v3085, %v3088
    %v3091 = vadd.f32 %v3089, %v3090
    %v3092 = vtanh.pop %v3091
    %v3093 = vmul.f32 %v3087, %v3092
    %v3094 = vld [vmem:[%s4] sm:$0xff]
    %v3095 = vld [vmem:[%s4 + $0x8] sm:$0xff]
    %v3096 = vld [vmem:[%s4 + $0x10] sm:$0xff]
    %v3097 = vld [vmem:[%s4 + $0x18] sm:$0xff]
    %v3098 = vld [vmem:[%s4 + $0x20] sm:$0xff]
    %v3099 = vld [vmem:[%s4 + $0x28] sm:$0xff]
    %v3100 = vld [vmem:[%s4 + $0x30] sm:$0xff]
    %v3101 = vld [vmem:[%s4 + $0x38] sm:$0xff]
    %v3102 = vld [vmem:[%s4 + $0x40] sm:$0xff]
    %v3103 = vld [vmem:[%s4 + $0x48] sm:$0xff]
    %v3104 = vld [vmem:[%s4 + $0x50] sm:$0xff]
    %v3105 = vld [vmem:[%s4 + $0x58] sm:$0xff]
    %v3106 = vld [vmem:[%s4 + $0x60] sm:$0xff]
    %v3107 = vld [vmem:[%s4 + $0x68] sm:$0xff]
    %v3108 = vld [vmem:[%s4 + $0x70] sm:$0xff]
    %v3109 = vld [vmem:[%s4 + $0x78] sm:$0xff]
    %v3110 = vld [vmem:[%s5] sm:$0x1]
    %v3112 = vperm.slane %v3110, 0
    %3114 = vmatpush.msra.mxu0 %v3109
    %3115 = vmatpush.msra.mxu0 %v3108
    %3116 = vmatpush.msra.mxu0 %v3107
    %3117 = vmatpush.msra.mxu0 %v3106
    %3118 = vmatpush.msra.mxu0 %v3105
    %3119 = vmatpush.msra.mxu0 %v3104
    %3120 = vmatpush.msra.mxu0 %v3103
    %3121 = vmatpush.msra.mxu0 %v3102
    %3122 = vmatpush.msra.mxu0 %v3101
    %3123 = vmatpush.msra.mxu0 %v3100
    %3124 = vmatpush.msra.mxu0 %v3099
    %3125 = vmatpush.msra.mxu0 %v3098
    %3126 = vmatpush.msra.mxu0 %v3097
    %3127 = vmatpush.msra.mxu0 %v3096
    %3128 = vmatpush.msra.mxu0 %v3095
    %3129 = vmatpush.msra.mxu0 %v3094
    %3130 = vmatmul.f32.gmra.mxu0 %v3093
    %v3131 = vpop.f32.mrf.mxu0
    %v3132 = vadd.f32 %v3112, %v3131
    %3133 = vdwg.mxu0
    %vm3134 = vcmask 80896
    %3135 = vst.msk [vmem:[#allocation5] sm:$0xff] %vm3134, %v3132
    // Predicated region
    $region33: #{tpu_custom_call.1} parent=1 // pred_check
      _
    $region34: #{tpu_custom_call.1} parent=1 // pred_check_branch
      %3137 = sbr.rel (0) target = $region36
    $region35: #{tpu_custom_call.1} parent=1 // pred_region
      %3139 = vsyncadd [#allocation6], 0
      %s3141 = sshll.u32 [#allocation5], 4
      %s3142 = int_to_ptr.vmem [resolvable:$true] %s3141
      %s3143 = sshll.u32 %s6, 4
      %s3144 = int_to_ptr.hbm [resolvable:$true] %s3143
      %3146 = dma.vmem_to_hbm [thread:$0]  %s3142, 128, %s3144, [#allocation6]
    $region36: #{tpu_custom_call.1} parent=1 // pred_fallthru
      _
    // Predicated region
    $region37: #{tpu_custom_call.1} parent=1 // pred_check
      _
    $region38: #{tpu_custom_call.1} parent=1 // pred_check_branch
      %3148 = sbr.rel (0) target = $region40
    $region39: #{tpu_custom_call.1} parent=1 // pred_region
      %3150 = dma.done [#allocation6], 128
    $region40: #{tpu_custom_call.1} parent=1 // pred_fallthru
      _
    %3151 = vsyncpa [#allocation6], 1
  %3152 = vsyncmov [#allocation4]
  %s3153 = vpop.sfrf %3152
  %p3154 = scmp.eq.s32.totalorder %s3153, 0
  %p3155 = pneg %p3154
  %3157 = shalt.err (%p3155)

</llo_original>
